<compile_context>
chip_gen: v5e
topology: v5e:2x2
jax: 0.10.0
libtpu: 0.0.40
codegen_flags: <defaults>
</compile_context>

<pallas_src>
import functools

import jax
import jax.numpy as jnp
from jax.experimental import pallas as pl
from jax.experimental.pallas import tpu as pltpu

LANE = 128


def _round_up(x, m):
    return (x + m - 1) // m * m


def _vmem_limit_bytes():
    """Generation-aware scoped-VMEM budget: ~3/4 of physical VMEM."""
    try:
        cap = int(pltpu.get_tpu_info().vmem_capacity_bytes)
    except Exception:
        cap = 64 * 1024 * 1024  # conservative fallback (v7x per-TensorCore size)
    return int(max(cap * 3 // 4, 32 * 1024 * 1024))


def _pick_row_tile(hp, wp, cin_p, cout_p, n_batch, vmem_limit):
    """Largest row tile (divisor of pooled height) whose pipelined working set fits the
    VMEM budget, preferring an even total grid step count >= 4 (v7x has 2 TensorCores)."""
    c = max(cin_p, cout_p)
    budget = max(1 << 20, vmem_limit // 6)
    cands = [t for t in range(1, hp + 1) if hp % t == 0 and (t * wp) % 8 == 0]
    if not cands:
        cands = [t for t in range(1, hp + 1) if hp % t == 0]

    def est(t):
        tm = t * wp
        return (2 * (2 * t * wp * 2 * cin_p * 2        # conv1 raw-row block (bf16, dbl-buf)
                     + (t + 2) * wp * cout_p * 2       # conv2 rows + halos (bf16, dbl-buf)
                     + tm * cout_p * 2                 # bf16 conv-output tile
                     + 2 * cout_p * 4)                 # stats tile
                + (t + 4) * wp * c * 2                 # in-VMEM flattened row window
                + 2 * tm * c * 2                       # tap operand + edge masks
                + tm * cout_p * 4                      # f32 accumulator
                + 9 * c * c * 2)                       # resident folded weights

    fit = [t for t in cands if est(t) <= budget] or [min(cands)]
    good = [t for t in fit
            if n_batch * (hp // t) >= 4 and (n_batch * (hp // t)) % 2 == 0]
    return max(good or fit)


# --------------------------------- kernels ----------------------------------

def _conv_body(top, mid, bot, w_ref, b_ref, y_ref, st_ref, *, th, wp, cin_p):
    """3x3 conv (+bias) of a (th+2, wp, cin_p) row window against a resident
    (9, cin_p, co_p) weight, as 9 accumulating MXU dots with f32 accumulation.

    Width zero-padding is handled WITHOUT building a (wp+2)-wide window: the rows are
    flattened (leading+sublane merge) and each kx-shifted tap is a sublane slice of the
    flat view; the two wrap-around columns are zeroed with 0/1 masks.  Also emits the
    per-tile BatchNorm partial [sum, sum_sq] from the f32 accumulator.
    """
    tm = th * wp
    zrow = jnp.zeros_like(top)                                   # (1, wp, cin_p)
    flat = jnp.concatenate([zrow, top, mid, bot, zrow],
                           axis=0).reshape((th + 4) * wp, cin_p)  # bf16

    # 0/1 masks that zero the wrapped column when a tap crosses the image's W border.
    jj = jax.lax.broadcasted_iota(jnp.int32, (th, wp, cin_p), 1)
    not_left = jnp.where(jj > 0, 1.0, 0.0).astype(flat.dtype).reshape(tm, cin_p)
    not_right = jnp.where(jj < wp - 1, 1.0, 0.0).astype(flat.dtype).reshape(tm, cin_p)

    # TODO(synk): for Cin << 128 the per-tap channel padding still wastes MXU cycles;
    # packing the contraction dim as round_up(9*Cin, 128) would shrink K ~9x there.
    acc = None
    for ky in range(3):
        for kx in range(3):
            off = (ky + 1) * wp + (kx - 1)
            tap = flat[off:off + tm, :]                          # (tm, cin_p) bf16
            if kx == 0:
                tap = tap * not_left
            elif kx == 2:
                tap = tap * not_right
            d = jnp.dot(tap, w_ref[ky * 3 + kx],
                        preferred_element_type=jnp.float32)
            acc = d if acc is None else acc + d
    acc = acc + b_ref[...]                                       # conv bias (f32)
    y_ref[...] = acc.astype(y_ref.dtype)                         # bf16 raw conv output
    st_ref[0] = jnp.concatenate(
        [jnp.sum(acc, axis=0, keepdims=True),
         jnp.sum(acc * acc, axis=0, keepdims=True)], axis=0)     # (2, co_p) f32


def _pool_conv_kernel(cur_ref, top_ref, bot_ref, w_ref, b_ref, y_ref, st_ref,
                      *, th, wp, cin_p, n_row_tiles):
    """Fused 2x2 max-pool + 3x3 conv1.  Raw rows arrive with the 2-column pooling pair
    folded into the lane dim: block (1, 2*th, wp, 2*cin_p) bf16."""
    i = pl.program_id(1)

    def pool(raw):                                   # (2r, wp, 2*cin_p) -> (r, wp, cin_p)
        r2 = raw.shape[0]
        x = raw.astype(jnp.float32).reshape(r2 // 2, 2, wp, 2 * cin_p)
        rmax = jnp.maximum(x[:, 0], x[:, 1])                       # row pair max
        return jnp.maximum(rmax[..., :cin_p],
                           rmax[..., cin_p:]).astype(jnp.bfloat16)  # column pair max

    mid = pool(cur_ref[0])                                        # (th, wp, cin_p)
    top = pool(top_ref[0])                                        # (1, wp, cin_p)
    bot = pool(bot_ref[0])
    top = jnp.where(i > 0, top, jnp.zeros_like(top))               # image-border padding
    bot = jnp.where(i < n_row_tiles - 1, bot, jnp.zeros_like(bot))
    _conv_body(top, mid, bot, w_ref, b_ref, y_ref, st_ref, th=th, wp=wp, cin_p=cin_p)


def _bn_relu_conv_kernel(cur_ref, top_ref, bot_ref, sc_ref, sh_ref, w_ref, b_ref,
                         y_ref, st_ref, *, th, wp, cin_p, n_row_tiles):
    """Fused layer-1 BN-apply + ReLU + 3x3 conv2 on raw conv1 output tiles."""
    i = pl.program_id(1)
    scale = sc_ref[...]                                            # (1, cin_p) f32
    shift = sh_ref[...]

    def norm(raw):                                                 # bn + relu, f32 math
        x = raw.astype(jnp.float32) * scale + shift
        return jnp.maximum(x, 0.0).astype(jnp.bfloat16)

    mid = norm(cur_ref[0])                                         # (th, wp, cin_p)
    top = norm(top_ref[0])                                         # (1, wp, cin_p)
    bot = norm(bot_ref[0])
    top = jnp.where(i > 0, top, jnp.zeros_like(top))               # pad AFTER bn+relu
    bot = jnp.where(i < n_row_tiles - 1, bot, jnp.zeros_like(bot))
    _conv_body(top, mid, bot, w_ref, b_ref, y_ref, st_ref, th=th, wp=wp, cin_p=cin_p)


def _bn_relu_apply_kernel(y_ref, sc_ref, sh_ref, o_ref):
    """Final BN-apply + ReLU (pure FMA + max, all f32)."""
    x = y_ref[...].astype(jnp.float32)
    o_ref[...] = jnp.maximum(x * sc_ref[...] + sh_ref[...], 0.0).astype(o_ref.dtype)


# --------------------------------- wrapper ----------------------------------

def down_forward(x_nchw, w1, b1, g1, be1, w2, b2, g2, be2):
    N, Cin, H, W = x_nchw.shape
    Cout = w1.shape[0]
    assert H % 2 == 0 and W % 2 == 0, "MaxPool2d(2) needs even H, W"
    Hp, Wp = H // 2, W // 2
    M = N * Hp * Wp

    ci_p = _round_up(Cin, LANE)
    co_p = _round_up(Cout, LANE)
    vmem_limit = _vmem_limit_bytes()
    th = _pick_row_tile(Hp, Wp, ci_p, co_p, N, vmem_limit)
    n_t = Hp // th
    tm = th * Wp
    nt_total = N * n_t
    assert tm % 8 == 0 or nt_total == 1  # TODO(synk): mask ragged sublane tiles (odd Wp)

    f32, bf16 = jnp.float32, jnp.bfloat16

    # ---- layout glue: NCHW -> NHWC (lane-dense channels), zero-pad C, bf16 -----------
    x = jnp.transpose(x_nchw, (0, 2, 3, 1)).astype(bf16)
    x = jnp.pad(x, ((0, 0), (0, 0), (0, 0), (0, ci_p - Cin)))
    # Free (contiguous) reshape: fold each 2-column pooling pair into the lane dim so the
    # in-kernel 2x2 pool is a row max + a 128-aligned lane-slice max.  No HBM copy.
    x = x.reshape(N, H, Wp, 2 * ci_p)

    def fold_w(w, ci, ci_pad):
        co = w.shape[0]
        wt = jnp.transpose(w, (2, 3, 1, 0))                        # OIHW -> (ky,kx,ci,co)
        wt = jnp.pad(wt, ((0, 0), (0, 0), (0, ci_pad - ci), (0, co_p - co)))
        return wt.reshape(9, ci_pad, co_p).astype(bf16)

    def pad_row(v):
        return jnp.pad(v, (0, co_p - v.shape[0])).reshape(1, co_p).astype(f32)

    w1f, w2f = fold_w(w1, Cin, ci_p), fold_w(w2, Cout, co_p)
    b1p, b2p = pad_row(b1), pad_row(b2)
    g1p, be1p, g2p, be2p = pad_row(g1), pad_row(be1), pad_row(g2), pad_row(be2)

    params_1d = pltpu.CompilerParams(dimension_semantics=("parallel",),
                                     vmem_limit_bytes=vmem_limit)
    params_2d = pltpu.CompilerParams(dimension_semantics=("parallel", "parallel"),
                                     vmem_limit_bytes=vmem_limit)

    conv_out_shapes = (jax.ShapeDtypeStruct((M, co_p), bf16),       # raw conv out (bf16)
                       jax.ShapeDtypeStruct((nt_total, 2, co_p), f32))
    conv_out_specs = (pl.BlockSpec((tm, co_p), lambda n, i: (n * n_t + i, 0)),
                      pl.BlockSpec((1, 2, co_p), lambda n, i: (n * n_t + i, 0, 0)))

    def finalize_bn(stats, gamma, beta):
        # Tiny (nt_total, 2, C) -> per-channel scale/shift reduction; left to XLA on
        # purpose (KB-scale), so every Pallas grid step is a pure FMA, not a re-reduce.
        s = jnp.sum(stats, axis=0)
        mean = (s[0] / M)[None, :]
        var = jnp.maximum((s[1] / M)[None, :] - mean * mean, 0.0)
        inv = jax.lax.rsqrt(var + 1e-5)
        scale = gamma * inv
        shift = beta - mean * scale
        return scale.astype(f32), shift.astype(f32)

    # -------------------- pass 1: fused pool + conv1 + bias + BN1 partials ------------
    kern1 = functools.partial(_pool_conv_kernel, th=th, wp=Wp, cin_p=ci_p,
                              n_row_tiles=n_t)
    bytes1 = int(x.size * 2                                         # raw input (bf16)
                 + nt_total * 2 * (2 * Wp * 2 * ci_p) * 2           # halo row re-reads
                 + w1f.size * 2 + b1p.size * 4
                 + M * co_p * 2 + nt_total * 2 * co_p * 4)          # y1 (bf16) + stats
    y1_raw, stats1 = pl.pallas_call(
        kern1,
        out_shape=conv_out_shapes,
        grid=(N, n_t),
        in_specs=[
            pl.BlockSpec((1, 2 * th, Wp, 2 * ci_p), lambda n, i: (n, i, 0, 0)),
            pl.BlockSpec((1, 2, Wp, 2 * ci_p),
                         lambda n, i: (n, jnp.maximum(i * th - 1, 0), 0, 0)),
            pl.BlockSpec((1, 2, Wp, 2 * ci_p),
                         lambda n, i: (n, jnp.minimum(i * th + th, Hp - 1), 0, 0)),
            pl.BlockSpec((9, ci_p, co_p), lambda n, i: (0, 0, 0)),   # resident weights
            pl.BlockSpec((1, co_p), lambda n, i: (0, 0)),            # resident bias
        ],
        out_specs=conv_out_specs,
        compiler_params=params_2d,
        cost_estimate=pl.CostEstimate(flops=2 * M * 9 * ci_p * co_p,
                                      transcendentals=0, bytes_accessed=bytes1),
    )(x, x, x, w1f, b1p)

    scale1, shift1 = finalize_bn(stats1, g1p, be1p)
    y1_img = y1_raw.reshape(N, Hp, Wp, co_p)                        # free reshape

    # ------------- pass 2: fused BN1-apply + ReLU + conv2 + bias + BN2 partials -------
    kern2 = functools.partial(_bn_relu_conv_kernel, th=th, wp=Wp, cin_p=co_p,
                              n_row_tiles=n_t)
    bytes2 = int(M * co_p * 2                                       # y1 read (bf16)
                 + nt_total * 2 * (Wp * co_p) * 2                   # halo row re-reads
                 + w2f.size * 2 + 3 * co_p * 4
                 + M * co_p * 2 + nt_total * 2 * co_p * 4)
    y2_raw, stats2 = pl.pallas_call(
        kern2,
        out_shape=conv_out_shapes,
        grid=(N, n_t),
        in_specs=[
            pl.BlockSpec((1, th, Wp, co_p), lambda n, i: (n, i, 0, 0)),
            pl.BlockSpec((1, 1, Wp, co_p),
                         lambda n, i: (n, jnp.maximum(i * th - 1, 0), 0, 0)),
            pl.BlockSpec((1, 1, Wp, co_p),
                         lambda n, i: (n, jnp.minimum(i * th + th, Hp - 1), 0, 0)),
            pl.BlockSpec((1, co_p), lambda n, i: (0, 0)),            # BN1 scale
            pl.BlockSpec((1, co_p), lambda n, i: (0, 0)),            # BN1 shift
            pl.BlockSpec((9, co_p, co_p), lambda n, i: (0, 0, 0)),   # resident weights
            pl.BlockSpec((1, co_p), lambda n, i: (0, 0)),            # resident bias
        ],
        out_specs=conv_out_specs,
        compiler_params=params_2d,
        cost_estimate=pl.CostEstimate(flops=2 * M * 9 * co_p * co_p,
                                      transcendentals=0, bytes_accessed=bytes2),
    )(y1_img, y1_img, y1_img, scale1, shift1, w2f, b2p)

    # ------------------------ pass 3: BN2-apply + ReLU -> f32 --------------------------
    scale2, shift2 = finalize_bn(stats2, g2p, be2p)
    y2 = pl.pallas_call(
        _bn_relu_apply_kernel,
        out_shape=jax.ShapeDtypeStruct((M, co_p), f32),
        grid=(nt_total,),
        in_specs=[pl.BlockSpec((tm, co_p), lambda j: (j, 0)),
                  pl.BlockSpec((1, co_p), lambda j: (0, 0)),
                  pl.BlockSpec((1, co_p), lambda j: (0, 0))],
        out_specs=pl.BlockSpec((tm, co_p), lambda j: (j, 0)),
        compiler_params=params_1d,
    )(y2_raw, scale2, shift2)

    out = y2.reshape(N, Hp, Wp, co_p)[..., :Cout]
    return jnp.transpose(out, (0, 3, 1, 2))                         # back to NCHW


# ----------------------- pure-JAX reference (checking) ----------------------

def ref_forward(x, w1, b1, g1, be1, w2, b2, g2, be2):
    def conv(x, w, b):
        y = jax.lax.conv_general_dilated(
            x, w, (1, 1), ((1, 1), (1, 1)),
            dimension_numbers=("NCHW", "OIHW", "NCHW"))
        return y + b[None, :, None, None]

    def bn(x, g, bt):
        m = x.mean(axis=(0, 2, 3), keepdims=True)
        v = ((x - m) ** 2).mean(axis=(0, 2, 3), keepdims=True)
        return (x - m) * jax.lax.rsqrt(v + 1e-5) * g[None, :, None, None] \
            + bt[None, :, None, None]

    N, C, H, W = x.shape
    xp = x.reshape(N, C, H // 2, 2, W // 2, 2).max(axis=(3, 5))
    y = jax.nn.relu(bn(conv(xp, w1, b1), g1, be1))
    y = jax.nn.relu(bn(conv(y, w2, b2), g2, be2))
    return y


# ---------------------------------- main -----------------------------------

if __name__ == "__main__":
    key = jax.random.PRNGKey(0)
    N, Cin, Cout, H, W = 2, 4, 8, 16, 16
    ks = jax.random.split(key, 9)

    x = jax.random.normal(ks[0], (N, Cin, H, W), jnp.float32)
    w1 = 0.1 * jax.random.normal(ks[1], (Cout, Cin, 3, 3), jnp.float32)
    b1 = 0.1 * jax.random.normal(ks[2], (Cout,), jnp.float32)
    g1 = 1.0 + 0.1 * jax.random.normal(ks[3], (Cout,), jnp.float32)
    be1 = 0.1 * jax.random.normal(ks[4], (Cout,), jnp.float32)
    w2 = 0.1 * jax.random.normal(ks[5], (Cout, Cout, 3, 3), jnp.float32)
    b2 = 0.1 * jax.random.normal(ks[6], (Cout,), jnp.float32)
    g2 = 1.0 + 0.1 * jax.random.normal(ks[7], (Cout,), jnp.float32)
    be2 = 0.1 * jax.random.normal(ks[8], (Cout,), jnp.float32)

    out = jax.jit(down_forward)(x, w1, b1, g1, be1, w2, b2, g2, be2)
    out = jax.block_until_ready(out)

    ref = ref_forward(x, w1, b1, g1, be1, w2, b2, g2, be2)
    err = float(jnp.max(jnp.abs(out - ref)))
    assert out.shape == (N, Cout, H // 2, W // 2), out.shape
    # bf16 MXU operands / bf16 intermediates with f32 accumulation and f32 BN statistics
    assert err < 5e-2, f"max abs error {err}"

    print("KERNEL_OK")
</pallas_src>

<mosaic_0001>
module attributes {stable_mosaic.version = 11 : i64} {
  func.func @_pool_conv_kernel(%arg0: i32, %arg1: i32, %arg2: memref<1x8x8x256xbf16, #tpu.memory_space<vmem>>, %arg3: memref<1x2x8x256xbf16, #tpu.memory_space<vmem>>, %arg4: memref<1x2x8x256xbf16, #tpu.memory_space<vmem>>, %arg5: memref<9x128x128xbf16, #tpu.memory_space<vmem>>, %arg6: memref<1x128xf32, #tpu.memory_space<vmem>>, %arg7: memref<32x128xbf16, #tpu.memory_space<vmem>>, %arg8: memref<1x2x128xf32, #tpu.memory_space<vmem>>) attributes {dimension_semantics = [#tpu.dimension_semantics<parallel>, #tpu.dimension_semantics<parallel>], iteration_bounds = array<i64: 2, 2>, scalar_prefetch = 0 : i64, scratch_operands = 0 : i64, tpu.core_type = #tpu.core_type<tc>, window_params = [{transform_indices = @transform_0, window_bounds = array<i64: 1, 8, 8, 256>}, {transform_indices = @transform_1, window_bounds = array<i64: 1, 2, 8, 256>}, {transform_indices = @transform_2, window_bounds = array<i64: 1, 2, 8, 256>}, {pipeline_mode = #tpu.pipeline_mode<synchronous>, transform_indices = @transform_3, window_bounds = array<i64: 9, 128, 128>}, {pipeline_mode = #tpu.pipeline_mode<synchronous>, transform_indices = @transform_4, window_bounds = array<i64: 1, 128>}, {transform_indices = @transform_5, window_bounds = array<i64: 32, 128>}, {transform_indices = @transform_6, window_bounds = array<i64: 1, 2, 128>}]} {
    %c0 = arith.constant 0 : index
    %c0_0 = arith.constant 0 : index
    %c0_1 = arith.constant 0 : index
    %c0_2 = arith.constant 0 : index
    %0 = vector.load %arg2[%c0, %c0_0, %c0_1, %c0_2] : memref<1x8x8x256xbf16, #tpu.memory_space<vmem>>, vector<1x8x8x256xbf16>
    %1 = vector.shape_cast %0 : vector<1x8x8x256xbf16> to vector<8x8x256xbf16>
    %2 = arith.extf %1 : vector<8x8x256xbf16> to vector<8x8x256xf32>
    %3 = vector.shape_cast %2 : vector<8x8x256xf32> to vector<4x2x8x256xf32>
    %4 = vector.extract_strided_slice %3 {offsets = [0, 0, 0, 0], sizes = [4, 1, 8, 256], strides = [1, 1, 1, 1]} : vector<4x2x8x256xf32> to vector<4x1x8x256xf32>
    %5 = vector.shape_cast %4 : vector<4x1x8x256xf32> to vector<4x8x256xf32>
    %6 = vector.extract_strided_slice %3 {offsets = [0, 1, 0, 0], sizes = [4, 1, 8, 256], strides = [1, 1, 1, 1]} : vector<4x2x8x256xf32> to vector<4x1x8x256xf32>
    %7 = vector.shape_cast %6 : vector<4x1x8x256xf32> to vector<4x8x256xf32>
    %8 = arith.maximumf %5, %7 : vector<4x8x256xf32>
    %9 = vector.extract_strided_slice %8 {offsets = [0, 0, 0], sizes = [4, 8, 128], strides = [1, 1, 1]} : vector<4x8x256xf32> to vector<4x8x128xf32>
    %10 = vector.extract_strided_slice %8 {offsets = [0, 0, 128], sizes = [4, 8, 128], strides = [1, 1, 1]} : vector<4x8x256xf32> to vector<4x8x128xf32>
    %11 = arith.maximumf %9, %10 : vector<4x8x128xf32>
    %12 = arith.truncf %11 : vector<4x8x128xf32> to vector<4x8x128xbf16>
    %c0_3 = arith.constant 0 : index
    %c0_4 = arith.constant 0 : index
    %c0_5 = arith.constant 0 : index
    %c0_6 = arith.constant 0 : index
    %13 = vector.load %arg3[%c0_3, %c0_4, %c0_5, %c0_6] : memref<1x2x8x256xbf16, #tpu.memory_space<vmem>>, vector<1x2x8x256xbf16>
    %14 = vector.shape_cast %13 : vector<1x2x8x256xbf16> to vector<2x8x256xbf16>
    %15 = arith.extf %14 : vector<2x8x256xbf16> to vector<2x8x256xf32>
    %16 = vector.shape_cast %15 : vector<2x8x256xf32> to vector<1x2x8x256xf32>
    %17 = vector.extract_strided_slice %16 {offsets = [0, 0, 0, 0], sizes = [1, 1, 8, 256], strides = [1, 1, 1, 1]} : vector<1x2x8x256xf32> to vector<1x1x8x256xf32>
    %18 = vector.shape_cast %17 : vector<1x1x8x256xf32> to vector<1x8x256xf32>
    %19 = vector.extract_strided_slice %16 {offsets = [0, 1, 0, 0], sizes = [1, 1, 8, 256], strides = [1, 1, 1, 1]} : vector<1x2x8x256xf32> to vector<1x1x8x256xf32>
    %20 = vector.shape_cast %19 : vector<1x1x8x256xf32> to vector<1x8x256xf32>
    %21 = arith.maximumf %18, %20 : vector<1x8x256xf32>
    %22 = vector.extract_strided_slice %21 {offsets = [0, 0, 0], sizes = [1, 8, 128], strides = [1, 1, 1]} : vector<1x8x256xf32> to vector<1x8x128xf32>
    %23 = vector.extract_strided_slice %21 {offsets = [0, 0, 128], sizes = [1, 8, 128], strides = [1, 1, 1]} : vector<1x8x256xf32> to vector<1x8x128xf32>
    %24 = arith.maximumf %22, %23 : vector<1x8x128xf32>
    %25 = arith.truncf %24 : vector<1x8x128xf32> to vector<1x8x128xbf16>
    %c0_7 = arith.constant 0 : index
    %c0_8 = arith.constant 0 : index
    %c0_9 = arith.constant 0 : index
    %c0_10 = arith.constant 0 : index
    %26 = vector.load %arg4[%c0_7, %c0_8, %c0_9, %c0_10] : memref<1x2x8x256xbf16, #tpu.memory_space<vmem>>, vector<1x2x8x256xbf16>
    %27 = vector.shape_cast %26 : vector<1x2x8x256xbf16> to vector<2x8x256xbf16>
    %28 = arith.extf %27 : vector<2x8x256xbf16> to vector<2x8x256xf32>
    %29 = vector.shape_cast %28 : vector<2x8x256xf32> to vector<1x2x8x256xf32>
    %30 = vector.extract_strided_slice %29 {offsets = [0, 0, 0, 0], sizes = [1, 1, 8, 256], strides = [1, 1, 1, 1]} : vector<1x2x8x256xf32> to vector<1x1x8x256xf32>
    %31 = vector.shape_cast %30 : vector<1x1x8x256xf32> to vector<1x8x256xf32>
    %32 = vector.extract_strided_slice %29 {offsets = [0, 1, 0, 0], sizes = [1, 1, 8, 256], strides = [1, 1, 1, 1]} : vector<1x2x8x256xf32> to vector<1x1x8x256xf32>
    %33 = vector.shape_cast %32 : vector<1x1x8x256xf32> to vector<1x8x256xf32>
    %34 = arith.maximumf %31, %33 : vector<1x8x256xf32>
    %35 = vector.extract_strided_slice %34 {offsets = [0, 0, 0], sizes = [1, 8, 128], strides = [1, 1, 1]} : vector<1x8x256xf32> to vector<1x8x128xf32>
    %36 = vector.extract_strided_slice %34 {offsets = [0, 0, 128], sizes = [1, 8, 128], strides = [1, 1, 1]} : vector<1x8x256xf32> to vector<1x8x128xf32>
    %37 = arith.maximumf %35, %36 : vector<1x8x128xf32>
    %38 = arith.truncf %37 : vector<1x8x128xf32> to vector<1x8x128xbf16>
    %c0_i32 = arith.constant 0 : i32
    %39 = arith.cmpi sgt, %arg1, %c0_i32 : i32
    %cst = arith.constant 0.000000e+00 : bf16
    %40 = vector.broadcast %cst : bf16 to vector<1x8x128xbf16>
    %41 = arith.select %39, %25, %40 : vector<1x8x128xbf16>
    %c1_i32 = arith.constant 1 : i32
    %42 = arith.cmpi slt, %arg1, %c1_i32 : i32
    %cst_11 = arith.constant 0.000000e+00 : bf16
    %43 = vector.broadcast %cst_11 : bf16 to vector<1x8x128xbf16>
    %44 = arith.select %42, %38, %43 : vector<1x8x128xbf16>
    %cst_12 = arith.constant 0.000000e+00 : bf16
    %45 = vector.broadcast %cst_12 : bf16 to vector<1x8x128xbf16>
    %46 = tpu.concatenate %45, %41, %12, %44, %45 in 0 : vector<1x8x128xbf16>, vector<1x8x128xbf16>, vector<4x8x128xbf16>, vector<1x8x128xbf16>, vector<1x8x128xbf16> -> vector<8x8x128xbf16>
    %47 = vector.shape_cast %46 : vector<8x8x128xbf16> to vector<64x128xbf16>
    %48 = tpu.iota {dimensions = array<i32: 1>} : vector<4x8x128xi32>
    %c0_i32_13 = arith.constant 0 : i32
    %49 = vector.broadcast %c0_i32_13 : i32 to vector<4x8x128xi32>
    %50 = arith.cmpi sgt, %48, %49 : vector<4x8x128xi32>
    %cst_14 = arith.constant 1.000000e+00 : f32
    %cst_15 = arith.constant 0.000000e+00 : f32
    %51 = vector.broadcast %cst_14 : f32 to vector<4x8x128xf32>
    %52 = vector.broadcast %cst_15 : f32 to vector<4x8x128xf32>
    %53 = arith.select %50, %51, %52 : vector<4x8x128xi1>, vector<4x8x128xf32>
    %54 = arith.truncf %53 : vector<4x8x128xf32> to vector<4x8x128xbf16>
    %55 = vector.shape_cast %54 : vector<4x8x128xbf16> to vector<32x128xbf16>
    %c7_i32 = arith.constant 7 : i32
    %56 = vector.broadcast %c7_i32 : i32 to vector<4x8x128xi32>
    %57 = arith.cmpi slt, %48, %56 : vector<4x8x128xi32>
    %cst_16 = arith.constant 1.000000e+00 : f32
    %cst_17 = arith.constant 0.000000e+00 : f32
    %58 = vector.broadcast %cst_16 : f32 to vector<4x8x128xf32>
    %59 = vector.broadcast %cst_17 : f32 to vector<4x8x128xf32>
    %60 = arith.select %57, %58, %59 : vector<4x8x128xi1>, vector<4x8x128xf32>
    %61 = arith.truncf %60 : vector<4x8x128xf32> to vector<4x8x128xbf16>
    %62 = vector.shape_cast %61 : vector<4x8x128xbf16> to vector<32x128xbf16>
    %63 = vector.extract_strided_slice %47 {offsets = [7, 0], sizes = [32, 128], strides = [1, 1]} : vector<64x128xbf16> to vector<32x128xbf16>
    %64 = arith.mulf %63, %55 : vector<32x128xbf16>
    %c0_18 = arith.constant 0 : index
    %c0_19 = arith.constant 0 : index
    %c0_20 = arith.constant 0 : index
    %65 = vector.load %arg5[%c0_18, %c0_19, %c0_20] : memref<9x128x128xbf16, #tpu.memory_space<vmem>>, vector<1x128x128xbf16>
    %66 = vector.shape_cast %65 : vector<1x128x128xbf16> to vector<128x128xbf16>
    %cst_21 = arith.constant dense<0.000000e+00> : vector<32x128xf32>
    %67 = tpu.matmul %64, %66, %cst_21 {dimension_numbers = #tpu.dot_dimension_numbers<[1], [0], [0], [1], [0, 0, 1, 1], [], []>} : vector<32x128xbf16>, vector<128x128xbf16>, vector<32x128xf32> -> vector<32x128xf32>
    %68 = vector.extract_strided_slice %47 {offsets = [8, 0], sizes = [32, 128], strides = [1, 1]} : vector<64x128xbf16> to vector<32x128xbf16>
    %c1 = arith.constant 1 : index
    %c0_22 = arith.constant 0 : index
    %c0_23 = arith.constant 0 : index
    %69 = vector.load %arg5[%c1, %c0_22, %c0_23] : memref<9x128x128xbf16, #tpu.memory_space<vmem>>, vector<1x128x128xbf16>
    %70 = vector.shape_cast %69 : vector<1x128x128xbf16> to vector<128x128xbf16>
    %cst_24 = arith.constant dense<0.000000e+00> : vector<32x128xf32>
    %71 = tpu.matmul %68, %70, %cst_24 {dimension_numbers = #tpu.dot_dimension_numbers<[1], [0], [0], [1], [0, 0, 1, 1], [], []>} : vector<32x128xbf16>, vector<128x128xbf16>, vector<32x128xf32> -> vector<32x128xf32>
    %72 = arith.addf %67, %71 : vector<32x128xf32>
    %73 = vector.extract_strided_slice %47 {offsets = [9, 0], sizes = [32, 128], strides = [1, 1]} : vector<64x128xbf16> to vector<32x128xbf16>
    %74 = arith.mulf %73, %62 : vector<32x128xbf16>
    %c2 = arith.constant 2 : index
    %c0_25 = arith.constant 0 : index
    %c0_26 = arith.constant 0 : index
    %75 = vector.load %arg5[%c2, %c0_25, %c0_26] : memref<9x128x128xbf16, #tpu.memory_space<vmem>>, vector<1x128x128xbf16>
    %76 = vector.shape_cast %75 : vector<1x128x128xbf16> to vector<128x128xbf16>
    %cst_27 = arith.constant dense<0.000000e+00> : vector<32x128xf32>
    %77 = tpu.matmul %74, %76, %cst_27 {dimension_numbers = #tpu.dot_dimension_numbers<[1], [0], [0], [1], [0, 0, 1, 1], [], []>} : vector<32x128xbf16>, vector<128x128xbf16>, vector<32x128xf32> -> vector<32x128xf32>
    %78 = arith.addf %72, %77 : vector<32x128xf32>
    %79 = vector.extract_strided_slice %47 {offsets = [15, 0], sizes = [32, 128], strides = [1, 1]} : vector<64x128xbf16> to vector<32x128xbf16>
    %80 = arith.mulf %79, %55 : vector<32x128xbf16>
    %c3 = arith.constant 3 : index
    %c0_28 = arith.constant 0 : index
    %c0_29 = arith.constant 0 : index
    %81 = vector.load %arg5[%c3, %c0_28, %c0_29] : memref<9x128x128xbf16, #tpu.memory_space<vmem>>, vector<1x128x128xbf16>
    %82 = vector.shape_cast %81 : vector<1x128x128xbf16> to vector<128x128xbf16>
    %cst_30 = arith.constant dense<0.000000e+00> : vector<32x128xf32>
    %83 = tpu.matmul %80, %82, %cst_30 {dimension_numbers = #tpu.dot_dimension_numbers<[1], [0], [0], [1], [0, 0, 1, 1], [], []>} : vector<32x128xbf16>, vector<128x128xbf16>, vector<32x128xf32> -> vector<32x128xf32>
    %84 = arith.addf %78, %83 : vector<32x128xf32>
    %85 = vector.extract_strided_slice %47 {offsets = [16, 0], sizes = [32, 128], strides = [1, 1]} : vector<64x128xbf16> to vector<32x128xbf16>
    %c4 = arith.constant 4 : index
    %c0_31 = arith.constant 0 : index
    %c0_32 = arith.constant 0 : index
    %86 = vector.load %arg5[%c4, %c0_31, %c0_32] : memref<9x128x128xbf16, #tpu.memory_space<vmem>>, vector<1x128x128xbf16>
    %87 = vector.shape_cast %86 : vector<1x128x128xbf16> to vector<128x128xbf16>
    %cst_33 = arith.constant dense<0.000000e+00> : vector<32x128xf32>
    %88 = tpu.matmul %85, %87, %cst_33 {dimension_numbers = #tpu.dot_dimension_numbers<[1], [0], [0], [1], [0, 0, 1, 1], [], []>} : vector<32x128xbf16>, vector<128x128xbf16>, vector<32x128xf32> -> vector<32x128xf32>
    %89 = arith.addf %84, %88 : vector<32x128xf32>
    %90 = vector.extract_strided_slice %47 {offsets = [17, 0], sizes = [32, 128], strides = [1, 1]} : vector<64x128xbf16> to vector<32x128xbf16>
    %91 = arith.mulf %90, %62 : vector<32x128xbf16>
    %c5 = arith.constant 5 : index
    %c0_34 = arith.constant 0 : index
    %c0_35 = arith.constant 0 : index
    %92 = vector.load %arg5[%c5, %c0_34, %c0_35] : memref<9x128x128xbf16, #tpu.memory_space<vmem>>, vector<1x128x128xbf16>
    %93 = vector.shape_cast %92 : vector<1x128x128xbf16> to vector<128x128xbf16>
    %cst_36 = arith.constant dense<0.000000e+00> : vector<32x128xf32>
    %94 = tpu.matmul %91, %93, %cst_36 {dimension_numbers = #tpu.dot_dimension_numbers<[1], [0], [0], [1], [0, 0, 1, 1], [], []>} : vector<32x128xbf16>, vector<128x128xbf16>, vector<32x128xf32> -> vector<32x128xf32>
    %95 = arith.addf %89, %94 : vector<32x128xf32>
    %96 = vector.extract_strided_slice %47 {offsets = [23, 0], sizes = [32, 128], strides = [1, 1]} : vector<64x128xbf16> to vector<32x128xbf16>
    %97 = arith.mulf %96, %55 : vector<32x128xbf16>
    %c6 = arith.constant 6 : index
    %c0_37 = arith.constant 0 : index
    %c0_38 = arith.constant 0 : index
    %98 = vector.load %arg5[%c6, %c0_37, %c0_38] : memref<9x128x128xbf16, #tpu.memory_space<vmem>>, vector<1x128x128xbf16>
    %99 = vector.shape_cast %98 : vector<1x128x128xbf16> to vector<128x128xbf16>
    %cst_39 = arith.constant dense<0.000000e+00> : vector<32x128xf32>
    %100 = tpu.matmul %97, %99, %cst_39 {dimension_numbers = #tpu.dot_dimension_numbers<[1], [0], [0], [1], [0, 0, 1, 1], [], []>} : vector<32x128xbf16>, vector<128x128xbf16>, vector<32x128xf32> -> vector<32x128xf32>
    %101 = arith.addf %95, %100 : vector<32x128xf32>
    %102 = vector.extract_strided_slice %47 {offsets = [24, 0], sizes = [32, 128], strides = [1, 1]} : vector<64x128xbf16> to vector<32x128xbf16>
    %c7 = arith.constant 7 : index
    %c0_40 = arith.constant 0 : index
    %c0_41 = arith.constant 0 : index
    %103 = vector.load %arg5[%c7, %c0_40, %c0_41] : memref<9x128x128xbf16, #tpu.memory_space<vmem>>, vector<1x128x128xbf16>
    %104 = vector.shape_cast %103 : vector<1x128x128xbf16> to vector<128x128xbf16>
    %cst_42 = arith.constant dense<0.000000e+00> : vector<32x128xf32>
    %105 = tpu.matmul %102, %104, %cst_42 {dimension_numbers = #tpu.dot_dimension_numbers<[1], [0], [0], [1], [0, 0, 1, 1], [], []>} : vector<32x128xbf16>, vector<128x128xbf16>, vector<32x128xf32> -> vector<32x128xf32>
    %106 = arith.addf %101, %105 : vector<32x128xf32>
    %107 = vector.extract_strided_slice %47 {offsets = [25, 0], sizes = [32, 128], strides = [1, 1]} : vector<64x128xbf16> to vector<32x128xbf16>
    %108 = arith.mulf %107, %62 : vector<32x128xbf16>
    %c8 = arith.constant 8 : index
    %c0_43 = arith.constant 0 : index
    %c0_44 = arith.constant 0 : index
    %109 = vector.load %arg5[%c8, %c0_43, %c0_44] : memref<9x128x128xbf16, #tpu.memory_space<vmem>>, vector<1x128x128xbf16>
    %110 = vector.shape_cast %109 : vector<1x128x128xbf16> to vector<128x128xbf16>
    %cst_45 = arith.constant dense<0.000000e+00> : vector<32x128xf32>
    %111 = tpu.matmul %108, %110, %cst_45 {dimension_numbers = #tpu.dot_dimension_numbers<[1], [0], [0], [1], [0, 0, 1, 1], [], []>} : vector<32x128xbf16>, vector<128x128xbf16>, vector<32x128xf32> -> vector<32x128xf32>
    %112 = arith.addf %106, %111 : vector<32x128xf32>
    %c0_46 = arith.constant 0 : index
    %c0_47 = arith.constant 0 : index
    %113 = vector.load %arg6[%c0_46, %c0_47] : memref<1x128xf32, #tpu.memory_space<vmem>>, vector<1x128xf32>
    %114 = vector.broadcast %113 : vector<1x128xf32> to vector<32x128xf32>
    %115 = arith.addf %112, %114 : vector<32x128xf32>
    %116 = arith.truncf %115 : vector<32x128xf32> to vector<32x128xbf16>
    %c0_48 = arith.constant 0 : index
    %c0_49 = arith.constant 0 : index
    %117 = vector.load %arg7[%c0_48, %c0_49] : memref<32x128xbf16, #tpu.memory_space<vmem>>, vector<32x128xbf16>
    tpu.vector_store %arg7[%c0_48, %c0_49], %116 {strides = array<i32>} : memref<32x128xbf16, #tpu.memory_space<vmem>>, vector<32x128xbf16>,
    %cst_50 = arith.constant dense<0.000000e+00> : vector<128xf32>
    %118 = vector.multi_reduction <add>, %115, %cst_50 [0] : vector<32x128xf32> to vector<128xf32>
    %119 = vector.shape_cast %118 : vector<128xf32> to vector<1x128xf32>
    %120 = arith.mulf %115, %115 : vector<32x128xf32>
    %cst_51 = arith.constant dense<0.000000e+00> : vector<128xf32>
    %121 = vector.multi_reduction <add>, %120, %cst_51 [0] : vector<32x128xf32> to vector<128xf32>
    %122 = vector.shape_cast %121 : vector<128xf32> to vector<1x128xf32>
    %123 = tpu.concatenate %119, %122 in 0 : vector<1x128xf32>, vector<1x128xf32> -> vector<2x128xf32>
    %c0_52 = arith.constant 0 : index
    %c0_53 = arith.constant 0 : index
    %c0_54 = arith.constant 0 : index
    %124 = vector.load %arg8[%c0_52, %c0_53, %c0_54] : memref<1x2x128xf32, #tpu.memory_space<vmem>>, vector<1x2x128xf32>
    %125 = vector.shape_cast %124 : vector<1x2x128xf32> to vector<2x128xf32>
    %126 = vector.shape_cast %123 : vector<2x128xf32> to vector<1x2x128xf32>
    tpu.vector_store %arg8[%c0_52, %c0_53, %c0_54], %126 {strides = array<i32>} : memref<1x2x128xf32, #tpu.memory_space<vmem>>, vector<1x2x128xf32>,
    return
  }
  func.func @transform_0(%arg0: i32, %arg1: i32) -> (i32, i32, i32, i32) {
    %c0_i32 = arith.constant 0 : i32
    %c0_i32_0 = arith.constant 0 : i32
    %c0_i32_1 = arith.constant 0 : i32
    return %arg0, %arg1, %c0_i32, %c0_i32_0 : i32, i32, i32, i32
  }
  func.func @transform_1(%arg0: i32, %arg1: i32) -> (i32, i32, i32, i32) {
    %c4_i32 = arith.constant 4 : i32
    %0 = arith.muli %arg1, %c4_i32 : i32
    %c1_i32 = arith.constant 1 : i32
    %1 = arith.subi %0, %c1_i32 : i32
    %c0_i32 = arith.constant 0 : i32
    %2 = arith.maxsi %1, %c0_i32 : i32
    %c0_i32_0 = arith.constant 0 : i32
    %c0_i32_1 = arith.constant 0 : i32
    %c0_i32_2 = arith.constant 0 : i32
    return %arg0, %2, %c0_i32_0, %c0_i32_1 : i32, i32, i32, i32
  }
  func.func @transform_2(%arg0: i32, %arg1: i32) -> (i32, i32, i32, i32) {
    %c4_i32 = arith.constant 4 : i32
    %0 = arith.muli %arg1, %c4_i32 : i32
    %c4_i32_0 = arith.constant 4 : i32
    %1 = arith.addi %0, %c4_i32_0 : i32
    %c7_i32 = arith.constant 7 : i32
    %2 = arith.minsi %1, %c7_i32 : i32
    %c0_i32 = arith.constant 0 : i32
    %c0_i32_1 = arith.constant 0 : i32
    %c0_i32_2 = arith.constant 0 : i32
    return %arg0, %2, %c0_i32, %c0_i32_1 : i32, i32, i32, i32
  }
  func.func @transform_3(%arg0: i32, %arg1: i32) -> (i32, i32, i32) {
    %c0_i32 = arith.constant 0 : i32
    %c0_i32_0 = arith.constant 0 : i32
    %c0_i32_1 = arith.constant 0 : i32
    %c0_i32_2 = arith.constant 0 : i32
    return %c0_i32, %c0_i32_0, %c0_i32_1 : i32, i32, i32
  }
  func.func @transform_4(%arg0: i32, %arg1: i32) -> (i32, i32) {
    %c0_i32 = arith.constant 0 : i32
    %c0_i32_0 = arith.constant 0 : i32
    %c0_i32_1 = arith.constant 0 : i32
    return %c0_i32, %c0_i32_0 : i32, i32
  }
  func.func @transform_5(%arg0: i32, %arg1: i32) -> (i32, i32) {
    %c2_i32 = arith.constant 2 : i32
    %0 = arith.muli %arg0, %c2_i32 : i32
    %1 = arith.addi %0, %arg1 : i32
    %c0_i32 = arith.constant 0 : i32
    %c0_i32_0 = arith.constant 0 : i32
    return %1, %c0_i32 : i32, i32
  }
  func.func @transform_6(%arg0: i32, %arg1: i32) -> (i32, i32, i32) {
    %c2_i32 = arith.constant 2 : i32
    %0 = arith.muli %arg0, %c2_i32 : i32
    %1 = arith.addi %0, %arg1 : i32
    %c0_i32 = arith.constant 0 : i32
    %c0_i32_0 = arith.constant 0 : i32
    %c0_i32_1 = arith.constant 0 : i32
    return %1, %c0_i32, %c0_i32_0 : i32, i32, i32
  }
}

module attributes {stable_mosaic.version = 11 : i64} {
  func.func @_bn_relu_apply_kernel(%arg0: i32, %arg1: memref<32x128xbf16, #tpu.memory_space<vmem>>, %arg2: memref<1x128xf32, #tpu.memory_space<vmem>>, %arg3: memref<1x128xf32, #tpu.memory_space<vmem>>, %arg4: memref<32x128xf32, #tpu.memory_space<vmem>>) attributes {dimension_semantics = [#tpu.dimension_semantics<parallel>], iteration_bounds = array<i64: 4>, scalar_prefetch = 0 : i64, scratch_operands = 0 : i64, tpu.core_type = #tpu.core_type<tc>, window_params = [{transform_indices = @transform_0, window_bounds = array<i64: 32, 128>}, {pipeline_mode = #tpu.pipeline_mode<synchronous>, transform_indices = @transform_1, window_bounds = array<i64: 1, 128>}, {pipeline_mode = #tpu.pipeline_mode<synchronous>, transform_indices = @transform_2, window_bounds = array<i64: 1, 128>}, {transform_indices = @transform_3, window_bounds = array<i64: 32, 128>}]} {
    %c0 = arith.constant 0 : index
    %c0_0 = arith.constant 0 : index
    %0 = vector.load %arg1[%c0, %c0_0] : memref<32x128xbf16, #tpu.memory_space<vmem>>, vector<32x128xbf16>
    %1 = arith.extf %0 : vector<32x128xbf16> to vector<32x128xf32>
    %c0_1 = arith.constant 0 : index
    %c0_2 = arith.constant 0 : index
    %2 = vector.load %arg2[%c0_1, %c0_2] : memref<1x128xf32, #tpu.memory_space<vmem>>, vector<1x128xf32>
    %3 = vector.broadcast %2 : vector<1x128xf32> to vector<32x128xf32>
    %4 = arith.mulf %1, %3 : vector<32x128xf32>
    %c0_3 = arith.constant 0 : index
    %c0_4 = arith.constant 0 : index
    %5 = vector.load %arg3[%c0_3, %c0_4] : memref<1x128xf32, #tpu.memory_space<vmem>>, vector<1x128xf32>
    %6 = vector.broadcast %5 : vector<1x128xf32> to vector<32x128xf32>
    %7 = arith.addf %4, %6 : vector<32x128xf32>
    %cst = arith.constant 0.000000e+00 : f32
    %8 = vector.broadcast %cst : f32 to vector<32x128xf32>
    %9 = arith.maximumf %7, %8 : vector<32x128xf32>
    %c0_5 = arith.constant 0 : index
    %c0_6 = arith.constant 0 : index
    %10 = vector.load %arg4[%c0_5, %c0_6] : memref<32x128xf32, #tpu.memory_space<vmem>>, vector<32x128xf32>
    tpu.vector_store %arg4[%c0_5, %c0_6], %9 {strides = array<i32>} : memref<32x128xf32, #tpu.memory_space<vmem>>, vector<32x128xf32>,
    return
  }
  func.func @transform_0(%arg0: i32) -> (i32, i32) {
    %c0_i32 = arith.constant 0 : i32
    %c0_i32_0 = arith.constant 0 : i32
    return %arg0, %c0_i32 : i32, i32
  }
  func.func @transform_1(%arg0: i32) -> (i32, i32) {
    %c0_i32 = arith.constant 0 : i32
    %c0_i32_0 = arith.constant 0 : i32
    %c0_i32_1 = arith.constant 0 : i32
    return %c0_i32, %c0_i32_0 : i32, i32
  }
  func.func @transform_2(%arg0: i32) -> (i32, i32) {
    %c0_i32 = arith.constant 0 : i32
    %c0_i32_0 = arith.constant 0 : i32
    %c0_i32_1 = arith.constant 0 : i32
    return %c0_i32, %c0_i32_0 : i32, i32
  }
  func.func @transform_3(%arg0: i32) -> (i32, i32) {
    %c0_i32 = arith.constant 0 : i32
    %c0_i32_0 = arith.constant 0 : i32
    return %arg0, %c0_i32 : i32, i32
  }
}

module attributes {stable_mosaic.version = 11 : i64} {
  func.func @_bn_relu_conv_kernel(%arg0: i32, %arg1: i32, %arg2: memref<1x4x8x128xbf16, #tpu.memory_space<vmem>>, %arg3: memref<1x1x8x128xbf16, #tpu.memory_space<vmem>>, %arg4: memref<1x1x8x128xbf16, #tpu.memory_space<vmem>>, %arg5: memref<1x128xf32, #tpu.memory_space<vmem>>, %arg6: memref<1x128xf32, #tpu.memory_space<vmem>>, %arg7: memref<9x128x128xbf16, #tpu.memory_space<vmem>>, %arg8: memref<1x128xf32, #tpu.memory_space<vmem>>, %arg9: memref<32x128xbf16, #tpu.memory_space<vmem>>, %arg10: memref<1x2x128xf32, #tpu.memory_space<vmem>>) attributes {dimension_semantics = [#tpu.dimension_semantics<parallel>, #tpu.dimension_semantics<parallel>], iteration_bounds = array<i64: 2, 2>, scalar_prefetch = 0 : i64, scratch_operands = 0 : i64, tpu.core_type = #tpu.core_type<tc>, window_params = [{transform_indices = @transform_0, window_bounds = array<i64: 1, 4, 8, 128>}, {transform_indices = @transform_1, window_bounds = array<i64: 1, 1, 8, 128>}, {transform_indices = @transform_2, window_bounds = array<i64: 1, 1, 8, 128>}, {pipeline_mode = #tpu.pipeline_mode<synchronous>, transform_indices = @transform_3, window_bounds = array<i64: 1, 128>}, {pipeline_mode = #tpu.pipeline_mode<synchronous>, transform_indices = @transform_4, window_bounds = array<i64: 1, 128>}, {pipeline_mode = #tpu.pipeline_mode<synchronous>, transform_indices = @transform_5, window_bounds = array<i64: 9, 128, 128>}, {pipeline_mode = #tpu.pipeline_mode<synchronous>, transform_indices = @transform_6, window_bounds = array<i64: 1, 128>}, {transform_indices = @transform_7, window_bounds = array<i64: 32, 128>}, {transform_indices = @transform_8, window_bounds = array<i64: 1, 2, 128>}]} {
    %c0 = arith.constant 0 : index
    %c0_0 = arith.constant 0 : index
    %0 = vector.load %arg5[%c0, %c0_0] : memref<1x128xf32, #tpu.memory_space<vmem>>, vector<1x128xf32>
    %c0_1 = arith.constant 0 : index
    %c0_2 = arith.constant 0 : index
    %1 = vector.load %arg6[%c0_1, %c0_2] : memref<1x128xf32, #tpu.memory_space<vmem>>, vector<1x128xf32>
    %c0_3 = arith.constant 0 : index
    %c0_4 = arith.constant 0 : index
    %c0_5 = arith.constant 0 : index
    %c0_6 = arith.constant 0 : index
    %2 = vector.load %arg2[%c0_3, %c0_4, %c0_5, %c0_6] : memref<1x4x8x128xbf16, #tpu.memory_space<vmem>>, vector<1x4x8x128xbf16>
    %3 = vector.shape_cast %2 : vector<1x4x8x128xbf16> to vector<4x8x128xbf16>
    %4 = arith.extf %3 : vector<4x8x128xbf16> to vector<4x8x128xf32>
    %5 = vector.shape_cast %0 : vector<1x128xf32> to vector<1x1x128xf32>
    %6 = vector.broadcast %5 : vector<1x1x128xf32> to vector<4x8x128xf32>
    %7 = arith.mulf %4, %6 : vector<4x8x128xf32>
    %8 = vector.shape_cast %1 : vector<1x128xf32> to vector<1x1x128xf32>
    %9 = vector.broadcast %8 : vector<1x1x128xf32> to vector<4x8x128xf32>
    %10 = arith.addf %7, %9 : vector<4x8x128xf32>
    %cst = arith.constant 0.000000e+00 : f32
    %11 = vector.broadcast %cst : f32 to vector<4x8x128xf32>
    %12 = arith.maximumf %10, %11 : vector<4x8x128xf32>
    %13 = arith.truncf %12 : vector<4x8x128xf32> to vector<4x8x128xbf16>
    %c0_7 = arith.constant 0 : index
    %c0_8 = arith.constant 0 : index
    %c0_9 = arith.constant 0 : index
    %c0_10 = arith.constant 0 : index
    %14 = vector.load %arg3[%c0_7, %c0_8, %c0_9, %c0_10] : memref<1x1x8x128xbf16, #tpu.memory_space<vmem>>, vector<1x1x8x128xbf16>
    %15 = vector.shape_cast %14 : vector<1x1x8x128xbf16> to vector<1x8x128xbf16>
    %16 = arith.extf %15 : vector<1x8x128xbf16> to vector<1x8x128xf32>
    %17 = vector.shape_cast %0 : vector<1x128xf32> to vector<1x1x128xf32>
    %18 = vector.broadcast %17 : vector<1x1x128xf32> to vector<1x8x128xf32>
    %19 = arith.mulf %16, %18 : vector<1x8x128xf32>
    %20 = vector.shape_cast %1 : vector<1x128xf32> to vector<1x1x128xf32>
    %21 = vector.broadcast %20 : vector<1x1x128xf32> to vector<1x8x128xf32>
    %22 = arith.addf %19, %21 : vector<1x8x128xf32>
    %cst_11 = arith.constant 0.000000e+00 : f32
    %23 = vector.broadcast %cst_11 : f32 to vector<1x8x128xf32>
    %24 = arith.maximumf %22, %23 : vector<1x8x128xf32>
    %25 = arith.truncf %24 : vector<1x8x128xf32> to vector<1x8x128xbf16>
    %c0_12 = arith.constant 0 : index
    %c0_13 = arith.constant 0 : index
    %c0_14 = arith.constant 0 : index
    %c0_15 = arith.constant 0 : index
    %26 = vector.load %arg4[%c0_12, %c0_13, %c0_14, %c0_15] : memref<1x1x8x128xbf16, #tpu.memory_space<vmem>>, vector<1x1x8x128xbf16>
    %27 = vector.shape_cast %26 : vector<1x1x8x128xbf16> to vector<1x8x128xbf16>
    %28 = arith.extf %27 : vector<1x8x128xbf16> to vector<1x8x128xf32>
    %29 = vector.shape_cast %0 : vector<1x128xf32> to vector<1x1x128xf32>
    %30 = vector.broadcast %29 : vector<1x1x128xf32> to vector<1x8x128xf32>
    %31 = arith.mulf %28, %30 : vector<1x8x128xf32>
    %32 = vector.shape_cast %1 : vector<1x128xf32> to vector<1x1x128xf32>
    %33 = vector.broadcast %32 : vector<1x1x128xf32> to vector<1x8x128xf32>
    %34 = arith.addf %31, %33 : vector<1x8x128xf32>
    %cst_16 = arith.constant 0.000000e+00 : f32
    %35 = vector.broadcast %cst_16 : f32 to vector<1x8x128xf32>
    %36 = arith.maximumf %34, %35 : vector<1x8x128xf32>
    %37 = arith.truncf %36 : vector<1x8x128xf32> to vector<1x8x128xbf16>
    %c0_i32 = arith.constant 0 : i32
    %38 = arith.cmpi sgt, %arg1, %c0_i32 : i32
    %cst_17 = arith.constant 0.000000e+00 : bf16
    %39 = vector.broadcast %cst_17 : bf16 to vector<1x8x128xbf16>
    %40 = arith.select %38, %25, %39 : vector<1x8x128xbf16>
    %c1_i32 = arith.constant 1 : i32
    %41 = arith.cmpi slt, %arg1, %c1_i32 : i32
    %cst_18 = arith.constant 0.000000e+00 : bf16
    %42 = vector.broadcast %cst_18 : bf16 to vector<1x8x128xbf16>
    %43 = arith.select %41, %37, %42 : vector<1x8x128xbf16>
    %cst_19 = arith.constant 0.000000e+00 : bf16
    %44 = vector.broadcast %cst_19 : bf16 to vector<1x8x128xbf16>
    %45 = tpu.concatenate %44, %40, %13, %43, %44 in 0 : vector<1x8x128xbf16>, vector<1x8x128xbf16>, vector<4x8x128xbf16>, vector<1x8x128xbf16>, vector<1x8x128xbf16> -> vector<8x8x128xbf16>
    %46 = vector.shape_cast %45 : vector<8x8x128xbf16> to vector<64x128xbf16>
    %47 = tpu.iota {dimensions = array<i32: 1>} : vector<4x8x128xi32>
    %c0_i32_20 = arith.constant 0 : i32
    %48 = vector.broadcast %c0_i32_20 : i32 to vector<4x8x128xi32>
    %49 = arith.cmpi sgt, %47, %48 : vector<4x8x128xi32>
    %cst_21 = arith.constant 1.000000e+00 : f32
    %cst_22 = arith.constant 0.000000e+00 : f32
    %50 = vector.broadcast %cst_21 : f32 to vector<4x8x128xf32>
    %51 = vector.broadcast %cst_22 : f32 to vector<4x8x128xf32>
    %52 = arith.select %49, %50, %51 : vector<4x8x128xi1>, vector<4x8x128xf32>
    %53 = arith.truncf %52 : vector<4x8x128xf32> to vector<4x8x128xbf16>
    %54 = vector.shape_cast %53 : vector<4x8x128xbf16> to vector<32x128xbf16>
    %c7_i32 = arith.constant 7 : i32
    %55 = vector.broadcast %c7_i32 : i32 to vector<4x8x128xi32>
    %56 = arith.cmpi slt, %47, %55 : vector<4x8x128xi32>
    %cst_23 = arith.constant 1.000000e+00 : f32
    %cst_24 = arith.constant 0.000000e+00 : f32
    %57 = vector.broadcast %cst_23 : f32 to vector<4x8x128xf32>
    %58 = vector.broadcast %cst_24 : f32 to vector<4x8x128xf32>
    %59 = arith.select %56, %57, %58 : vector<4x8x128xi1>, vector<4x8x128xf32>
    %60 = arith.truncf %59 : vector<4x8x128xf32> to vector<4x8x128xbf16>
    %61 = vector.shape_cast %60 : vector<4x8x128xbf16> to vector<32x128xbf16>
    %62 = vector.extract_strided_slice %46 {offsets = [7, 0], sizes = [32, 128], strides = [1, 1]} : vector<64x128xbf16> to vector<32x128xbf16>
    %63 = arith.mulf %62, %54 : vector<32x128xbf16>
    %c0_25 = arith.constant 0 : index
    %c0_26 = arith.constant 0 : index
    %c0_27 = arith.constant 0 : index
    %64 = vector.load %arg7[%c0_25, %c0_26, %c0_27] : memref<9x128x128xbf16, #tpu.memory_space<vmem>>, vector<1x128x128xbf16>
    %65 = vector.shape_cast %64 : vector<1x128x128xbf16> to vector<128x128xbf16>
    %cst_28 = arith.constant dense<0.000000e+00> : vector<32x128xf32>
    %66 = tpu.matmul %63, %65, %cst_28 {dimension_numbers = #tpu.dot_dimension_numbers<[1], [0], [0], [1], [0, 0, 1, 1], [], []>} : vector<32x128xbf16>, vector<128x128xbf16>, vector<32x128xf32> -> vector<32x128xf32>
    %67 = vector.extract_strided_slice %46 {offsets = [8, 0], sizes = [32, 128], strides = [1, 1]} : vector<64x128xbf16> to vector<32x128xbf16>
    %c1 = arith.constant 1 : index
    %c0_29 = arith.constant 0 : index
    %c0_30 = arith.constant 0 : index
    %68 = vector.load %arg7[%c1, %c0_29, %c0_30] : memref<9x128x128xbf16, #tpu.memory_space<vmem>>, vector<1x128x128xbf16>
    %69 = vector.shape_cast %68 : vector<1x128x128xbf16> to vector<128x128xbf16>
    %cst_31 = arith.constant dense<0.000000e+00> : vector<32x128xf32>
    %70 = tpu.matmul %67, %69, %cst_31 {dimension_numbers = #tpu.dot_dimension_numbers<[1], [0], [0], [1], [0, 0, 1, 1], [], []>} : vector<32x128xbf16>, vector<128x128xbf16>, vector<32x128xf32> -> vector<32x128xf32>
    %71 = arith.addf %66, %70 : vector<32x128xf32>
    %72 = vector.extract_strided_slice %46 {offsets = [9, 0], sizes = [32, 128], strides = [1, 1]} : vector<64x128xbf16> to vector<32x128xbf16>
    %73 = arith.mulf %72, %61 : vector<32x128xbf16>
    %c2 = arith.constant 2 : index
    %c0_32 = arith.constant 0 : index
    %c0_33 = arith.constant 0 : index
    %74 = vector.load %arg7[%c2, %c0_32, %c0_33] : memref<9x128x128xbf16, #tpu.memory_space<vmem>>, vector<1x128x128xbf16>
    %75 = vector.shape_cast %74 : vector<1x128x128xbf16> to vector<128x128xbf16>
    %cst_34 = arith.constant dense<0.000000e+00> : vector<32x128xf32>
    %76 = tpu.matmul %73, %75, %cst_34 {dimension_numbers = #tpu.dot_dimension_numbers<[1], [0], [0], [1], [0, 0, 1, 1], [], []>} : vector<32x128xbf16>, vector<128x128xbf16>, vector<32x128xf32> -> vector<32x128xf32>
    %77 = arith.addf %71, %76 : vector<32x128xf32>
    %78 = vector.extract_strided_slice %46 {offsets = [15, 0], sizes = [32, 128], strides = [1, 1]} : vector<64x128xbf16> to vector<32x128xbf16>
    %79 = arith.mulf %78, %54 : vector<32x128xbf16>
    %c3 = arith.constant 3 : index
    %c0_35 = arith.constant 0 : index
    %c0_36 = arith.constant 0 : index
    %80 = vector.load %arg7[%c3, %c0_35, %c0_36] : memref<9x128x128xbf16, #tpu.memory_space<vmem>>, vector<1x128x128xbf16>
    %81 = vector.shape_cast %80 : vector<1x128x128xbf16> to vector<128x128xbf16>
    %cst_37 = arith.constant dense<0.000000e+00> : vector<32x128xf32>
    %82 = tpu.matmul %79, %81, %cst_37 {dimension_numbers = #tpu.dot_dimension_numbers<[1], [0], [0], [1], [0, 0, 1, 1], [], []>} : vector<32x128xbf16>, vector<128x128xbf16>, vector<32x128xf32> -> vector<32x128xf32>
    %83 = arith.addf %77, %82 : vector<32x128xf32>
    %84 = vector.extract_strided_slice %46 {offsets = [16, 0], sizes = [32, 128], strides = [1, 1]} : vector<64x128xbf16> to vector<32x128xbf16>
    %c4 = arith.constant 4 : index
    %c0_38 = arith.constant 0 : index
    %c0_39 = arith.constant 0 : index
    %85 = vector.load %arg7[%c4, %c0_38, %c0_39] : memref<9x128x128xbf16, #tpu.memory_space<vmem>>, vector<1x128x128xbf16>
    %86 = vector.shape_cast %85 : vector<1x128x128xbf16> to vector<128x128xbf16>
    %cst_40 = arith.constant dense<0.000000e+00> : vector<32x128xf32>
    %87 = tpu.matmul %84, %86, %cst_40 {dimension_numbers = #tpu.dot_dimension_numbers<[1], [0], [0], [1], [0, 0, 1, 1], [], []>} : vector<32x128xbf16>, vector<128x128xbf16>, vector<32x128xf32> -> vector<32x128xf32>
    %88 = arith.addf %83, %87 : vector<32x128xf32>
    %89 = vector.extract_strided_slice %46 {offsets = [17, 0], sizes = [32, 128], strides = [1, 1]} : vector<64x128xbf16> to vector<32x128xbf16>
    %90 = arith.mulf %89, %61 : vector<32x128xbf16>
    %c5 = arith.constant 5 : index
    %c0_41 = arith.constant 0 : index
    %c0_42 = arith.constant 0 : index
    %91 = vector.load %arg7[%c5, %c0_41, %c0_42] : memref<9x128x128xbf16, #tpu.memory_space<vmem>>, vector<1x128x128xbf16>
    %92 = vector.shape_cast %91 : vector<1x128x128xbf16> to vector<128x128xbf16>
    %cst_43 = arith.constant dense<0.000000e+00> : vector<32x128xf32>
    %93 = tpu.matmul %90, %92, %cst_43 {dimension_numbers = #tpu.dot_dimension_numbers<[1], [0], [0], [1], [0, 0, 1, 1], [], []>} : vector<32x128xbf16>, vector<128x128xbf16>, vector<32x128xf32> -> vector<32x128xf32>
    %94 = arith.addf %88, %93 : vector<32x128xf32>
    %95 = vector.extract_strided_slice %46 {offsets = [23, 0], sizes = [32, 128], strides = [1, 1]} : vector<64x128xbf16> to vector<32x128xbf16>
    %96 = arith.mulf %95, %54 : vector<32x128xbf16>
    %c6 = arith.constant 6 : index
    %c0_44 = arith.constant 0 : index
    %c0_45 = arith.constant 0 : index
    %97 = vector.load %arg7[%c6, %c0_44, %c0_45] : memref<9x128x128xbf16, #tpu.memory_space<vmem>>, vector<1x128x128xbf16>
    %98 = vector.shape_cast %97 : vector<1x128x128xbf16> to vector<128x128xbf16>
    %cst_46 = arith.constant dense<0.000000e+00> : vector<32x128xf32>
    %99 = tpu.matmul %96, %98, %cst_46 {dimension_numbers = #tpu.dot_dimension_numbers<[1], [0], [0], [1], [0, 0, 1, 1], [], []>} : vector<32x128xbf16>, vector<128x128xbf16>, vector<32x128xf32> -> vector<32x128xf32>
    %100 = arith.addf %94, %99 : vector<32x128xf32>
    %101 = vector.extract_strided_slice %46 {offsets = [24, 0], sizes = [32, 128], strides = [1, 1]} : vector<64x128xbf16> to vector<32x128xbf16>
    %c7 = arith.constant 7 : index
    %c0_47 = arith.constant 0 : index
    %c0_48 = arith.constant 0 : index
    %102 = vector.load %arg7[%c7, %c0_47, %c0_48] : memref<9x128x128xbf16, #tpu.memory_space<vmem>>, vector<1x128x128xbf16>
    %103 = vector.shape_cast %102 : vector<1x128x128xbf16> to vector<128x128xbf16>
    %cst_49 = arith.constant dense<0.000000e+00> : vector<32x128xf32>
    %104 = tpu.matmul %101, %103, %cst_49 {dimension_numbers = #tpu.dot_dimension_numbers<[1], [0], [0], [1], [0, 0, 1, 1], [], []>} : vector<32x128xbf16>, vector<128x128xbf16>, vector<32x128xf32> -> vector<32x128xf32>
    %105 = arith.addf %100, %104 : vector<32x128xf32>
    %106 = vector.extract_strided_slice %46 {offsets = [25, 0], sizes = [32, 128], strides = [1, 1]} : vector<64x128xbf16> to vector<32x128xbf16>
    %107 = arith.mulf %106, %61 : vector<32x128xbf16>
    %c8 = arith.constant 8 : index
    %c0_50 = arith.constant 0 : index
    %c0_51 = arith.constant 0 : index
    %108 = vector.load %arg7[%c8, %c0_50, %c0_51] : memref<9x128x128xbf16, #tpu.memory_space<vmem>>, vector<1x128x128xbf16>
    %109 = vector.shape_cast %108 : vector<1x128x128xbf16> to vector<128x128xbf16>
    %cst_52 = arith.constant dense<0.000000e+00> : vector<32x128xf32>
    %110 = tpu.matmul %107, %109, %cst_52 {dimension_numbers = #tpu.dot_dimension_numbers<[1], [0], [0], [1], [0, 0, 1, 1], [], []>} : vector<32x128xbf16>, vector<128x128xbf16>, vector<32x128xf32> -> vector<32x128xf32>
    %111 = arith.addf %105, %110 : vector<32x128xf32>
    %c0_53 = arith.constant 0 : index
    %c0_54 = arith.constant 0 : index
    %112 = vector.load %arg8[%c0_53, %c0_54] : memref<1x128xf32, #tpu.memory_space<vmem>>, vector<1x128xf32>
    %113 = vector.broadcast %112 : vector<1x128xf32> to vector<32x128xf32>
    %114 = arith.addf %111, %113 : vector<32x128xf32>
    %115 = arith.truncf %114 : vector<32x128xf32> to vector<32x128xbf16>
    %c0_55 = arith.constant 0 : index
    %c0_56 = arith.constant 0 : index
    %116 = vector.load %arg9[%c0_55, %c0_56] : memref<32x128xbf16, #tpu.memory_space<vmem>>, vector<32x128xbf16>
    tpu.vector_store %arg9[%c0_55, %c0_56], %115 {strides = array<i32>} : memref<32x128xbf16, #tpu.memory_space<vmem>>, vector<32x128xbf16>,
    %cst_57 = arith.constant dense<0.000000e+00> : vector<128xf32>
    %117 = vector.multi_reduction <add>, %114, %cst_57 [0] : vector<32x128xf32> to vector<128xf32>
    %118 = vector.shape_cast %117 : vector<128xf32> to vector<1x128xf32>
    %119 = arith.mulf %114, %114 : vector<32x128xf32>
    %cst_58 = arith.constant dense<0.000000e+00> : vector<128xf32>
    %120 = vector.multi_reduction <add>, %119, %cst_58 [0] : vector<32x128xf32> to vector<128xf32>
    %121 = vector.shape_cast %120 : vector<128xf32> to vector<1x128xf32>
    %122 = tpu.concatenate %118, %121 in 0 : vector<1x128xf32>, vector<1x128xf32> -> vector<2x128xf32>
    %c0_59 = arith.constant 0 : index
    %c0_60 = arith.constant 0 : index
    %c0_61 = arith.constant 0 : index
    %123 = vector.load %arg10[%c0_59, %c0_60, %c0_61] : memref<1x2x128xf32, #tpu.memory_space<vmem>>, vector<1x2x128xf32>
    %124 = vector.shape_cast %123 : vector<1x2x128xf32> to vector<2x128xf32>
    %125 = vector.shape_cast %122 : vector<2x128xf32> to vector<1x2x128xf32>
    tpu.vector_store %arg10[%c0_59, %c0_60, %c0_61], %125 {strides = array<i32>} : memref<1x2x128xf32, #tpu.memory_space<vmem>>, vector<1x2x128xf32>,
    return
  }
  func.func @transform_0(%arg0: i32, %arg1: i32) -> (i32, i32, i32, i32) {
    %c0_i32 = arith.constant 0 : i32
    %c0_i32_0 = arith.constant 0 : i32
    %c0_i32_1 = arith.constant 0 : i32
    return %arg0, %arg1, %c0_i32, %c0_i32_0 : i32, i32, i32, i32
  }
  func.func @transform_1(%arg0: i32, %arg1: i32) -> (i32, i32, i32, i32) {
    %c4_i32 = arith.constant 4 : i32
    %0 = arith.muli %arg1, %c4_i32 : i32
    %c1_i32 = arith.constant 1 : i32
    %1 = arith.subi %0, %c1_i32 : i32
    %c0_i32 = arith.constant 0 : i32
    %2 = arith.maxsi %1, %c0_i32 : i32
    %c0_i32_0 = arith.constant 0 : i32
    %c0_i32_1 = arith.constant 0 : i32
    %c0_i32_2 = arith.constant 0 : i32
    return %arg0, %2, %c0_i32_0, %c0_i32_1 : i32, i32, i32, i32
  }
  func.func @transform_2(%arg0: i32, %arg1: i32) -> (i32, i32, i32, i32) {
    %c4_i32 = arith.constant 4 : i32
    %0 = arith.muli %arg1, %c4_i32 : i32
    %c4_i32_0 = arith.constant 4 : i32
    %1 = arith.addi %0, %c4_i32_0 : i32
    %c7_i32 = arith.constant 7 : i32
    %2 = arith.minsi %1, %c7_i32 : i32
    %c0_i32 = arith.constant 0 : i32
    %c0_i32_1 = arith.constant 0 : i32
    %c0_i32_2 = arith.constant 0 : i32
    return %arg0, %2, %c0_i32, %c0_i32_1 : i32, i32, i32, i32
  }
  func.func @transform_3(%arg0: i32, %arg1: i32) -> (i32, i32) {
    %c0_i32 = arith.constant 0 : i32
    %c0_i32_0 = arith.constant 0 : i32
    %c0_i32_1 = arith.constant 0 : i32
    return %c0_i32, %c0_i32_0 : i32, i32
  }
  func.func @transform_4(%arg0: i32, %arg1: i32) -> (i32, i32) {
    %c0_i32 = arith.constant 0 : i32
    %c0_i32_0 = arith.constant 0 : i32
    %c0_i32_1 = arith.constant 0 : i32
    return %c0_i32, %c0_i32_0 : i32, i32
  }
  func.func @transform_5(%arg0: i32, %arg1: i32) -> (i32, i32, i32) {
    %c0_i32 = arith.constant 0 : i32
    %c0_i32_0 = arith.constant 0 : i32
    %c0_i32_1 = arith.constant 0 : i32
    %c0_i32_2 = arith.constant 0 : i32
    return %c0_i32, %c0_i32_0, %c0_i32_1 : i32, i32, i32
  }
  func.func @transform_6(%arg0: i32, %arg1: i32) -> (i32, i32) {
    %c0_i32 = arith.constant 0 : i32
    %c0_i32_0 = arith.constant 0 : i32
    %c0_i32_1 = arith.constant 0 : i32
    return %c0_i32, %c0_i32_0 : i32, i32
  }
  func.func @transform_7(%arg0: i32, %arg1: i32) -> (i32, i32) {
    %c2_i32 = arith.constant 2 : i32
    %0 = arith.muli %arg0, %c2_i32 : i32
    %1 = arith.addi %0, %arg1 : i32
    %c0_i32 = arith.constant 0 : i32
    %c0_i32_0 = arith.constant 0 : i32
    return %1, %c0_i32 : i32, i32
  }
  func.func @transform_8(%arg0: i32, %arg1: i32) -> (i32, i32, i32) {
    %c2_i32 = arith.constant 2 : i32
    %0 = arith.muli %arg0, %c2_i32 : i32
    %1 = arith.addi %0, %arg1 : i32
    %c0_i32 = arith.constant 0 : i32
    %c0_i32_0 = arith.constant 0 : i32
    %c0_i32_1 = arith.constant 0 : i32
    return %1, %c0_i32, %c0_i32_0 : i32, i32, i32
  }
}

</mosaic_0001>

<llo_original>
// kernel: down_forward.5
$region0: #{down_forward.5}
  #allocation0 [shape = 'u32[]', space=smem, size = 0x4, offset = 0x4, fixed_abs, tag = 'smem constant byte address 0x4 - core index']
  #allocation1 [shape = 'u32[72,128]{1,0:T(1,128)}', space=vmem, size = 0x9000, scoped, tag = 'internal scratch']
  %s0 = inlined_call_operand.vmem [shape: bf16[128,128], index: 0, kind: input, shape index: {}]
  %s1 = inlined_call_operand.vmem [shape: f32[1,128], index: 1, kind: input, shape index: {}]
  %s2 = inlined_call_operand.vmem [shape: f32[1,128], index: 2, kind: input, shape index: {}]
  %s3 = inlined_call_operand.vmem [shape: f32[128,128], index: 3, kind: output, shape index: {}]
  %s4 = sld [smem:[#allocation0]]
  $region45: #{down_forward.5} parent=0
    _
  %s6 = ssub.s32 1, %s4
  %s7 = scalar_select 0, %s6, %s4
  loop: start=0, step=1, limit=6
  $region2: #{down_forward.5} parent=0 // loop_pre_header
    _
  $region3: #{down_forward.5} parent=0 // loop_header
    %s9 = sphi 0, %s13
    %p10 = scmp.ge.s32.totalorder %s9, 6
    %s19 = sphi 0, %s21
    %s22 = sphi 0, %s19
    %s23 = sphi 0, %s22
    %s39 = sphi 0, %s23
    %s43 = sphi 0, %s43
    %s45 = sphi 0, %s43
    %s46 = sphi 0, %s45
    %s60 = sphi 0, %s46
    %s64 = sphi 0, %s64
    %s66 = sphi 0, %s64
    %s67 = sphi 0, %s66
    %s81 = sphi 0, %s67
    %s87 = sphi 0, %s89
    %s90 = sphi 0, %s87
    %s91 = sphi 0, %s90
    %s107 = sphi 0, %s91
  $region4: #{down_forward.5} parent=0 // loop_header_branch
    %12 = sbr.rel (%p10) target = $region8
  $region5: #{down_forward.5} parent=0 // loop_body
    %s14 = ssub.s32 %s9, 1
    %s15 = ssub.s32 %s9, 2
    %s16 = sadd.s32 %s9, 1
    %s17 = ssub.s32 %s9, %s16
    %p18 = scmp.eq.s32.totalorder %s17, 0
    %s20 = sadd.s32 %s19, 1
    %s21 = scalar_select %p18, %s19, %s20
    %p24 = pneg %p18
    %p25 = scmp.eq.s32.totalorder %s9, 3
    %p26 = por %p24, %p25
    %p27 = scmp.ne.s32.totalorder %s19, %s22
    %p28 = scmp.eq.s32.totalorder %s9, 0
    %p29 = por %p27, %p28
    %p30 = scmp.ne.s32.totalorder %s19, %s22
    %p31 = scmp.eq.s32.totalorder %s14, 3
    %p32 = por %p30, %p31
    %p33 = scmp.ne.s32.totalorder %s22, %s23
    %p34 = scmp.eq.s32.totalorder %s14, 0
    %p35 = por %p33, %p34
    %p36 = scmp.ne.s32.totalorder %s22, %s23
    %p37 = scmp.eq.s32.totalorder %s15, 3
    %p38 = por %p36, %p37
    %p40 = scmp.ne.s32.totalorder %s23, %s39
    %p41 = scmp.eq.s32.totalorder %s15, 0
    %p42 = por %p40, %p41
    %s44 = sadd.s32 %s43, 1
    %p47 = scmp.eq.s32.totalorder %s9, 3
    %p48 = scmp.ne.s32.totalorder %s43, %s45
    %p49 = scmp.eq.s32.totalorder %s9, 0
    %p50 = por %p48, %p49
    %p51 = scmp.ne.s32.totalorder %s43, %s45
    %p52 = scmp.eq.s32.totalorder %s14, 3
    %p53 = por %p51, %p52
    %p54 = scmp.ne.s32.totalorder %s45, %s46
    %p55 = scmp.eq.s32.totalorder %s14, 0
    %p56 = por %p54, %p55
    %p57 = scmp.ne.s32.totalorder %s45, %s46
    %p58 = scmp.eq.s32.totalorder %s15, 3
    %p59 = por %p57, %p58
    %p61 = scmp.ne.s32.totalorder %s46, %s60
    %p62 = scmp.eq.s32.totalorder %s15, 0
    %p63 = por %p61, %p62
    %s65 = sadd.s32 %s64, 1
    %p68 = scmp.eq.s32.totalorder %s9, 3
    %p69 = scmp.ne.s32.totalorder %s64, %s66
    %p70 = scmp.eq.s32.totalorder %s9, 0
    %p71 = por %p69, %p70
    %p72 = scmp.ne.s32.totalorder %s64, %s66
    %p73 = scmp.eq.s32.totalorder %s14, 3
    %p74 = por %p72, %p73
    %p75 = scmp.ne.s32.totalorder %s66, %s67
    %p76 = scmp.eq.s32.totalorder %s14, 0
    %p77 = por %p75, %p76
    %p78 = scmp.ne.s32.totalorder %s66, %s67
    %p79 = scmp.eq.s32.totalorder %s15, 3
    %p80 = por %p78, %p79
    %p82 = scmp.ne.s32.totalorder %s67, %s81
    %p83 = scmp.eq.s32.totalorder %s15, 0
    %p84 = por %p82, %p83
    %s85 = ssub.s32 %s9, %s16
    %p86 = scmp.eq.s32.totalorder %s85, 0
    %s88 = sadd.s32 %s87, 1
    %s89 = scalar_select %p86, %s87, %s88
    %p92 = pneg %p86
    %p93 = scmp.eq.s32.totalorder %s9, 3
    %p94 = por %p92, %p93
    %p95 = scmp.ne.s32.totalorder %s87, %s90
    %p96 = scmp.eq.s32.totalorder %s9, 0
    %p97 = por %p95, %p96
    %p98 = scmp.ne.s32.totalorder %s87, %s90
    %p99 = scmp.eq.s32.totalorder %s14, 3
    %p100 = por %p98, %p99
    %p101 = scmp.ne.s32.totalorder %s90, %s91
    %p102 = scmp.eq.s32.totalorder %s14, 0
    %p103 = por %p101, %p102
    %p104 = scmp.ne.s32.totalorder %s90, %s91
    %p105 = scmp.eq.s32.totalorder %s15, 3
    %p106 = por %p104, %p105
    %p108 = scmp.ne.s32.totalorder %s91, %s107
    %p109 = scmp.eq.s32.totalorder %s15, 0
    %p110 = por %p108, %p109
    %p111 = scmp.le.s32.totalorder 1, %s9
    %p112 = scmp.lt.s32.totalorder %s9, 5
    %p113 = pnand %p111, %p112
    %p114 = pneg %p113
    // Predicated region
    $region9: #{down_forward.5} parent=5 // pred_check
      _
    $region10: #{down_forward.5} parent=5 // pred_check_branch
      %116 = sbr.rel (%p113) target = $region12
    $region11: #{down_forward.5} parent=5 // pred_region
      %s117 = ssub.s32 %s9, 1
      // Predicated region
      $region13: #{down_forward.5} parent=11 // pred_check
        %p118 = pneg %p56
      $region14: #{down_forward.5} parent=11 // pred_check_branch
        %120 = sbr.rel (%p118) target = $region16
      $region15: #{down_forward.5} parent=11 // pred_region
        _
      $region16: #{down_forward.5} parent=11 // pred_fallthru
        _
      // Predicated region
      $region17: #{down_forward.5} parent=11 // pred_check
        %p121 = pneg %p77
      $region18: #{down_forward.5} parent=11 // pred_check_branch
        %123 = sbr.rel (%p121) target = $region20
      $region19: #{down_forward.5} parent=11 // pred_region
        _
      $region20: #{down_forward.5} parent=11 // pred_fallthru
        _
    $region12: #{down_forward.5} parent=5 // pred_fallthru
      _
    %p124 = scmp.lt.s32.totalorder %s9, 4
    // Predicated region
    $region21: #{down_forward.5} parent=5 // pred_check
      %p125 = pneg %p124
    $region22: #{down_forward.5} parent=5 // pred_check_branch
      %127 = sbr.rel (%p125) target = $region24
    $region23: #{down_forward.5} parent=5 // pred_region
      // Predicated region
      $region25: #{down_forward.5} parent=23 // pred_check
        %p128 = pneg %p29
      $region26: #{down_forward.5} parent=23 // pred_check_branch
        %130 = sbr.rel (%p128) target = $region28
      $region27: #{down_forward.5} parent=23 // pred_region
        %s131 = smul.u32 4, %s9
        %p132 = scmp.lt.s32.totalorder %s131, 15
        %s133 = scalar_select %p132, %s131, 15
        %s134 = smul.addr %s133, 4
        %s135 = scalar_lea.vmem %s0, %s134
        %s136 = smul.u32 4, %s9
      $region28: #{down_forward.5} parent=23 // pred_fallthru
        _
    $region24: #{down_forward.5} parent=5 // pred_fallthru
      _
    %p137 = scmp.le.s32.totalorder 1, %s9
    %p138 = scmp.lt.s32.totalorder %s9, 5
    %p139 = pnand %p137, %p138
    %p140 = pneg %p139
    // Predicated region
    $region29: #{down_forward.5} parent=5 // pred_check
      _
    $region30: #{down_forward.5} parent=5 // pred_check_branch
      %142 = sbr.rel (%p139) target = $region32
    $region31: #{down_forward.5} parent=5 // pred_region
      %s143 = ssub.s32 %s9, 1
      %s144 = smul.u32 4, %s14
      %p145 = scmp.lt.s32.totalorder %s144, 15
      %s146 = scalar_select %p145, %s144, 15
      %s147 = smul.addr %s146, 4
      %s148 = scalar_lea.vmem %s0, %s147
      %p149 = pneg %p35
      %p150 = pneg %p32
      %p151 = pneg %p56
      %p152 = pneg %p53
      %p153 = pneg %p77
      %p154 = pneg %p74
      %p155 = pneg %p103
      %p156 = pneg %p100
      %s157 = smul.u32 4, %s14
      %p158 = scmp.lt.s32.totalorder %s157, 15
      %s159 = scalar_select %p158, %s157, 15
      %s160 = smul.addr %s159, 8
      %s161 = scalar_lea.vmem %s3, %s160
      %s162 = smul.u32 4, %s14
      %p163 = scmp.lt.s32.totalorder %s162, 15
      %s164 = scalar_select %p163, %s162, 15
      %s165 = smul.addr %s164, 4
      %s166 = scalar_lea.vmem %s0, %s165
      %s167 = smul.u32 4, %s14
      %s168 = smul.u32 4, %s14
      %p169 = scmp.lt.s32.totalorder %s168, 15
      %s170 = scalar_select %p169, %s168, 15
      %s171 = smul.addr %s170, 8
      %s172 = scalar_lea.vmem %s3, %s171
      %s173 = smul.u32 4, %s14
      %v174 = vld [vmem:[%s166] sm:$0xf]
      %v175 = vld [vmem:[%s166 + $0x4] sm:$0xf]
      %v176 = vld [vmem:[%s166 + $0x8] sm:$0xf]
      %v177 = vld [vmem:[%s166 + $0xc] sm:$0xf]
      %v178 = vunpack.c.l.bf16 %v174
      %v179 = vunpack.c.l.bf16 %v175
      %v180 = vunpack.c.l.bf16 %v176
      %v181 = vunpack.c.l.bf16 %v177
      %v182 = vld [vmem:[%s1] sm:$0x1]
      %v184 = vperm.slane %v182, 0
      %v186 = vmul.f32 %v178, %v184
      %v187 = vmul.f32 %v179, %v184
      %v188 = vmul.f32 %v180, %v184
      %v189 = vmul.f32 %v181, %v184
      %v190 = vld [vmem:[%s2] sm:$0x1]
      %v192 = vperm.slane %v190, 0
      %v194 = vadd.f32 %v186, %v192
      %v195 = vadd.f32 %v187, %v192
      %v196 = vadd.f32 %v188, %v192
      %v197 = vadd.f32 %v189, %v192
      %v198 = vmax.f32 %v194, 0.0
      %v199 = vmax.f32 %v195, 0.0
      %v200 = vmax.f32 %v196, 0.0
      %v201 = vmax.f32 %v197, 0.0
      %202 = vst [vmem:[%s172] sm:$0xff] %v198
      %203 = vst [vmem:[%s172 + $0x8] sm:$0xff] %v199
      %204 = vst [vmem:[%s172 + $0x10] sm:$0xff] %v200
      %205 = vst [vmem:[%s172 + $0x18] sm:$0xff] %v201
      %s206 = smul.u32 4, %s14
      %p207 = scmp.lt.s32.totalorder %s206, 15
      %s208 = scalar_select %p207, %s206, 15
      %s209 = smul.addr %s208, 8
      %s210 = scalar_lea.vmem %s3, %s209
      // Predicated region
      $region33: #{down_forward.5} parent=31 // pred_check
        %p211 = pneg %p100
      $region34: #{down_forward.5} parent=31 // pred_check_branch
        %213 = sbr.rel (%p211) target = $region36
      $region35: #{down_forward.5} parent=31 // pred_region
        %s214 = smul.u32 4, %s14
      $region36: #{down_forward.5} parent=31 // pred_fallthru
        _
    $region32: #{down_forward.5} parent=5 // pred_fallthru
      _
    %p215 = scmp.le.s32.totalorder 2, %s9
    // Predicated region
    $region37: #{down_forward.5} parent=5 // pred_check
      %p216 = pneg %p215
    $region38: #{down_forward.5} parent=5 // pred_check_branch
      %218 = sbr.rel (%p216) target = $region40
    $region39: #{down_forward.5} parent=5 // pred_region
      %s219 = ssub.s32 %s9, 2
      // Predicated region
      $region41: #{down_forward.5} parent=39 // pred_check
        %p220 = pneg %p106
      $region42: #{down_forward.5} parent=39 // pred_check_branch
        %222 = sbr.rel (%p220) target = $region44
      $region43: #{down_forward.5} parent=39 // pred_region
        %s223 = smul.u32 4, %s15
        %p224 = scmp.lt.s32.totalorder %s223, 15
        %s225 = scalar_select %p224, %s223, 15
        %s226 = smul.addr %s225, 8
        %s227 = scalar_lea.vmem %s3, %s226
      $region44: #{down_forward.5} parent=39 // pred_fallthru
        _
    $region40: #{down_forward.5} parent=5 // pred_fallthru
      _
  $region6: #{down_forward.5} parent=0 // loop_footer
    %s13 = sadd.s32 1, %s9
  $region7: #{down_forward.5} parent=0 // loop_footer_branch
    %8 = sbr.rel target = $region3
  $region8: #{down_forward.5} parent=0 // loop_exit
    _

// kernel: down_forward.3
$region0: #{down_forward.3}
  #allocation0 [shape = 'u32[]', space=smem, size = 0x4, offset = 0x4, fixed_abs, tag = 'smem constant byte address 0x4 - core index']
  #allocation1 [shape = 'u32[72,128]{1,0:T(1,128)}', space=vmem, size = 0x9000, scoped, tag = 'internal scratch']
  %s0 = inlined_call_operand.vmem [shape: bf16[2,16,8,256], index: 0, kind: input, shape index: {}, may-alias: {0,1,2}]
  %s1 = inlined_call_operand.vmem [shape: bf16[2,16,8,256], index: 1, kind: input, shape index: {}, may-alias: {0,1,2}]
  %s2 = inlined_call_operand.vmem [shape: bf16[2,16,8,256], index: 2, kind: input, shape index: {}, may-alias: {0,1,2}]
  %s3 = inlined_call_operand.vmem [shape: bf16[9,128,128], index: 3, kind: input, shape index: {}]
  %s4 = inlined_call_operand.vmem [shape: f32[1,128], index: 4, kind: input, shape index: {}]
  %s5 = inlined_call_operand.vmem [shape: bf16[128,128], index: 5, kind: output, shape index: {0}]
  %s6 = inlined_call_operand.vmem [shape: f32[4,2,128], index: 6, kind: output, shape index: {1}]
  %7 = xla_tuple %s5, %s6
  %s8 = sld [smem:[#allocation0]]
  $region61: #{down_forward.3} parent=0
    _
  %s10 = ssub.s32 1, %s8
  %s11 = scalar_select 0, %s10, %s8
  loop: start=0, step=1, limit=6
  $region2: #{down_forward.3} parent=0 // loop_pre_header
    _
  $region3: #{down_forward.3} parent=0 // loop_header
    %s13 = sphi 0, %s17
    %p14 = scmp.ge.s32.totalorder %s13, 6
    %s20 = sphi 0, %s32
    %s21 = sphi 0, %s28
    %s22 = sphi 0, %s20
    %s23 = sphi 0, %s21
    %s24 = sphi 0, %s22
    %s25 = sphi 0, %s23
    %s37 = sphi 0, %s39
    %s40 = sphi 0, %s37
    %s41 = sphi 0, %s40
    %s57 = sphi 0, %s41
    %s73 = sphi 0, %s75
    %s76 = sphi 0, %s73
    %s77 = sphi 0, %s76
    %s93 = sphi 0, %s77
    %s109 = sphi 0, %s111
    %s112 = sphi 0, %s109
    %s113 = sphi 0, %s112
    %s129 = sphi 0, %s113
    %s133 = sphi 0, %s133
    %s135 = sphi 0, %s133
    %s136 = sphi 0, %s135
    %s150 = sphi 0, %s136
    %s154 = sphi 0, %s154
    %s156 = sphi 0, %s154
    %s157 = sphi 0, %s156
    %s171 = sphi 0, %s157
    %s181 = sphi 0, %s183
    %s184 = sphi 0, %s181
    %s185 = sphi 0, %s184
    %s201 = sphi 0, %s185
    %s211 = sphi 0, %s213
    %s214 = sphi 0, %s211
    %s215 = sphi 0, %s214
    %s231 = sphi 0, %s215
  $region4: #{down_forward.3} parent=0 // loop_header_branch
    %16 = sbr.rel (%p14) target = $region8
  $region5: #{down_forward.3} parent=0 // loop_body
    %s18 = ssub.s32 %s13, 1
    %s19 = ssub.s32 %s13, 2
    %s26 = sadd.s32 1, %s21
    %p27 = scmp.ge.s32.totalorder %s26, 2
    %s28 = scalar_select %p27, 0, %s26
    %s29 = sadd.s32 1, %s20
    %s30 = scalar_select %p27, %s29, %s20
    %p31 = scmp.ge.s32.totalorder %s30, 2
    %s32 = scalar_select %p31, 0, %s30
    %s33 = ssub.s32 %s20, %s32
    %s34 = ssub.s32 %s21, %s28
    %s35 = sor.u32 %s33, %s34
    %p36 = scmp.eq.s32.totalorder %s35, 0
    %s38 = sadd.s32 %s37, 1
    %s39 = scalar_select %p36, %s37, %s38
    %p42 = pneg %p36
    %p43 = scmp.eq.s32.totalorder %s13, 3
    %p44 = por %p42, %p43
    %p45 = scmp.ne.s32.totalorder %s37, %s40
    %p46 = scmp.eq.s32.totalorder %s13, 0
    %p47 = por %p45, %p46
    %p48 = scmp.ne.s32.totalorder %s37, %s40
    %p49 = scmp.eq.s32.totalorder %s18, 3
    %p50 = por %p48, %p49
    %p51 = scmp.ne.s32.totalorder %s40, %s41
    %p52 = scmp.eq.s32.totalorder %s18, 0
    %p53 = por %p51, %p52
    %p54 = scmp.ne.s32.totalorder %s40, %s41
    %p55 = scmp.eq.s32.totalorder %s19, 3
    %p56 = por %p54, %p55
    %p58 = scmp.ne.s32.totalorder %s41, %s57
    %p59 = scmp.eq.s32.totalorder %s19, 0
    %p60 = por %p58, %p59
    %s61 = smul.u32 %s21, 4
    %s62 = ssub.s32 %s61, 1
    %p63 = scmp.gt.s32.totalorder %s62, 0
    %s64 = scalar_select %p63, %s62, 0
    %s65 = smul.u32 %s28, 4
    %s66 = ssub.s32 %s65, 1
    %p67 = scmp.gt.s32.totalorder %s66, 0
    %s68 = scalar_select %p67, %s66, 0
    %s69 = ssub.s32 %s20, %s32
    %s70 = ssub.s32 %s64, %s68
    %s71 = sor.u32 %s69, %s70
    %p72 = scmp.eq.s32.totalorder %s71, 0
    %s74 = sadd.s32 %s73, 1
    %s75 = scalar_select %p72, %s73, %s74
    %p78 = pneg %p72
    %p79 = scmp.eq.s32.totalorder %s13, 3
    %p80 = por %p78, %p79
    %p81 = scmp.ne.s32.totalorder %s73, %s76
    %p82 = scmp.eq.s32.totalorder %s13, 0
    %p83 = por %p81, %p82
    %p84 = scmp.ne.s32.totalorder %s73, %s76
    %p85 = scmp.eq.s32.totalorder %s18, 3
    %p86 = por %p84, %p85
    %p87 = scmp.ne.s32.totalorder %s76, %s77
    %p88 = scmp.eq.s32.totalorder %s18, 0
    %p89 = por %p87, %p88
    %p90 = scmp.ne.s32.totalorder %s76, %s77
    %p91 = scmp.eq.s32.totalorder %s19, 3
    %p92 = por %p90, %p91
    %p94 = scmp.ne.s32.totalorder %s77, %s93
    %p95 = scmp.eq.s32.totalorder %s19, 0
    %p96 = por %p94, %p95
    %s97 = smul.u32 %s21, 4
    %s98 = sadd.s32 %s97, 4
    %p99 = scmp.lt.s32.totalorder %s98, 7
    %s100 = scalar_select %p99, %s98, 7
    %s101 = smul.u32 %s28, 4
    %s102 = sadd.s32 %s101, 4
    %p103 = scmp.lt.s32.totalorder %s102, 7
    %s104 = scalar_select %p103, %s102, 7
    %s105 = ssub.s32 %s20, %s32
    %s106 = ssub.s32 %s100, %s104
    %s107 = sor.u32 %s105, %s106
    %p108 = scmp.eq.s32.totalorder %s107, 0
    %s110 = sadd.s32 %s109, 1
    %s111 = scalar_select %p108, %s109, %s110
    %p114 = pneg %p108
    %p115 = scmp.eq.s32.totalorder %s13, 3
    %p116 = por %p114, %p115
    %p117 = scmp.ne.s32.totalorder %s109, %s112
    %p118 = scmp.eq.s32.totalorder %s13, 0
    %p119 = por %p117, %p118
    %p120 = scmp.ne.s32.totalorder %s109, %s112
    %p121 = scmp.eq.s32.totalorder %s18, 3
    %p122 = por %p120, %p121
    %p123 = scmp.ne.s32.totalorder %s112, %s113
    %p124 = scmp.eq.s32.totalorder %s18, 0
    %p125 = por %p123, %p124
    %p126 = scmp.ne.s32.totalorder %s112, %s113
    %p127 = scmp.eq.s32.totalorder %s19, 3
    %p128 = por %p126, %p127
    %p130 = scmp.ne.s32.totalorder %s113, %s129
    %p131 = scmp.eq.s32.totalorder %s19, 0
    %p132 = por %p130, %p131
    %s134 = sadd.s32 %s133, 1
    %p137 = scmp.eq.s32.totalorder %s13, 3
    %p138 = scmp.ne.s32.totalorder %s133, %s135
    %p139 = scmp.eq.s32.totalorder %s13, 0
    %p140 = por %p138, %p139
    %p141 = scmp.ne.s32.totalorder %s133, %s135
    %p142 = scmp.eq.s32.totalorder %s18, 3
    %p143 = por %p141, %p142
    %p144 = scmp.ne.s32.totalorder %s135, %s136
    %p145 = scmp.eq.s32.totalorder %s18, 0
    %p146 = por %p144, %p145
    %p147 = scmp.ne.s32.totalorder %s135, %s136
    %p148 = scmp.eq.s32.totalorder %s19, 3
    %p149 = por %p147, %p148
    %p151 = scmp.ne.s32.totalorder %s136, %s150
    %p152 = scmp.eq.s32.totalorder %s19, 0
    %p153 = por %p151, %p152
    %s155 = sadd.s32 %s154, 1
    %p158 = scmp.eq.s32.totalorder %s13, 3
    %p159 = scmp.ne.s32.totalorder %s154, %s156
    %p160 = scmp.eq.s32.totalorder %s13, 0
    %p161 = por %p159, %p160
    %p162 = scmp.ne.s32.totalorder %s154, %s156
    %p163 = scmp.eq.s32.totalorder %s18, 3
    %p164 = por %p162, %p163
    %p165 = scmp.ne.s32.totalorder %s156, %s157
    %p166 = scmp.eq.s32.totalorder %s18, 0
    %p167 = por %p165, %p166
    %p168 = scmp.ne.s32.totalorder %s156, %s157
    %p169 = scmp.eq.s32.totalorder %s19, 3
    %p170 = por %p168, %p169
    %p172 = scmp.ne.s32.totalorder %s157, %s171
    %p173 = scmp.eq.s32.totalorder %s19, 0
    %p174 = por %p172, %p173
    %s175 = smul.u32 %s20, 2
    %s176 = sadd.s32 %s175, %s21
    %s177 = smul.u32 %s32, 2
    %s178 = sadd.s32 %s177, %s28
    %s179 = ssub.s32 %s176, %s178
    %p180 = scmp.eq.s32.totalorder %s179, 0
    %s182 = sadd.s32 %s181, 1
    %s183 = scalar_select %p180, %s181, %s182
    %p186 = pneg %p180
    %p187 = scmp.eq.s32.totalorder %s13, 3
    %p188 = por %p186, %p187
    %p189 = scmp.ne.s32.totalorder %s181, %s184
    %p190 = scmp.eq.s32.totalorder %s13, 0
    %p191 = por %p189, %p190
    %p192 = scmp.ne.s32.totalorder %s181, %s184
    %p193 = scmp.eq.s32.totalorder %s18, 3
    %p194 = por %p192, %p193
    %p195 = scmp.ne.s32.totalorder %s184, %s185
    %p196 = scmp.eq.s32.totalorder %s18, 0
    %p197 = por %p195, %p196
    %p198 = scmp.ne.s32.totalorder %s184, %s185
    %p199 = scmp.eq.s32.totalorder %s19, 3
    %p200 = por %p198, %p199
    %p202 = scmp.ne.s32.totalorder %s185, %s201
    %p203 = scmp.eq.s32.totalorder %s19, 0
    %p204 = por %p202, %p203
    %s205 = smul.u32 %s20, 2
    %s206 = sadd.s32 %s205, %s21
    %s207 = smul.u32 %s32, 2
    %s208 = sadd.s32 %s207, %s28
    %s209 = ssub.s32 %s206, %s208
    %p210 = scmp.eq.s32.totalorder %s209, 0
    %s212 = sadd.s32 %s211, 1
    %s213 = scalar_select %p210, %s211, %s212
    %p216 = pneg %p210
    %p217 = scmp.eq.s32.totalorder %s13, 3
    %p218 = por %p216, %p217
    %p219 = scmp.ne.s32.totalorder %s211, %s214
    %p220 = scmp.eq.s32.totalorder %s13, 0
    %p221 = por %p219, %p220
    %p222 = scmp.ne.s32.totalorder %s211, %s214
    %p223 = scmp.eq.s32.totalorder %s18, 3
    %p224 = por %p222, %p223
    %p225 = scmp.ne.s32.totalorder %s214, %s215
    %p226 = scmp.eq.s32.totalorder %s18, 0
    %p227 = por %p225, %p226
    %p228 = scmp.ne.s32.totalorder %s214, %s215
    %p229 = scmp.eq.s32.totalorder %s19, 3
    %p230 = por %p228, %p229
    %p232 = scmp.ne.s32.totalorder %s215, %s231
    %p233 = scmp.eq.s32.totalorder %s19, 0
    %p234 = por %p232, %p233
    %p235 = scmp.le.s32.totalorder 1, %s13
    %p236 = scmp.lt.s32.totalorder %s13, 5
    %p237 = pnand %p235, %p236
    %p238 = pneg %p237
    // Predicated region
    $region9: #{down_forward.3} parent=5 // pred_check
      _
    $region10: #{down_forward.3} parent=5 // pred_check_branch
      %240 = sbr.rel (%p237) target = $region12
    $region11: #{down_forward.3} parent=5 // pred_region
      %s241 = ssub.s32 %s13, 1
      // Predicated region
      $region13: #{down_forward.3} parent=11 // pred_check
        %p242 = pneg %p146
      $region14: #{down_forward.3} parent=11 // pred_check_branch
        %244 = sbr.rel (%p242) target = $region16
      $region15: #{down_forward.3} parent=11 // pred_region
        _
      $region16: #{down_forward.3} parent=11 // pred_fallthru
        _
      // Predicated region
      $region17: #{down_forward.3} parent=11 // pred_check
        %p245 = pneg %p167
      $region18: #{down_forward.3} parent=11 // pred_check_branch
        %247 = sbr.rel (%p245) target = $region20
      $region19: #{down_forward.3} parent=11 // pred_region
        _
      $region20: #{down_forward.3} parent=11 // pred_fallthru
        _
    $region12: #{down_forward.3} parent=5 // pred_fallthru
      _
    %p248 = scmp.lt.s32.totalorder %s13, 4
    // Predicated region
    $region21: #{down_forward.3} parent=5 // pred_check
      %p249 = pneg %p248
    $region22: #{down_forward.3} parent=5 // pred_check_branch
      %251 = sbr.rel (%p249) target = $region24
    $region23: #{down_forward.3} parent=5 // pred_region
      // Predicated region
      $region25: #{down_forward.3} parent=23 // pred_check
        %p252 = pneg %p47
      $region26: #{down_forward.3} parent=23 // pred_check_branch
        %254 = sbr.rel (%p252) target = $region28
      $region27: #{down_forward.3} parent=23 // pred_region
        %s255 = smul.u32 8, %s21
        %p256 = scmp.lt.s32.totalorder %s20, 1
        %s257 = scalar_select %p256, %s20, 1
        %p258 = scmp.lt.s32.totalorder %s255, 15
        %s259 = scalar_select %p258, %s255, 15
        %s260 = smul.addr %s259, 2
        %s261 = smul.addr %s257, 32
        %s262 = sadd.s32 %s260, %s261
        %s263 = smul.addr %s262, 4
        %s264 = scalar_lea.vmem %s0, %s263
        %s265 = smul.u32 8, %s21
      $region28: #{down_forward.3} parent=23 // pred_fallthru
        _
      // Predicated region
      $region29: #{down_forward.3} parent=23 // pred_check
        %p266 = pneg %p83
      $region30: #{down_forward.3} parent=23 // pred_check_branch
        %268 = sbr.rel (%p266) target = $region32
      $region31: #{down_forward.3} parent=23 // pred_region
        %s269 = smul.u32 %s21, 4
        %s270 = ssub.s32 %s269, 1
        %p271 = scmp.gt.s32.totalorder %s270, 0
        %s272 = scalar_select %p271, %s270, 0
        %s273 = smul.u32 2, %s272
        %p274 = scmp.lt.s32.totalorder %s20, 1
        %s275 = scalar_select %p274, %s20, 1
        %p276 = scmp.lt.s32.totalorder %s273, 15
        %s277 = scalar_select %p276, %s273, 15
        %s278 = smul.addr %s277, 2
        %s279 = smul.addr %s275, 32
        %s280 = sadd.s32 %s278, %s279
        %s281 = smul.addr %s280, 4
        %s282 = scalar_lea.vmem %s1, %s281
        %s283 = smul.u32 %s21, 4
        %s284 = ssub.s32 %s283, 1
        %p285 = scmp.gt.s32.totalorder %s284, 0
        %s286 = scalar_select %p285, %s284, 0
        %s287 = smul.u32 2, %s286
      $region32: #{down_forward.3} parent=23 // pred_fallthru
        _
      // Predicated region
      $region33: #{down_forward.3} parent=23 // pred_check
        %p288 = pneg %p119
      $region34: #{down_forward.3} parent=23 // pred_check_branch
        %290 = sbr.rel (%p288) target = $region36
      $region35: #{down_forward.3} parent=23 // pred_region
        %s291 = smul.u32 %s21, 4
        %s292 = sadd.s32 %s291, 4
        %p293 = scmp.lt.s32.totalorder %s292, 7
        %s294 = scalar_select %p293, %s292, 7
        %s295 = smul.u32 2, %s294
        %p296 = scmp.lt.s32.totalorder %s20, 1
        %s297 = scalar_select %p296, %s20, 1
        %p298 = scmp.lt.s32.totalorder %s295, 15
        %s299 = scalar_select %p298, %s295, 15
        %s300 = smul.addr %s299, 2
        %s301 = smul.addr %s297, 32
        %s302 = sadd.s32 %s300, %s301
        %s303 = smul.addr %s302, 4
        %s304 = scalar_lea.vmem %s2, %s303
        %s305 = smul.u32 %s21, 4
        %s306 = sadd.s32 %s305, 4
        %p307 = scmp.lt.s32.totalorder %s306, 7
        %s308 = scalar_select %p307, %s306, 7
        %s309 = smul.u32 2, %s308
      $region36: #{down_forward.3} parent=23 // pred_fallthru
        _
    $region24: #{down_forward.3} parent=5 // pred_fallthru
      _
    %p310 = scmp.le.s32.totalorder 1, %s13
    %p311 = scmp.lt.s32.totalorder %s13, 5
    %p312 = pnand %p310, %p311
    %p313 = pneg %p312
    // Predicated region
    $region37: #{down_forward.3} parent=5 // pred_check
      _
    $region38: #{down_forward.3} parent=5 // pred_check_branch
      %315 = sbr.rel (%p312) target = $region40
    $region39: #{down_forward.3} parent=5 // pred_region
      %s316 = ssub.s32 %s13, 1
      %s317 = smul.u32 8, %s23
      %p318 = scmp.lt.s32.totalorder %s22, 1
      %s319 = scalar_select %p318, %s22, 1
      %p320 = scmp.lt.s32.totalorder %s317, 15
      %s321 = scalar_select %p320, %s317, 15
      %s322 = smul.addr %s321, 2
      %s323 = smul.addr %s319, 32
      %s324 = sadd.s32 %s322, %s323
      %s325 = smul.addr %s324, 4
      %s326 = scalar_lea.vmem %s0, %s325
      %p327 = pneg %p53
      %p328 = pneg %p50
      %s329 = smul.u32 %s23, 4
      %s330 = ssub.s32 %s329, 1
      %p331 = scmp.gt.s32.totalorder %s330, 0
      %s332 = scalar_select %p331, %s330, 0
      %s333 = smul.u32 2, %s332
      %p334 = scmp.lt.s32.totalorder %s22, 1
      %s335 = scalar_select %p334, %s22, 1
      %p336 = scmp.lt.s32.totalorder %s333, 15
      %s337 = scalar_select %p336, %s333, 15
      %s338 = smul.addr %s337, 2
      %s339 = smul.addr %s335, 32
      %s340 = sadd.s32 %s338, %s339
      %s341 = smul.addr %s340, 4
      %s342 = scalar_lea.vmem %s1, %s341
      %p343 = pneg %p89
      %p344 = pneg %p86
      %s345 = smul.u32 %s23, 4
      %s346 = sadd.s32 %s345, 4
      %p347 = scmp.lt.s32.totalorder %s346, 7
      %s348 = scalar_select %p347, %s346, 7
      %s349 = smul.u32 2, %s348
      %p350 = scmp.lt.s32.totalorder %s22, 1
      %s351 = scalar_select %p350, %s22, 1
      %p352 = scmp.lt.s32.totalorder %s349, 15
      %s353 = scalar_select %p352, %s349, 15
      %s354 = smul.addr %s353, 2
      %s355 = smul.addr %s351, 32
      %s356 = sadd.s32 %s354, %s355
      %s357 = smul.addr %s356, 4
      %s358 = scalar_lea.vmem %s2, %s357
      %p359 = pneg %p125
      %p360 = pneg %p122
      %p361 = pneg %p146
      %p362 = pneg %p143
      %p363 = pneg %p167
      %p364 = pneg %p164
      %p365 = pneg %p197
      %p366 = pneg %p194
      %s367 = smul.u32 %s22, 2
      %s368 = sadd.s32 %s367, %s23
      %s369 = smul.u32 4, %s368
      %p370 = scmp.lt.s32.totalorder %s369, 15
      %s371 = scalar_select %p370, %s369, 15
      %s372 = smul.addr %s371, 4
      %s373 = scalar_lea.vmem %s5, %s372
      %p374 = pneg %p227
      %p375 = pneg %p224
      %s376 = smul.u32 %s22, 2
      %s377 = sadd.s32 %s376, %s23
      %p378 = scmp.lt.s32.totalorder %s377, 3
      %s379 = scalar_select %p378, %s377, 3
      %s380 = smul.addr %s379, 2
      %s381 = scalar_lea.vmem %s6, %s380
      %s382 = smul.u32 8, %s23
      %p383 = scmp.lt.s32.totalorder %s22, 1
      %s384 = scalar_select %p383, %s22, 1
      %p385 = scmp.lt.s32.totalorder %s382, 15
      %s386 = scalar_select %p385, %s382, 15
      %s387 = smul.addr %s386, 2
      %s388 = smul.addr %s384, 32
      %s389 = sadd.s32 %s387, %s388
      %s390 = smul.addr %s389, 4
      %s391 = scalar_lea.vmem %s0, %s390
      %s392 = smul.u32 8, %s23
      %s393 = smul.u32 %s23, 4
      %s394 = ssub.s32 %s393, 1
      %p395 = scmp.gt.s32.totalorder %s394, 0
      %s396 = scalar_select %p395, %s394, 0
      %s397 = smul.u32 2, %s396
      %p398 = scmp.lt.s32.totalorder %s22, 1
      %s399 = scalar_select %p398, %s22, 1
      %p400 = scmp.lt.s32.totalorder %s397, 15
      %s401 = scalar_select %p400, %s397, 15
      %s402 = smul.addr %s401, 2
      %s403 = smul.addr %s399, 32
      %s404 = sadd.s32 %s402, %s403
      %s405 = smul.addr %s404, 4
      %s406 = scalar_lea.vmem %s1, %s405
      %s407 = smul.u32 %s23, 4
      %s408 = ssub.s32 %s407, 1
      %p409 = scmp.gt.s32.totalorder %s408, 0
      %s410 = scalar_select %p409, %s408, 0
      %s411 = smul.u32 2, %s410
      %s412 = smul.u32 %s23, 4
      %s413 = sadd.s32 %s412, 4
      %p414 = scmp.lt.s32.totalorder %s413, 7
      %s415 = scalar_select %p414, %s413, 7
      %s416 = smul.u32 2, %s415
      %p417 = scmp.lt.s32.totalorder %s22, 1
      %s418 = scalar_select %p417, %s22, 1
      %p419 = scmp.lt.s32.totalorder %s416, 15
      %s420 = scalar_select %p419, %s416, 15
      %s421 = smul.addr %s420, 2
      %s422 = smul.addr %s418, 32
      %s423 = sadd.s32 %s421, %s422
      %s424 = smul.addr %s423, 4
      %s425 = scalar_lea.vmem %s2, %s424
      %s426 = smul.u32 %s23, 4
      %s427 = sadd.s32 %s426, 4
      %p428 = scmp.lt.s32.totalorder %s427, 7
      %s429 = scalar_select %p428, %s427, 7
      %s430 = smul.u32 2, %s429
      %s431 = smul.u32 %s22, 2
      %s432 = sadd.s32 %s431, %s23
      %s433 = smul.u32 4, %s432
      %p434 = scmp.lt.s32.totalorder %s433, 15
      %s435 = scalar_select %p434, %s433, 15
      %s436 = smul.addr %s435, 4
      %s437 = scalar_lea.vmem %s5, %s436
      %s438 = smul.u32 %s22, 2
      %s439 = sadd.s32 %s438, %s23
      %s440 = smul.u32 4, %s439
      %s441 = smul.u32 %s22, 2
      %s442 = sadd.s32 %s441, %s23
      %p443 = scmp.lt.s32.totalorder %s442, 3
      %s444 = scalar_select %p443, %s442, 3
      %s445 = smul.addr %s444, 2
      %s446 = scalar_lea.vmem %s6, %s445
      %s447 = smul.u32 %s22, 2
      %s448 = sadd.s32 %s447, %s23
      %v450 = vld [vmem:[%s391] sm:$0xff]
      %v451 = vld [vmem:[%s391 + $0x8] sm:$0xff]
      %v452 = vld [vmem:[%s391 + $0x10] sm:$0xff]
      %v453 = vld [vmem:[%s391 + $0x18] sm:$0xff]
      %v454 = vld [vmem:[%s391 + $0x20] sm:$0xff]
      %v455 = vld [vmem:[%s391 + $0x28] sm:$0xff]
      %v456 = vld [vmem:[%s391 + $0x30] sm:$0xff]
      %v457 = vld [vmem:[%s391 + $0x38] sm:$0xff]
      %v458 = vunpack.c.l.bf16 %v450
      %v459 = vunpack.c.h.bf16 %v450
      %v460 = vunpack.c.l.bf16 %v451
      %v461 = vunpack.c.h.bf16 %v451
      %v462 = vunpack.c.l.bf16 %v452
      %v463 = vunpack.c.h.bf16 %v452
      %v464 = vunpack.c.l.bf16 %v453
      %v465 = vunpack.c.h.bf16 %v453
      %v466 = vunpack.c.l.bf16 %v454
      %v467 = vunpack.c.h.bf16 %v454
      %v468 = vunpack.c.l.bf16 %v455
      %v469 = vunpack.c.h.bf16 %v455
      %v470 = vunpack.c.l.bf16 %v456
      %v471 = vunpack.c.h.bf16 %v456
      %v472 = vunpack.c.l.bf16 %v457
      %v473 = vunpack.c.h.bf16 %v457
      %v474 = vmax.f32 %v458, %v460
      %v475 = vmax.f32 %v459, %v461
      %v476 = vmax.f32 %v462, %v464
      %v477 = vmax.f32 %v463, %v465
      %v478 = vmax.f32 %v466, %v468
      %v479 = vmax.f32 %v467, %v469
      %v480 = vmax.f32 %v470, %v472
      %v481 = vmax.f32 %v471, %v473
      %v482 = vmax.f32 %v474, %v475
      %v483 = vmax.f32 %v476, %v477
      %v484 = vmax.f32 %v478, %v479
      %v485 = vmax.f32 %v480, %v481
      %v486 = vpack.c.bf16 %v482, %v482
      %v487 = vpack.c.bf16 %v483, %v483
      %v488 = vpack.c.bf16 %v484, %v484
      %v489 = vpack.c.bf16 %v485, %v485
      %v490 = vld [vmem:[%s406] sm:$0xff]
      %v491 = vld [vmem:[%s406 + $0x8] sm:$0xff]
      %v492 = vunpack.c.l.bf16 %v490
      %v493 = vunpack.c.h.bf16 %v490
      %v494 = vunpack.c.l.bf16 %v491
      %v495 = vunpack.c.h.bf16 %v491
      %v496 = vmax.f32 %v492, %v494
      %v497 = vmax.f32 %v493, %v495
      %v498 = vmax.f32 %v496, %v497
      %v499 = vpack.c.bf16 %v498, %v498
      %v500 = vld [vmem:[%s425] sm:$0xff]
      %v501 = vld [vmem:[%s425 + $0x8] sm:$0xff]
      %v502 = vunpack.c.l.bf16 %v500
      %v503 = vunpack.c.h.bf16 %v500
      %v504 = vunpack.c.l.bf16 %v501
      %v505 = vunpack.c.h.bf16 %v501
      %v506 = vmax.f32 %v502, %v504
      %v507 = vmax.f32 %v503, %v505
      %v508 = vmax.f32 %v506, %v507
      %v509 = vpack.c.bf16 %v508, %v508
      %p510 = scmp.gt.s32.totalorder %s23, 0
      %s511 = scalar_select %p510, 1, 0
      %v512 = vstv %s511
      %vm513 = vcmp.eq.s32.totalorder %v512, 1
      %v514 = vsel %vm513, %v499, 0
      %p515 = scmp.lt.s32.totalorder %s23, 1
      %s516 = scalar_select %p515, 1, 0
      %v517 = vstv %s516
      %vm518 = vcmp.eq.s32.totalorder %v517, 1
      %v519 = vsel %vm518, %v509, 0
      %v520 = vlaneseq
      %v521 = vshrl.u32 %v520, 7
      %vm522 = vcmp.gt.s32.totalorder %v521, 0
      %v523 = vsel %vm522, 1.0, 0.0
      %v524 = vpack.c.bf16 %v523, %v523
      %vm525 = vcmp.lt.s32.totalorder %v521, 7
      %v526 = vsel %vm525, 1.0, 0.0
      %v527 = vpack.c.bf16 %v526, %v526
      %v528 = vunpack.c.l.bf16 0
      %v529 = vunpack.c.l.bf16 %v514
      %v530 = vunpack.c.l.bf16 %v486
      %v531 = vunpack.c.l.bf16 %v487
      %v532 = vunpack.c.l.bf16 %v488
      %v533 = vunpack.c.l.bf16 %v524
      %vm535 = vcmask 1046528
      %v536 = vrot.slane %v533, 1
      %v537 = vsel %vm535, %v536, %v536
      %v540 = vmul.f32 %v528, %v536
      %v541 = vmul.f32 %v529, %v537
      %v542 = vmul.f32 %v530, %v537
      %v543 = vmul.f32 %v531, %v537
      %v544 = vmul.f32 %v532, %v536
      %v545 = vpack.c.bf16 %v541, %v540
      %v546 = vpack.c.bf16 %v543, %v542
      %v547 = vpack.c.bf16 %v544, %v544
      %v548 = vld [vmem:[%s3] sm:$0xf]
      %v549 = vld [vmem:[%s3 + $0x4] sm:$0xf]
      %v550 = vld [vmem:[%s3 + $0x8] sm:$0xf]
      %v551 = vld [vmem:[%s3 + $0xc] sm:$0xf]
      %v552 = vld [vmem:[%s3 + $0x10] sm:$0xf]
      %v553 = vld [vmem:[%s3 + $0x14] sm:$0xf]
      %v554 = vld [vmem:[%s3 + $0x18] sm:$0xf]
      %v555 = vld [vmem:[%s3 + $0x1c] sm:$0xf]
      %v556 = vld [vmem:[%s3 + $0x20] sm:$0xf]
      %v557 = vld [vmem:[%s3 + $0x24] sm:$0xf]
      %v558 = vld [vmem:[%s3 + $0x28] sm:$0xf]
      %v559 = vld [vmem:[%s3 + $0x2c] sm:$0xf]
      %v560 = vld [vmem:[%s3 + $0x30] sm:$0xf]
      %v561 = vld [vmem:[%s3 + $0x34] sm:$0xf]
      %v562 = vld [vmem:[%s3 + $0x38] sm:$0xf]
      %v563 = vld [vmem:[%s3 + $0x3c] sm:$0xf]
      %s564 = scalar_lea.vmem %s3, 64
      %v565 = vld [vmem:[%s564] sm:$0xf]
      %v566 = vld [vmem:[%s564 + $0x4] sm:$0xf]
      %v567 = vld [vmem:[%s564 + $0x8] sm:$0xf]
      %v568 = vld [vmem:[%s564 + $0xc] sm:$0xf]
      %v569 = vld [vmem:[%s564 + $0x10] sm:$0xf]
      %v570 = vld [vmem:[%s564 + $0x14] sm:$0xf]
      %v571 = vld [vmem:[%s564 + $0x18] sm:$0xf]
      %v572 = vld [vmem:[%s564 + $0x1c] sm:$0xf]
      %v573 = vld [vmem:[%s564 + $0x20] sm:$0xf]
      %v574 = vld [vmem:[%s564 + $0x24] sm:$0xf]
      %v575 = vld [vmem:[%s564 + $0x28] sm:$0xf]
      %v576 = vld [vmem:[%s564 + $0x2c] sm:$0xf]
      %v577 = vld [vmem:[%s564 + $0x30] sm:$0xf]
      %v578 = vld [vmem:[%s564 + $0x34] sm:$0xf]
      %v579 = vld [vmem:[%s564 + $0x38] sm:$0xf]
      %v580 = vld [vmem:[%s564 + $0x3c] sm:$0xf]
      %v585 = vunpack.c.l.b16 %v514
      %v586 = vunpack.c.l.b16 %v486
      %v587 = vunpack.c.l.b16 %v487
      %v588 = vunpack.c.l.b16 %v488
      %v589 = vpack.c.b16 %v586, %v585
      %v590 = vpack.c.b16 %v588, %v587
      %v609 = vunpack.c.l.b16 %v565
      %v610 = vunpack.c.l.b16 %v566
      %v611 = vunpack.c.l.b16 %v567
      %v612 = vunpack.c.l.b16 %v568
      %v613 = vunpack.c.l.b16 %v569
      %v614 = vunpack.c.l.b16 %v570
      %v615 = vunpack.c.l.b16 %v571
      %v616 = vunpack.c.l.b16 %v572
      %v617 = vunpack.c.l.b16 %v573
      %v618 = vunpack.c.l.b16 %v574
      %v619 = vunpack.c.l.b16 %v575
      %v620 = vunpack.c.l.b16 %v576
      %v621 = vunpack.c.l.b16 %v577
      %v622 = vunpack.c.l.b16 %v578
      %v623 = vunpack.c.l.b16 %v579
      %v624 = vunpack.c.l.b16 %v580
      %v625 = vpack.c.b16 %v610, %v609
      %v626 = vpack.c.b16 %v612, %v611
      %v627 = vpack.c.b16 %v614, %v613
      %v628 = vpack.c.b16 %v616, %v615
      %v629 = vpack.c.b16 %v618, %v617
      %v630 = vpack.c.b16 %v620, %v619
      %v631 = vpack.c.b16 %v622, %v621
      %v632 = vpack.c.b16 %v624, %v623
      %641 = vmatpush.bf16.msra.mxu0 %v632
      %642 = vmatpush.bf16.msra.mxu0 %v631
      %643 = vmatpush.bf16.msra.mxu0 %v630
      %644 = vmatpush.bf16.msra.mxu0 %v629
      %645 = vmatpush.bf16.msra.mxu0 %v628
      %646 = vmatpush.bf16.msra.mxu0 %v627
      %647 = vmatpush.bf16.msra.mxu0 %v626
      %648 = vmatpush.bf16.msra.mxu0 %v625
      %649 = vmatmul.bf16.gmra.mxu0 %v589
      %v650 = vpop.f32.mrf.mxu0
      %v651 = vadd.f32 0.0, %v650
      %v652 = vpop.f32.mrf.mxu0
      %v653 = vadd.f32 0.0, %v652
      %654 = vmatmul.bf16.gmra.mxu0 %v590
      %v655 = vpop.f32.mrf.mxu0
      %v656 = vadd.f32 0.0, %v655
      %v657 = vpop.f32.mrf.mxu0
      %v658 = vadd.f32 0.0, %v657
      %659 = vdwg.mxu0
      %vm660 = vsmask.f32 4352
      %v662 = vshrl.u32 %v545, 16
      %v664 = vrot.slane %v662, 3
      %v665 = vshll.u32 %v545, 16
      %v667 = vrot.slane %v665, 4
      %v668 = vor.u32 %v664, %v667
      %v670 = vshrl.u32 %v546, 16
      %v672 = vrot.slane %v670, 3
      %v673 = vshll.u32 %v546, 16
      %v675 = vrot.slane %v673, 4
      %v676 = vor.u32 %v672, %v675
      %v677 = vsel %vm660, %v668, %v676
      %v679 = vshrl.u32 %v547, 16
      %v681 = vrot.slane %v679, 3
      %v682 = vshll.u32 %v547, 16
      %v684 = vrot.slane %v682, 4
      %v685 = vor.u32 %v681, %v684
      %v686 = vsel %vm660, %v676, %v685
      %v705 = vunpack.c.l.b16 %v548
      %v706 = vunpack.c.l.b16 %v549
      %v707 = vunpack.c.l.b16 %v550
      %v708 = vunpack.c.l.b16 %v551
      %v709 = vunpack.c.l.b16 %v552
      %v710 = vunpack.c.l.b16 %v553
      %v711 = vunpack.c.l.b16 %v554
      %v712 = vunpack.c.l.b16 %v555
      %v713 = vunpack.c.l.b16 %v556
      %v714 = vunpack.c.l.b16 %v557
      %v715 = vunpack.c.l.b16 %v558
      %v716 = vunpack.c.l.b16 %v559
      %v717 = vunpack.c.l.b16 %v560
      %v718 = vunpack.c.l.b16 %v561
      %v719 = vunpack.c.l.b16 %v562
      %v720 = vunpack.c.l.b16 %v563
      %v721 = vpack.c.b16 %v706, %v705
      %v722 = vpack.c.b16 %v708, %v707
      %v723 = vpack.c.b16 %v710, %v709
      %v724 = vpack.c.b16 %v712, %v711
      %v725 = vpack.c.b16 %v714, %v713
      %v726 = vpack.c.b16 %v716, %v715
      %v727 = vpack.c.b16 %v718, %v717
      %v728 = vpack.c.b16 %v720, %v719
      %737 = vmatpush.bf16.msra.mxu0 %v728
      %738 = vmatpush.bf16.msra.mxu0 %v727
      %739 = vmatpush.bf16.msra.mxu0 %v726
      %740 = vmatpush.bf16.msra.mxu0 %v725
      %741 = vmatpush.bf16.msra.mxu0 %v724
      %742 = vmatpush.bf16.msra.mxu0 %v723
      %743 = vmatpush.bf16.msra.mxu0 %v722
      %744 = vmatpush.bf16.msra.mxu0 %v721
      %745 = vmatmul.bf16.gmra.mxu0 %v677
      %v746 = vpop.f32.mrf.mxu0
      %v747 = vadd.f32 %v651, %v746
      %v748 = vpop.f32.mrf.mxu0
      %v749 = vadd.f32 %v653, %v748
      %750 = vmatmul.bf16.gmra.mxu0 %v686
      %v751 = vpop.f32.mrf.mxu0
      %v752 = vadd.f32 %v656, %v751
      %v753 = vpop.f32.mrf.mxu0
      %v754 = vadd.f32 %v658, %v753
      %755 = vdwg.mxu0
      %v756 = vunpack.c.l.bf16 %v489
      %v757 = vunpack.c.l.bf16 %v527
      %vm759 = vcmask 1040384
      %v760 = vrot.slane %v757, 7
      %v761 = vsel %vm759, %v760, %v760
      %v764 = vmul.f32 %v529, %v760
      %v765 = vmul.f32 %v530, %v761
      %v766 = vmul.f32 %v531, %v761
      %v767 = vmul.f32 %v532, %v761
      %v768 = vmul.f32 %v756, %v760
      %v769 = vpack.c.bf16 %v765, %v764
      %v770 = vpack.c.bf16 %v767, %v766
      %v771 = vpack.c.bf16 %v768, %v768
      %s772 = scalar_lea.vmem %s3, 128
      %v773 = vld [vmem:[%s772] sm:$0xf]
      %v774 = vld [vmem:[%s772 + $0x4] sm:$0xf]
      %v775 = vld [vmem:[%s772 + $0x8] sm:$0xf]
      %v776 = vld [vmem:[%s772 + $0xc] sm:$0xf]
      %v777 = vld [vmem:[%s772 + $0x10] sm:$0xf]
      %v778 = vld [vmem:[%s772 + $0x14] sm:$0xf]
      %v779 = vld [vmem:[%s772 + $0x18] sm:$0xf]
      %v780 = vld [vmem:[%s772 + $0x1c] sm:$0xf]
      %v781 = vld [vmem:[%s772 + $0x20] sm:$0xf]
      %v782 = vld [vmem:[%s772 + $0x24] sm:$0xf]
      %v783 = vld [vmem:[%s772 + $0x28] sm:$0xf]
      %v784 = vld [vmem:[%s772 + $0x2c] sm:$0xf]
      %v785 = vld [vmem:[%s772 + $0x30] sm:$0xf]
      %v786 = vld [vmem:[%s772 + $0x34] sm:$0xf]
      %v787 = vld [vmem:[%s772 + $0x38] sm:$0xf]
      %v788 = vld [vmem:[%s772 + $0x3c] sm:$0xf]
      %vm789 = vsmask.f32 7424
      %v791 = vshrl.u32 %v769, 16
      %v793 = vshll.u32 %v769, 16
      %v795 = vrot.slane %v793, 1
      %v796 = vor.u32 %v791, %v795
      %v798 = vshll.u32 %v770, 16
      %v800 = vrot.slane %v798, 1
      %v801 = vsel %vm789, %v796, %v800
      %v802 = vshrl.u32 %v770, 16
      %v804 = vor.u32 %v802, %v800
      %v806 = vshll.u32 %v771, 16
      %v808 = vrot.slane %v806, 1
      %v809 = vsel %vm789, %v804, %v808
      %v828 = vunpack.c.l.b16 %v773
      %v829 = vunpack.c.l.b16 %v774
      %v830 = vunpack.c.l.b16 %v775
      %v831 = vunpack.c.l.b16 %v776
      %v832 = vunpack.c.l.b16 %v777
      %v833 = vunpack.c.l.b16 %v778
      %v834 = vunpack.c.l.b16 %v779
      %v835 = vunpack.c.l.b16 %v780
      %v836 = vunpack.c.l.b16 %v781
      %v837 = vunpack.c.l.b16 %v782
      %v838 = vunpack.c.l.b16 %v783
      %v839 = vunpack.c.l.b16 %v784
      %v840 = vunpack.c.l.b16 %v785
      %v841 = vunpack.c.l.b16 %v786
      %v842 = vunpack.c.l.b16 %v787
      %v843 = vunpack.c.l.b16 %v788
      %v844 = vpack.c.b16 %v829, %v828
      %v845 = vpack.c.b16 %v831, %v830
      %v846 = vpack.c.b16 %v833, %v832
      %v847 = vpack.c.b16 %v835, %v834
      %v848 = vpack.c.b16 %v837, %v836
      %v849 = vpack.c.b16 %v839, %v838
      %v850 = vpack.c.b16 %v841, %v840
      %v851 = vpack.c.b16 %v843, %v842
      %860 = vmatpush.bf16.msra.mxu0 %v851
      %861 = vmatpush.bf16.msra.mxu0 %v850
      %862 = vmatpush.bf16.msra.mxu0 %v849
      %863 = vmatpush.bf16.msra.mxu0 %v848
      %864 = vmatpush.bf16.msra.mxu0 %v847
      %865 = vmatpush.bf16.msra.mxu0 %v846
      %866 = vmatpush.bf16.msra.mxu0 %v845
      %867 = vmatpush.bf16.msra.mxu0 %v844
      %868 = vmatmul.bf16.gmra.mxu0 %v801
      %v869 = vpop.f32.mrf.mxu0
      %v870 = vadd.f32 0.0, %v869
      %v871 = vpop.f32.mrf.mxu0
      %v872 = vadd.f32 0.0, %v871
      %873 = vmatmul.bf16.gmra.mxu0 %v809
      %v874 = vpop.f32.mrf.mxu0
      %v875 = vadd.f32 0.0, %v874
      %v876 = vpop.f32.mrf.mxu0
      %v877 = vadd.f32 0.0, %v876
      %878 = vdwg.mxu0
      %v879 = vadd.f32 %v747, %v870
      %v880 = vadd.f32 %v749, %v872
      %v881 = vadd.f32 %v752, %v875
      %v882 = vadd.f32 %v754, %v877
      %v883 = vmul.f32 %v529, %v536
      %v884 = vmul.f32 %v532, %v537
      %v885 = vmul.f32 %v756, %v536
      %v886 = vpack.c.bf16 %v542, %v883
      %v887 = vpack.c.bf16 %v884, %v543
      %v888 = vpack.c.bf16 %v885, %v885
      %s889 = scalar_lea.vmem %s3, 192
      %v890 = vld [vmem:[%s889] sm:$0xf]
      %v891 = vld [vmem:[%s889 + $0x4] sm:$0xf]
      %v892 = vld [vmem:[%s889 + $0x8] sm:$0xf]
      %v893 = vld [vmem:[%s889 + $0xc] sm:$0xf]
      %v894 = vld [vmem:[%s889 + $0x10] sm:$0xf]
      %v895 = vld [vmem:[%s889 + $0x14] sm:$0xf]
      %v896 = vld [vmem:[%s889 + $0x18] sm:$0xf]
      %v897 = vld [vmem:[%s889 + $0x1c] sm:$0xf]
      %v898 = vld [vmem:[%s889 + $0x20] sm:$0xf]
      %v899 = vld [vmem:[%s889 + $0x24] sm:$0xf]
      %v900 = vld [vmem:[%s889 + $0x28] sm:$0xf]
      %v901 = vld [vmem:[%s889 + $0x2c] sm:$0xf]
      %v902 = vld [vmem:[%s889 + $0x30] sm:$0xf]
      %v903 = vld [vmem:[%s889 + $0x34] sm:$0xf]
      %v904 = vld [vmem:[%s889 + $0x38] sm:$0xf]
      %v905 = vld [vmem:[%s889 + $0x3c] sm:$0xf]
      %v907 = vshrl.u32 %v886, 16
      %v909 = vrot.slane %v907, 3
      %v910 = vshll.u32 %v886, 16
      %v912 = vrot.slane %v910, 4
      %v913 = vor.u32 %v909, %v912
      %v915 = vshrl.u32 %v887, 16
      %v917 = vrot.slane %v915, 3
      %v918 = vshll.u32 %v887, 16
      %v920 = vrot.slane %v918, 4
      %v921 = vor.u32 %v917, %v920
      %v922 = vsel %vm660, %v913, %v921
      %v924 = vshrl.u32 %v888, 16
      %v926 = vrot.slane %v924, 3
      %v927 = vshll.u32 %v888, 16
      %v929 = vrot.slane %v927, 4
      %v930 = vor.u32 %v926, %v929
      %v931 = vsel %vm660, %v921, %v930
      %v950 = vunpack.c.l.b16 %v890
      %v951 = vunpack.c.l.b16 %v891
      %v952 = vunpack.c.l.b16 %v892
      %v953 = vunpack.c.l.b16 %v893
      %v954 = vunpack.c.l.b16 %v894
      %v955 = vunpack.c.l.b16 %v895
      %v956 = vunpack.c.l.b16 %v896
      %v957 = vunpack.c.l.b16 %v897
      %v958 = vunpack.c.l.b16 %v898
      %v959 = vunpack.c.l.b16 %v899
      %v960 = vunpack.c.l.b16 %v900
      %v961 = vunpack.c.l.b16 %v901
      %v962 = vunpack.c.l.b16 %v902
      %v963 = vunpack.c.l.b16 %v903
      %v964 = vunpack.c.l.b16 %v904
      %v965 = vunpack.c.l.b16 %v905
      %v966 = vpack.c.b16 %v951, %v950
      %v967 = vpack.c.b16 %v953, %v952
      %v968 = vpack.c.b16 %v955, %v954
      %v969 = vpack.c.b16 %v957, %v956
      %v970 = vpack.c.b16 %v959, %v958
      %v971 = vpack.c.b16 %v961, %v960
      %v972 = vpack.c.b16 %v963, %v962
      %v973 = vpack.c.b16 %v965, %v964
      %982 = vmatpush.bf16.msra.mxu0 %v973
      %983 = vmatpush.bf16.msra.mxu0 %v972
      %984 = vmatpush.bf16.msra.mxu0 %v971
      %985 = vmatpush.bf16.msra.mxu0 %v970
      %986 = vmatpush.bf16.msra.mxu0 %v969
      %987 = vmatpush.bf16.msra.mxu0 %v968
      %988 = vmatpush.bf16.msra.mxu0 %v967
      %989 = vmatpush.bf16.msra.mxu0 %v966
      %990 = vmatmul.bf16.gmra.mxu0 %v922
      %v991 = vpop.f32.mrf.mxu0
      %v992 = vadd.f32 0.0, %v991
      %v993 = vpop.f32.mrf.mxu0
      %v994 = vadd.f32 0.0, %v993
      %995 = vmatmul.bf16.gmra.mxu0 %v931
      %v996 = vpop.f32.mrf.mxu0
      %v997 = vadd.f32 0.0, %v996
      %v998 = vpop.f32.mrf.mxu0
      %v999 = vadd.f32 0.0, %v998
      %1000 = vdwg.mxu0
      %v1001 = vadd.f32 %v879, %v992
      %v1002 = vadd.f32 %v880, %v994
      %v1003 = vadd.f32 %v881, %v997
      %v1004 = vadd.f32 %v882, %v999
      %s1005 = scalar_lea.vmem %s3, 256
      %v1006 = vld [vmem:[%s1005] sm:$0xf]
      %v1007 = vld [vmem:[%s1005 + $0x4] sm:$0xf]
      %v1008 = vld [vmem:[%s1005 + $0x8] sm:$0xf]
      %v1009 = vld [vmem:[%s1005 + $0xc] sm:$0xf]
      %v1010 = vld [vmem:[%s1005 + $0x10] sm:$0xf]
      %v1011 = vld [vmem:[%s1005 + $0x14] sm:$0xf]
      %v1012 = vld [vmem:[%s1005 + $0x18] sm:$0xf]
      %v1013 = vld [vmem:[%s1005 + $0x1c] sm:$0xf]
      %v1014 = vld [vmem:[%s1005 + $0x20] sm:$0xf]
      %v1015 = vld [vmem:[%s1005 + $0x24] sm:$0xf]
      %v1016 = vld [vmem:[%s1005 + $0x28] sm:$0xf]
      %v1017 = vld [vmem:[%s1005 + $0x2c] sm:$0xf]
      %v1018 = vld [vmem:[%s1005 + $0x30] sm:$0xf]
      %v1019 = vld [vmem:[%s1005 + $0x34] sm:$0xf]
      %v1020 = vld [vmem:[%s1005 + $0x38] sm:$0xf]
      %v1021 = vld [vmem:[%s1005 + $0x3c] sm:$0xf]
      %v1023 = vunpack.c.l.b16 %v489
      %v1024 = vpack.c.b16 %v587, %v586
      %v1025 = vpack.c.b16 %v1023, %v588
      %v1044 = vunpack.c.l.b16 %v1006
      %v1045 = vunpack.c.l.b16 %v1007
      %v1046 = vunpack.c.l.b16 %v1008
      %v1047 = vunpack.c.l.b16 %v1009
      %v1048 = vunpack.c.l.b16 %v1010
      %v1049 = vunpack.c.l.b16 %v1011
      %v1050 = vunpack.c.l.b16 %v1012
      %v1051 = vunpack.c.l.b16 %v1013
      %v1052 = vunpack.c.l.b16 %v1014
      %v1053 = vunpack.c.l.b16 %v1015
      %v1054 = vunpack.c.l.b16 %v1016
      %v1055 = vunpack.c.l.b16 %v1017
      %v1056 = vunpack.c.l.b16 %v1018
      %v1057 = vunpack.c.l.b16 %v1019
      %v1058 = vunpack.c.l.b16 %v1020
      %v1059 = vunpack.c.l.b16 %v1021
      %v1060 = vpack.c.b16 %v1045, %v1044
      %v1061 = vpack.c.b16 %v1047, %v1046
      %v1062 = vpack.c.b16 %v1049, %v1048
      %v1063 = vpack.c.b16 %v1051, %v1050
      %v1064 = vpack.c.b16 %v1053, %v1052
      %v1065 = vpack.c.b16 %v1055, %v1054
      %v1066 = vpack.c.b16 %v1057, %v1056
      %v1067 = vpack.c.b16 %v1059, %v1058
      %1076 = vmatpush.bf16.msra.mxu0 %v1067
      %1077 = vmatpush.bf16.msra.mxu0 %v1066
      %1078 = vmatpush.bf16.msra.mxu0 %v1065
      %1079 = vmatpush.bf16.msra.mxu0 %v1064
      %1080 = vmatpush.bf16.msra.mxu0 %v1063
      %1081 = vmatpush.bf16.msra.mxu0 %v1062
      %1082 = vmatpush.bf16.msra.mxu0 %v1061
      %1083 = vmatpush.bf16.msra.mxu0 %v1060
      %1084 = vmatmul.bf16.gmra.mxu0 %v1024
      %v1085 = vpop.f32.mrf.mxu0
      %v1086 = vadd.f32 0.0, %v1085
      %v1087 = vpop.f32.mrf.mxu0
      %v1088 = vadd.f32 0.0, %v1087
      %1089 = vmatmul.bf16.gmra.mxu0 %v1025
      %v1090 = vpop.f32.mrf.mxu0
      %v1091 = vadd.f32 0.0, %v1090
      %v1092 = vpop.f32.mrf.mxu0
      %v1093 = vadd.f32 0.0, %v1092
      %1094 = vdwg.mxu0
      %v1095 = vadd.f32 %v1001, %v1086
      %v1096 = vadd.f32 %v1002, %v1088
      %v1097 = vadd.f32 %v1003, %v1091
      %v1098 = vadd.f32 %v1004, %v1093
      %v1099 = vunpack.c.l.bf16 %v519
      %v1100 = vmul.f32 %v530, %v760
      %v1101 = vmul.f32 %v756, %v761
      %v1102 = vmul.f32 %v1099, %v760
      %v1103 = vpack.c.bf16 %v766, %v1100
      %v1104 = vpack.c.bf16 %v1101, %v767
      %v1105 = vpack.c.bf16 %v1102, %v1102
      %s1106 = scalar_lea.vmem %s3, 320
      %v1107 = vld [vmem:[%s1106] sm:$0xf]
      %v1108 = vld [vmem:[%s1106 + $0x4] sm:$0xf]
      %v1109 = vld [vmem:[%s1106 + $0x8] sm:$0xf]
      %v1110 = vld [vmem:[%s1106 + $0xc] sm:$0xf]
      %v1111 = vld [vmem:[%s1106 + $0x10] sm:$0xf]
      %v1112 = vld [vmem:[%s1106 + $0x14] sm:$0xf]
      %v1113 = vld [vmem:[%s1106 + $0x18] sm:$0xf]
      %v1114 = vld [vmem:[%s1106 + $0x1c] sm:$0xf]
      %v1115 = vld [vmem:[%s1106 + $0x20] sm:$0xf]
      %v1116 = vld [vmem:[%s1106 + $0x24] sm:$0xf]
      %v1117 = vld [vmem:[%s1106 + $0x28] sm:$0xf]
      %v1118 = vld [vmem:[%s1106 + $0x2c] sm:$0xf]
      %v1119 = vld [vmem:[%s1106 + $0x30] sm:$0xf]
      %v1120 = vld [vmem:[%s1106 + $0x34] sm:$0xf]
      %v1121 = vld [vmem:[%s1106 + $0x38] sm:$0xf]
      %v1122 = vld [vmem:[%s1106 + $0x3c] sm:$0xf]
      %v1124 = vshrl.u32 %v1103, 16
      %v1126 = vshll.u32 %v1103, 16
      %v1128 = vrot.slane %v1126, 1
      %v1129 = vor.u32 %v1124, %v1128
      %v1131 = vshll.u32 %v1104, 16
      %v1133 = vrot.slane %v1131, 1
      %v1134 = vsel %vm789, %v1129, %v1133
      %v1135 = vshrl.u32 %v1104, 16
      %v1137 = vor.u32 %v1135, %v1133
      %v1139 = vshll.u32 %v1105, 16
      %v1141 = vrot.slane %v1139, 1
      %v1142 = vsel %vm789, %v1137, %v1141
      %v1161 = vunpack.c.l.b16 %v1107
      %v1162 = vunpack.c.l.b16 %v1108
      %v1163 = vunpack.c.l.b16 %v1109
      %v1164 = vunpack.c.l.b16 %v1110
      %v1165 = vunpack.c.l.b16 %v1111
      %v1166 = vunpack.c.l.b16 %v1112
      %v1167 = vunpack.c.l.b16 %v1113
      %v1168 = vunpack.c.l.b16 %v1114
      %v1169 = vunpack.c.l.b16 %v1115
      %v1170 = vunpack.c.l.b16 %v1116
      %v1171 = vunpack.c.l.b16 %v1117
      %v1172 = vunpack.c.l.b16 %v1118
      %v1173 = vunpack.c.l.b16 %v1119
      %v1174 = vunpack.c.l.b16 %v1120
      %v1175 = vunpack.c.l.b16 %v1121
      %v1176 = vunpack.c.l.b16 %v1122
      %v1177 = vpack.c.b16 %v1162, %v1161
      %v1178 = vpack.c.b16 %v1164, %v1163
      %v1179 = vpack.c.b16 %v1166, %v1165
      %v1180 = vpack.c.b16 %v1168, %v1167
      %v1181 = vpack.c.b16 %v1170, %v1169
      %v1182 = vpack.c.b16 %v1172, %v1171
      %v1183 = vpack.c.b16 %v1174, %v1173
      %v1184 = vpack.c.b16 %v1176, %v1175
      %1193 = vmatpush.bf16.msra.mxu0 %v1184
      %1194 = vmatpush.bf16.msra.mxu0 %v1183
      %1195 = vmatpush.bf16.msra.mxu0 %v1182
      %1196 = vmatpush.bf16.msra.mxu0 %v1181
      %1197 = vmatpush.bf16.msra.mxu0 %v1180
      %1198 = vmatpush.bf16.msra.mxu0 %v1179
      %1199 = vmatpush.bf16.msra.mxu0 %v1178
      %1200 = vmatpush.bf16.msra.mxu0 %v1177
      %1201 = vmatmul.bf16.gmra.mxu0 %v1134
      %v1202 = vpop.f32.mrf.mxu0
      %v1203 = vadd.f32 0.0, %v1202
      %v1204 = vpop.f32.mrf.mxu0
      %v1205 = vadd.f32 0.0, %v1204
      %1206 = vmatmul.bf16.gmra.mxu0 %v1142
      %v1207 = vpop.f32.mrf.mxu0
      %v1208 = vadd.f32 0.0, %v1207
      %v1209 = vpop.f32.mrf.mxu0
      %v1210 = vadd.f32 0.0, %v1209
      %1211 = vdwg.mxu0
      %v1212 = vadd.f32 %v1095, %v1203
      %v1213 = vadd.f32 %v1096, %v1205
      %v1214 = vadd.f32 %v1097, %v1208
      %v1215 = vadd.f32 %v1098, %v1210
      %v1216 = vmul.f32 %v530, %v536
      %v1217 = vmul.f32 %v756, %v537
      %v1218 = vmul.f32 %v1099, %v536
      %v1219 = vpack.c.bf16 %v543, %v1216
      %v1220 = vpack.c.bf16 %v1217, %v884
      %v1221 = vpack.c.bf16 %v1218, %v1218
      %s1222 = scalar_lea.vmem %s3, 384
      %v1223 = vld [vmem:[%s1222] sm:$0xf]
      %v1224 = vld [vmem:[%s1222 + $0x4] sm:$0xf]
      %v1225 = vld [vmem:[%s1222 + $0x8] sm:$0xf]
      %v1226 = vld [vmem:[%s1222 + $0xc] sm:$0xf]
      %v1227 = vld [vmem:[%s1222 + $0x10] sm:$0xf]
      %v1228 = vld [vmem:[%s1222 + $0x14] sm:$0xf]
      %v1229 = vld [vmem:[%s1222 + $0x18] sm:$0xf]
      %v1230 = vld [vmem:[%s1222 + $0x1c] sm:$0xf]
      %v1231 = vld [vmem:[%s1222 + $0x20] sm:$0xf]
      %v1232 = vld [vmem:[%s1222 + $0x24] sm:$0xf]
      %v1233 = vld [vmem:[%s1222 + $0x28] sm:$0xf]
      %v1234 = vld [vmem:[%s1222 + $0x2c] sm:$0xf]
      %v1235 = vld [vmem:[%s1222 + $0x30] sm:$0xf]
      %v1236 = vld [vmem:[%s1222 + $0x34] sm:$0xf]
      %v1237 = vld [vmem:[%s1222 + $0x38] sm:$0xf]
      %v1238 = vld [vmem:[%s1222 + $0x3c] sm:$0xf]
      %v1240 = vshrl.u32 %v1219, 16
      %v1242 = vrot.slane %v1240, 3
      %v1243 = vshll.u32 %v1219, 16
      %v1245 = vrot.slane %v1243, 4
      %v1246 = vor.u32 %v1242, %v1245
      %v1248 = vshrl.u32 %v1220, 16
      %v1250 = vrot.slane %v1248, 3
      %v1251 = vshll.u32 %v1220, 16
      %v1253 = vrot.slane %v1251, 4
      %v1254 = vor.u32 %v1250, %v1253
      %v1255 = vsel %vm660, %v1246, %v1254
      %v1257 = vshrl.u32 %v1221, 16
      %v1259 = vrot.slane %v1257, 3
      %v1260 = vshll.u32 %v1221, 16
      %v1262 = vrot.slane %v1260, 4
      %v1263 = vor.u32 %v1259, %v1262
      %v1264 = vsel %vm660, %v1254, %v1263
      %v1283 = vunpack.c.l.b16 %v1223
      %v1284 = vunpack.c.l.b16 %v1224
      %v1285 = vunpack.c.l.b16 %v1225
      %v1286 = vunpack.c.l.b16 %v1226
      %v1287 = vunpack.c.l.b16 %v1227
      %v1288 = vunpack.c.l.b16 %v1228
      %v1289 = vunpack.c.l.b16 %v1229
      %v1290 = vunpack.c.l.b16 %v1230
      %v1291 = vunpack.c.l.b16 %v1231
      %v1292 = vunpack.c.l.b16 %v1232
      %v1293 = vunpack.c.l.b16 %v1233
      %v1294 = vunpack.c.l.b16 %v1234
      %v1295 = vunpack.c.l.b16 %v1235
      %v1296 = vunpack.c.l.b16 %v1236
      %v1297 = vunpack.c.l.b16 %v1237
      %v1298 = vunpack.c.l.b16 %v1238
      %v1299 = vpack.c.b16 %v1284, %v1283
      %v1300 = vpack.c.b16 %v1286, %v1285
      %v1301 = vpack.c.b16 %v1288, %v1287
      %v1302 = vpack.c.b16 %v1290, %v1289
      %v1303 = vpack.c.b16 %v1292, %v1291
      %v1304 = vpack.c.b16 %v1294, %v1293
      %v1305 = vpack.c.b16 %v1296, %v1295
      %v1306 = vpack.c.b16 %v1298, %v1297
      %1315 = vmatpush.bf16.msra.mxu0 %v1306
      %1316 = vmatpush.bf16.msra.mxu0 %v1305
      %1317 = vmatpush.bf16.msra.mxu0 %v1304
      %1318 = vmatpush.bf16.msra.mxu0 %v1303
      %1319 = vmatpush.bf16.msra.mxu0 %v1302
      %1320 = vmatpush.bf16.msra.mxu0 %v1301
      %1321 = vmatpush.bf16.msra.mxu0 %v1300
      %1322 = vmatpush.bf16.msra.mxu0 %v1299
      %1323 = vmatmul.bf16.gmra.mxu0 %v1255
      %v1324 = vpop.f32.mrf.mxu0
      %v1325 = vadd.f32 0.0, %v1324
      %v1326 = vpop.f32.mrf.mxu0
      %v1327 = vadd.f32 0.0, %v1326
      %1328 = vmatmul.bf16.gmra.mxu0 %v1264
      %v1329 = vpop.f32.mrf.mxu0
      %v1330 = vadd.f32 0.0, %v1329
      %v1331 = vpop.f32.mrf.mxu0
      %v1332 = vadd.f32 0.0, %v1331
      %1333 = vdwg.mxu0
      %v1334 = vadd.f32 %v1212, %v1325
      %v1335 = vadd.f32 %v1213, %v1327
      %v1336 = vadd.f32 %v1214, %v1330
      %v1337 = vadd.f32 %v1215, %v1332
      %s1338 = scalar_lea.vmem %s3, 448
      %v1339 = vld [vmem:[%s1338] sm:$0xf]
      %v1340 = vld [vmem:[%s1338 + $0x4] sm:$0xf]
      %v1341 = vld [vmem:[%s1338 + $0x8] sm:$0xf]
      %v1342 = vld [vmem:[%s1338 + $0xc] sm:$0xf]
      %v1343 = vld [vmem:[%s1338 + $0x10] sm:$0xf]
      %v1344 = vld [vmem:[%s1338 + $0x14] sm:$0xf]
      %v1345 = vld [vmem:[%s1338 + $0x18] sm:$0xf]
      %v1346 = vld [vmem:[%s1338 + $0x1c] sm:$0xf]
      %v1347 = vld [vmem:[%s1338 + $0x20] sm:$0xf]
      %v1348 = vld [vmem:[%s1338 + $0x24] sm:$0xf]
      %v1349 = vld [vmem:[%s1338 + $0x28] sm:$0xf]
      %v1350 = vld [vmem:[%s1338 + $0x2c] sm:$0xf]
      %v1351 = vld [vmem:[%s1338 + $0x30] sm:$0xf]
      %v1352 = vld [vmem:[%s1338 + $0x34] sm:$0xf]
      %v1353 = vld [vmem:[%s1338 + $0x38] sm:$0xf]
      %v1354 = vld [vmem:[%s1338 + $0x3c] sm:$0xf]
      %v1356 = vunpack.c.l.b16 %v519
      %v1357 = vpack.c.b16 %v1356, %v1023
      %v1375 = vunpack.c.l.b16 %v1339
      %v1376 = vunpack.c.l.b16 %v1340
      %v1377 = vunpack.c.l.b16 %v1341
      %v1378 = vunpack.c.l.b16 %v1342
      %v1379 = vunpack.c.l.b16 %v1343
      %v1380 = vunpack.c.l.b16 %v1344
      %v1381 = vunpack.c.l.b16 %v1345
      %v1382 = vunpack.c.l.b16 %v1346
      %v1383 = vunpack.c.l.b16 %v1347
      %v1384 = vunpack.c.l.b16 %v1348
      %v1385 = vunpack.c.l.b16 %v1349
      %v1386 = vunpack.c.l.b16 %v1350
      %v1387 = vunpack.c.l.b16 %v1351
      %v1388 = vunpack.c.l.b16 %v1352
      %v1389 = vunpack.c.l.b16 %v1353
      %v1390 = vunpack.c.l.b16 %v1354
      %v1391 = vpack.c.b16 %v1376, %v1375
      %v1392 = vpack.c.b16 %v1378, %v1377
      %v1393 = vpack.c.b16 %v1380, %v1379
      %v1394 = vpack.c.b16 %v1382, %v1381
      %v1395 = vpack.c.b16 %v1384, %v1383
      %v1396 = vpack.c.b16 %v1386, %v1385
      %v1397 = vpack.c.b16 %v1388, %v1387
      %v1398 = vpack.c.b16 %v1390, %v1389
      %1407 = vmatpush.bf16.msra.mxu0 %v1398
      %1408 = vmatpush.bf16.msra.mxu0 %v1397
      %1409 = vmatpush.bf16.msra.mxu0 %v1396
      %1410 = vmatpush.bf16.msra.mxu0 %v1395
      %1411 = vmatpush.bf16.msra.mxu0 %v1394
      %1412 = vmatpush.bf16.msra.mxu0 %v1393
      %1413 = vmatpush.bf16.msra.mxu0 %v1392
      %1414 = vmatpush.bf16.msra.mxu0 %v1391
      %1415 = vmatmul.bf16.gmra.mxu0 %v590
      %v1416 = vpop.f32.mrf.mxu0
      %v1417 = vadd.f32 0.0, %v1416
      %v1418 = vpop.f32.mrf.mxu0
      %v1419 = vadd.f32 0.0, %v1418
      %1420 = vmatmul.bf16.gmra.mxu0 %v1357
      %v1421 = vpop.f32.mrf.mxu0
      %v1422 = vadd.f32 0.0, %v1421
      %v1423 = vpop.f32.mrf.mxu0
      %v1424 = vadd.f32 0.0, %v1423
      %1425 = vdwg.mxu0
      %v1426 = vadd.f32 %v1334, %v1417
      %v1427 = vadd.f32 %v1335, %v1419
      %v1428 = vadd.f32 %v1336, %v1422
      %v1429 = vadd.f32 %v1337, %v1424
      %v1430 = vmul.f32 %v531, %v760
      %v1431 = vmul.f32 %v1099, %v761
      %v1432 = vmul.f32 %v528, %v760
      %v1433 = vpack.c.bf16 %v767, %v1430
      %v1434 = vpack.c.bf16 %v1431, %v1101
      %v1435 = vpack.c.bf16 %v1432, %v1432
      %s1436 = scalar_lea.vmem %s3, 512
      %v1437 = vld [vmem:[%s1436] sm:$0xf]
      %v1438 = vld [vmem:[%s1436 + $0x4] sm:$0xf]
      %v1439 = vld [vmem:[%s1436 + $0x8] sm:$0xf]
      %v1440 = vld [vmem:[%s1436 + $0xc] sm:$0xf]
      %v1441 = vld [vmem:[%s1436 + $0x10] sm:$0xf]
      %v1442 = vld [vmem:[%s1436 + $0x14] sm:$0xf]
      %v1443 = vld [vmem:[%s1436 + $0x18] sm:$0xf]
      %v1444 = vld [vmem:[%s1436 + $0x1c] sm:$0xf]
      %v1445 = vld [vmem:[%s1436 + $0x20] sm:$0xf]
      %v1446 = vld [vmem:[%s1436 + $0x24] sm:$0xf]
      %v1447 = vld [vmem:[%s1436 + $0x28] sm:$0xf]
      %v1448 = vld [vmem:[%s1436 + $0x2c] sm:$0xf]
      %v1449 = vld [vmem:[%s1436 + $0x30] sm:$0xf]
      %v1450 = vld [vmem:[%s1436 + $0x34] sm:$0xf]
      %v1451 = vld [vmem:[%s1436 + $0x38] sm:$0xf]
      %v1452 = vld [vmem:[%s1436 + $0x3c] sm:$0xf]
      %v1454 = vshrl.u32 %v1433, 16
      %v1456 = vshll.u32 %v1433, 16
      %v1458 = vrot.slane %v1456, 1
      %v1459 = vor.u32 %v1454, %v1458
      %v1461 = vshll.u32 %v1434, 16
      %v1463 = vrot.slane %v1461, 1
      %v1464 = vsel %vm789, %v1459, %v1463
      %v1465 = vshrl.u32 %v1434, 16
      %v1467 = vor.u32 %v1465, %v1463
      %v1469 = vshll.u32 %v1435, 16
      %v1471 = vrot.slane %v1469, 1
      %v1472 = vsel %vm789, %v1467, %v1471
      %v1491 = vunpack.c.l.b16 %v1437
      %v1492 = vunpack.c.l.b16 %v1438
      %v1493 = vunpack.c.l.b16 %v1439
      %v1494 = vunpack.c.l.b16 %v1440
      %v1495 = vunpack.c.l.b16 %v1441
      %v1496 = vunpack.c.l.b16 %v1442
      %v1497 = vunpack.c.l.b16 %v1443
      %v1498 = vunpack.c.l.b16 %v1444
      %v1499 = vunpack.c.l.b16 %v1445
      %v1500 = vunpack.c.l.b16 %v1446
      %v1501 = vunpack.c.l.b16 %v1447
      %v1502 = vunpack.c.l.b16 %v1448
      %v1503 = vunpack.c.l.b16 %v1449
      %v1504 = vunpack.c.l.b16 %v1450
      %v1505 = vunpack.c.l.b16 %v1451
      %v1506 = vunpack.c.l.b16 %v1452
      %v1507 = vpack.c.b16 %v1492, %v1491
      %v1508 = vpack.c.b16 %v1494, %v1493
      %v1509 = vpack.c.b16 %v1496, %v1495
      %v1510 = vpack.c.b16 %v1498, %v1497
      %v1511 = vpack.c.b16 %v1500, %v1499
      %v1512 = vpack.c.b16 %v1502, %v1501
      %v1513 = vpack.c.b16 %v1504, %v1503
      %v1514 = vpack.c.b16 %v1506, %v1505
      %1523 = vmatpush.bf16.msra.mxu0 %v1514
      %1524 = vmatpush.bf16.msra.mxu0 %v1513
      %1525 = vmatpush.bf16.msra.mxu0 %v1512
      %1526 = vmatpush.bf16.msra.mxu0 %v1511
      %1527 = vmatpush.bf16.msra.mxu0 %v1510
      %1528 = vmatpush.bf16.msra.mxu0 %v1509
      %1529 = vmatpush.bf16.msra.mxu0 %v1508
      %1530 = vmatpush.bf16.msra.mxu0 %v1507
      %1531 = vmatmul.bf16.gmra.mxu0 %v1464
      %v1532 = vpop.f32.mrf.mxu0
      %v1533 = vadd.f32 0.0, %v1532
      %v1534 = vpop.f32.mrf.mxu0
      %v1535 = vadd.f32 0.0, %v1534
      %1536 = vmatmul.bf16.gmra.mxu0 %v1472
      %v1537 = vpop.f32.mrf.mxu0
      %v1538 = vadd.f32 0.0, %v1537
      %v1539 = vpop.f32.mrf.mxu0
      %v1540 = vadd.f32 0.0, %v1539
      %1541 = vdwg.mxu0
      %v1542 = vadd.f32 %v1426, %v1533
      %v1543 = vadd.f32 %v1427, %v1535
      %v1544 = vadd.f32 %v1428, %v1538
      %v1545 = vadd.f32 %v1429, %v1540
      %v1546 = vld [vmem:[%s4] sm:$0x1]
      %v1548 = vperm.slane %v1546, 0
      %v1550 = vadd.f32 %v1542, %v1548
      %v1551 = vadd.f32 %v1543, %v1548
      %v1552 = vadd.f32 %v1544, %v1548
      %v1553 = vadd.f32 %v1545, %v1548
      %v1554 = vpack.c.bf16 %v1550, %v1550
      %v1555 = vpack.c.bf16 %v1551, %v1551
      %v1556 = vpack.c.bf16 %v1552, %v1552
      %v1557 = vpack.c.bf16 %v1553, %v1553
      %1558 = vst [vmem:[%s437] sm:$0xf] %v1554
      %1559 = vst [vmem:[%s437 + $0x4] sm:$0xf] %v1555
      %1560 = vst [vmem:[%s437 + $0x8] sm:$0xf] %v1556
      %1561 = vst [vmem:[%s437 + $0xc] sm:$0xf] %v1557
      %v1562 = vadd.f32 %v1550, %v1551
      %v1563 = vadd.f32 %v1562, %v1552
      %v1564 = vadd.f32 %v1563, %v1553
      %v1565 = vrot.slane %v1564, 4
      %v1566 = vadd.f32 %v1564, %v1565
      %v1567 = vrot.slane %v1566, 2
      %v1568 = vadd.f32 %v1566, %v1567
      %v1569 = vrot.slane %v1568, 1
      %v1570 = vadd.f32 %v1568, %v1569
      %v1571 = vmul.f32 %v1550, %v1550
      %v1572 = vmul.f32 %v1551, %v1551
      %v1573 = vmul.f32 %v1552, %v1552
      %v1574 = vmul.f32 %v1553, %v1553
      %v1575 = vadd.f32 %v1571, %v1572
      %v1576 = vadd.f32 %v1575, %v1573
      %v1577 = vadd.f32 %v1576, %v1574
      %v1578 = vrot.slane %v1577, 4
      %v1579 = vadd.f32 %v1577, %v1578
      %v1580 = vrot.slane %v1579, 2
      %v1581 = vadd.f32 %v1579, %v1580
      %v1582 = vrot.slane %v1581, 1
      %v1583 = vadd.f32 %v1581, %v1582
      %v1584 = vsel %vm759, %v1570, %v1583
      %1585 = vst [vmem:[%s446] sm:$0x3] %v1584
      %s1586 = smul.u32 %s22, 2
      %s1587 = sadd.s32 %s1586, %s23
      %s1588 = smul.u32 4, %s1587
      %p1589 = scmp.lt.s32.totalorder %s1588, 15
      %s1590 = scalar_select %p1589, %s1588, 15
      %s1591 = smul.addr %s1590, 4
      %s1592 = scalar_lea.vmem %s5, %s1591
      %s1593 = smul.u32 %s22, 2
      %s1594 = sadd.s32 %s1593, %s23
      %p1595 = scmp.lt.s32.totalorder %s1594, 3
      %s1596 = scalar_select %p1595, %s1594, 3
      %s1597 = smul.addr %s1596, 2
      %s1598 = scalar_lea.vmem %s6, %s1597
      // Predicated region
      $region41: #{down_forward.3} parent=39 // pred_check
        %p1599 = pneg %p194
      $region42: #{down_forward.3} parent=39 // pred_check_branch
        %1601 = sbr.rel (%p1599) target = $region44
      $region43: #{down_forward.3} parent=39 // pred_region
        %s1602 = smul.u32 %s22, 2
        %s1603 = sadd.s32 %s1602, %s23
        %s1604 = smul.u32 4, %s1603
      $region44: #{down_forward.3} parent=39 // pred_fallthru
        _
      // Predicated region
      $region45: #{down_forward.3} parent=39 // pred_check
        %p1605 = pneg %p224
      $region46: #{down_forward.3} parent=39 // pred_check_branch
        %1607 = sbr.rel (%p1605) target = $region48
      $region47: #{down_forward.3} parent=39 // pred_region
        %s1608 = smul.u32 %s22, 2
        %s1609 = sadd.s32 %s1608, %s23
      $region48: #{down_forward.3} parent=39 // pred_fallthru
        _
    $region40: #{down_forward.3} parent=5 // pred_fallthru
      _
    %p1610 = scmp.le.s32.totalorder 2, %s13
    // Predicated region
    $region49: #{down_forward.3} parent=5 // pred_check
      %p1611 = pneg %p1610
    $region50: #{down_forward.3} parent=5 // pred_check_branch
      %1613 = sbr.rel (%p1611) target = $region52
    $region51: #{down_forward.3} parent=5 // pred_region
      %s1614 = ssub.s32 %s13, 2
      // Predicated region
      $region53: #{down_forward.3} parent=51 // pred_check
        %p1615 = pneg %p200
      $region54: #{down_forward.3} parent=51 // pred_check_branch
        %1617 = sbr.rel (%p1615) target = $region56
      $region55: #{down_forward.3} parent=51 // pred_region
        %s1618 = smul.u32 %s24, 2
        %s1619 = sadd.s32 %s1618, %s25
        %s1620 = smul.u32 4, %s1619
        %p1621 = scmp.lt.s32.totalorder %s1620, 15
        %s1622 = scalar_select %p1621, %s1620, 15
        %s1623 = smul.addr %s1622, 4
        %s1624 = scalar_lea.vmem %s5, %s1623
      $region56: #{down_forward.3} parent=51 // pred_fallthru
        _
      // Predicated region
      $region57: #{down_forward.3} parent=51 // pred_check
        %p1625 = pneg %p230
      $region58: #{down_forward.3} parent=51 // pred_check_branch
        %1627 = sbr.rel (%p1625) target = $region60
      $region59: #{down_forward.3} parent=51 // pred_region
        %s1628 = smul.u32 %s24, 2
        %s1629 = sadd.s32 %s1628, %s25
        %p1630 = scmp.lt.s32.totalorder %s1629, 3
        %s1631 = scalar_select %p1630, %s1629, 3
        %s1632 = smul.addr %s1631, 2
        %s1633 = scalar_lea.vmem %s6, %s1632
      $region60: #{down_forward.3} parent=51 // pred_fallthru
        _
    $region52: #{down_forward.3} parent=5 // pred_fallthru
      _
  $region6: #{down_forward.3} parent=0 // loop_footer
    %s17 = sadd.s32 1, %s13
  $region7: #{down_forward.3} parent=0 // loop_footer_branch
    %12 = sbr.rel target = $region3
  $region8: #{down_forward.3} parent=0 // loop_exit
    _

// kernel: down_forward.4
$region0: #{down_forward.4}
  #allocation0 [shape = 'u32[]', space=smem, size = 0x4, offset = 0x4, fixed_abs, tag = 'smem constant byte address 0x4 - core index']
  #allocation1 [shape = 'u32[72,128]{1,0:T(1,128)}', space=vmem, size = 0x9000, scoped, tag = 'internal scratch']
  %s0 = inlined_call_operand.vmem [shape: bf16[2,8,8,128], index: 0, kind: input, shape index: {}, may-alias: {0,1,2}]
  %s1 = inlined_call_operand.vmem [shape: bf16[2,8,8,128], index: 1, kind: input, shape index: {}, may-alias: {0,1,2}]
  %s2 = inlined_call_operand.vmem [shape: bf16[2,8,8,128], index: 2, kind: input, shape index: {}, may-alias: {0,1,2}]
  %s3 = inlined_call_operand.vmem [shape: f32[1,128], index: 3, kind: input, shape index: {}]
  %s4 = inlined_call_operand.vmem [shape: f32[1,128], index: 4, kind: input, shape index: {}]
  %s5 = inlined_call_operand.vmem [shape: bf16[9,128,128], index: 5, kind: input, shape index: {}]
  %s6 = inlined_call_operand.vmem [shape: f32[1,128], index: 6, kind: input, shape index: {}]
  %s7 = inlined_call_operand.vmem [shape: bf16[128,128], index: 7, kind: output, shape index: {0}]
  %s8 = inlined_call_operand.vmem [shape: f32[4,2,128], index: 8, kind: output, shape index: {1}]
  %9 = xla_tuple %s7, %s8
  %s10 = sld [smem:[#allocation0]]
  $region69: #{down_forward.4} parent=0
    _
  %s12 = ssub.s32 1, %s10
  %s13 = scalar_select 0, %s12, %s10
  loop: start=0, step=1, limit=6
  $region2: #{down_forward.4} parent=0 // loop_pre_header
    _
  $region3: #{down_forward.4} parent=0 // loop_header
    %s15 = sphi 0, %s19
    %p16 = scmp.ge.s32.totalorder %s15, 6
    %s22 = sphi 0, %s34
    %s23 = sphi 0, %s30
    %s24 = sphi 0, %s22
    %s25 = sphi 0, %s23
    %s26 = sphi 0, %s24
    %s27 = sphi 0, %s25
    %s39 = sphi 0, %s41
    %s42 = sphi 0, %s39
    %s43 = sphi 0, %s42
    %s59 = sphi 0, %s43
    %s75 = sphi 0, %s77
    %s78 = sphi 0, %s75
    %s79 = sphi 0, %s78
    %s95 = sphi 0, %s79
    %s111 = sphi 0, %s113
    %s114 = sphi 0, %s111
    %s115 = sphi 0, %s114
    %s131 = sphi 0, %s115
    %s135 = sphi 0, %s135
    %s137 = sphi 0, %s135
    %s138 = sphi 0, %s137
    %s152 = sphi 0, %s138
    %s156 = sphi 0, %s156
    %s158 = sphi 0, %s156
    %s159 = sphi 0, %s158
    %s173 = sphi 0, %s159
    %s177 = sphi 0, %s177
    %s179 = sphi 0, %s177
    %s180 = sphi 0, %s179
    %s194 = sphi 0, %s180
    %s198 = sphi 0, %s198
    %s200 = sphi 0, %s198
    %s201 = sphi 0, %s200
    %s215 = sphi 0, %s201
    %s225 = sphi 0, %s227
    %s228 = sphi 0, %s225
    %s229 = sphi 0, %s228
    %s245 = sphi 0, %s229
    %s255 = sphi 0, %s257
    %s258 = sphi 0, %s255
    %s259 = sphi 0, %s258
    %s275 = sphi 0, %s259
  $region4: #{down_forward.4} parent=0 // loop_header_branch
    %18 = sbr.rel (%p16) target = $region8
  $region5: #{down_forward.4} parent=0 // loop_body
    %s20 = ssub.s32 %s15, 1
    %s21 = ssub.s32 %s15, 2
    %s28 = sadd.s32 1, %s23
    %p29 = scmp.ge.s32.totalorder %s28, 2
    %s30 = scalar_select %p29, 0, %s28
    %s31 = sadd.s32 1, %s22
    %s32 = scalar_select %p29, %s31, %s22
    %p33 = scmp.ge.s32.totalorder %s32, 2
    %s34 = scalar_select %p33, 0, %s32
    %s35 = ssub.s32 %s22, %s34
    %s36 = ssub.s32 %s23, %s30
    %s37 = sor.u32 %s35, %s36
    %p38 = scmp.eq.s32.totalorder %s37, 0
    %s40 = sadd.s32 %s39, 1
    %s41 = scalar_select %p38, %s39, %s40
    %p44 = pneg %p38
    %p45 = scmp.eq.s32.totalorder %s15, 3
    %p46 = por %p44, %p45
    %p47 = scmp.ne.s32.totalorder %s39, %s42
    %p48 = scmp.eq.s32.totalorder %s15, 0
    %p49 = por %p47, %p48
    %p50 = scmp.ne.s32.totalorder %s39, %s42
    %p51 = scmp.eq.s32.totalorder %s20, 3
    %p52 = por %p50, %p51
    %p53 = scmp.ne.s32.totalorder %s42, %s43
    %p54 = scmp.eq.s32.totalorder %s20, 0
    %p55 = por %p53, %p54
    %p56 = scmp.ne.s32.totalorder %s42, %s43
    %p57 = scmp.eq.s32.totalorder %s21, 3
    %p58 = por %p56, %p57
    %p60 = scmp.ne.s32.totalorder %s43, %s59
    %p61 = scmp.eq.s32.totalorder %s21, 0
    %p62 = por %p60, %p61
    %s63 = smul.u32 %s23, 4
    %s64 = ssub.s32 %s63, 1
    %p65 = scmp.gt.s32.totalorder %s64, 0
    %s66 = scalar_select %p65, %s64, 0
    %s67 = smul.u32 %s30, 4
    %s68 = ssub.s32 %s67, 1
    %p69 = scmp.gt.s32.totalorder %s68, 0
    %s70 = scalar_select %p69, %s68, 0
    %s71 = ssub.s32 %s22, %s34
    %s72 = ssub.s32 %s66, %s70
    %s73 = sor.u32 %s71, %s72
    %p74 = scmp.eq.s32.totalorder %s73, 0
    %s76 = sadd.s32 %s75, 1
    %s77 = scalar_select %p74, %s75, %s76
    %p80 = pneg %p74
    %p81 = scmp.eq.s32.totalorder %s15, 3
    %p82 = por %p80, %p81
    %p83 = scmp.ne.s32.totalorder %s75, %s78
    %p84 = scmp.eq.s32.totalorder %s15, 0
    %p85 = por %p83, %p84
    %p86 = scmp.ne.s32.totalorder %s75, %s78
    %p87 = scmp.eq.s32.totalorder %s20, 3
    %p88 = por %p86, %p87
    %p89 = scmp.ne.s32.totalorder %s78, %s79
    %p90 = scmp.eq.s32.totalorder %s20, 0
    %p91 = por %p89, %p90
    %p92 = scmp.ne.s32.totalorder %s78, %s79
    %p93 = scmp.eq.s32.totalorder %s21, 3
    %p94 = por %p92, %p93
    %p96 = scmp.ne.s32.totalorder %s79, %s95
    %p97 = scmp.eq.s32.totalorder %s21, 0
    %p98 = por %p96, %p97
    %s99 = smul.u32 %s23, 4
    %s100 = sadd.s32 %s99, 4
    %p101 = scmp.lt.s32.totalorder %s100, 7
    %s102 = scalar_select %p101, %s100, 7
    %s103 = smul.u32 %s30, 4
    %s104 = sadd.s32 %s103, 4
    %p105 = scmp.lt.s32.totalorder %s104, 7
    %s106 = scalar_select %p105, %s104, 7
    %s107 = ssub.s32 %s22, %s34
    %s108 = ssub.s32 %s102, %s106
    %s109 = sor.u32 %s107, %s108
    %p110 = scmp.eq.s32.totalorder %s109, 0
    %s112 = sadd.s32 %s111, 1
    %s113 = scalar_select %p110, %s111, %s112
    %p116 = pneg %p110
    %p117 = scmp.eq.s32.totalorder %s15, 3
    %p118 = por %p116, %p117
    %p119 = scmp.ne.s32.totalorder %s111, %s114
    %p120 = scmp.eq.s32.totalorder %s15, 0
    %p121 = por %p119, %p120
    %p122 = scmp.ne.s32.totalorder %s111, %s114
    %p123 = scmp.eq.s32.totalorder %s20, 3
    %p124 = por %p122, %p123
    %p125 = scmp.ne.s32.totalorder %s114, %s115
    %p126 = scmp.eq.s32.totalorder %s20, 0
    %p127 = por %p125, %p126
    %p128 = scmp.ne.s32.totalorder %s114, %s115
    %p129 = scmp.eq.s32.totalorder %s21, 3
    %p130 = por %p128, %p129
    %p132 = scmp.ne.s32.totalorder %s115, %s131
    %p133 = scmp.eq.s32.totalorder %s21, 0
    %p134 = por %p132, %p133
    %s136 = sadd.s32 %s135, 1
    %p139 = scmp.eq.s32.totalorder %s15, 3
    %p140 = scmp.ne.s32.totalorder %s135, %s137
    %p141 = scmp.eq.s32.totalorder %s15, 0
    %p142 = por %p140, %p141
    %p143 = scmp.ne.s32.totalorder %s135, %s137
    %p144 = scmp.eq.s32.totalorder %s20, 3
    %p145 = por %p143, %p144
    %p146 = scmp.ne.s32.totalorder %s137, %s138
    %p147 = scmp.eq.s32.totalorder %s20, 0
    %p148 = por %p146, %p147
    %p149 = scmp.ne.s32.totalorder %s137, %s138
    %p150 = scmp.eq.s32.totalorder %s21, 3
    %p151 = por %p149, %p150
    %p153 = scmp.ne.s32.totalorder %s138, %s152
    %p154 = scmp.eq.s32.totalorder %s21, 0
    %p155 = por %p153, %p154
    %s157 = sadd.s32 %s156, 1
    %p160 = scmp.eq.s32.totalorder %s15, 3
    %p161 = scmp.ne.s32.totalorder %s156, %s158
    %p162 = scmp.eq.s32.totalorder %s15, 0
    %p163 = por %p161, %p162
    %p164 = scmp.ne.s32.totalorder %s156, %s158
    %p165 = scmp.eq.s32.totalorder %s20, 3
    %p166 = por %p164, %p165
    %p167 = scmp.ne.s32.totalorder %s158, %s159
    %p168 = scmp.eq.s32.totalorder %s20, 0
    %p169 = por %p167, %p168
    %p170 = scmp.ne.s32.totalorder %s158, %s159
    %p171 = scmp.eq.s32.totalorder %s21, 3
    %p172 = por %p170, %p171
    %p174 = scmp.ne.s32.totalorder %s159, %s173
    %p175 = scmp.eq.s32.totalorder %s21, 0
    %p176 = por %p174, %p175
    %s178 = sadd.s32 %s177, 1
    %p181 = scmp.eq.s32.totalorder %s15, 3
    %p182 = scmp.ne.s32.totalorder %s177, %s179
    %p183 = scmp.eq.s32.totalorder %s15, 0
    %p184 = por %p182, %p183
    %p185 = scmp.ne.s32.totalorder %s177, %s179
    %p186 = scmp.eq.s32.totalorder %s20, 3
    %p187 = por %p185, %p186
    %p188 = scmp.ne.s32.totalorder %s179, %s180
    %p189 = scmp.eq.s32.totalorder %s20, 0
    %p190 = por %p188, %p189
    %p191 = scmp.ne.s32.totalorder %s179, %s180
    %p192 = scmp.eq.s32.totalorder %s21, 3
    %p193 = por %p191, %p192
    %p195 = scmp.ne.s32.totalorder %s180, %s194
    %p196 = scmp.eq.s32.totalorder %s21, 0
    %p197 = por %p195, %p196
    %s199 = sadd.s32 %s198, 1
    %p202 = scmp.eq.s32.totalorder %s15, 3
    %p203 = scmp.ne.s32.totalorder %s198, %s200
    %p204 = scmp.eq.s32.totalorder %s15, 0
    %p205 = por %p203, %p204
    %p206 = scmp.ne.s32.totalorder %s198, %s200
    %p207 = scmp.eq.s32.totalorder %s20, 3
    %p208 = por %p206, %p207
    %p209 = scmp.ne.s32.totalorder %s200, %s201
    %p210 = scmp.eq.s32.totalorder %s20, 0
    %p211 = por %p209, %p210
    %p212 = scmp.ne.s32.totalorder %s200, %s201
    %p213 = scmp.eq.s32.totalorder %s21, 3
    %p214 = por %p212, %p213
    %p216 = scmp.ne.s32.totalorder %s201, %s215
    %p217 = scmp.eq.s32.totalorder %s21, 0
    %p218 = por %p216, %p217
    %s219 = smul.u32 %s22, 2
    %s220 = sadd.s32 %s219, %s23
    %s221 = smul.u32 %s34, 2
    %s222 = sadd.s32 %s221, %s30
    %s223 = ssub.s32 %s220, %s222
    %p224 = scmp.eq.s32.totalorder %s223, 0
    %s226 = sadd.s32 %s225, 1
    %s227 = scalar_select %p224, %s225, %s226
    %p230 = pneg %p224
    %p231 = scmp.eq.s32.totalorder %s15, 3
    %p232 = por %p230, %p231
    %p233 = scmp.ne.s32.totalorder %s225, %s228
    %p234 = scmp.eq.s32.totalorder %s15, 0
    %p235 = por %p233, %p234
    %p236 = scmp.ne.s32.totalorder %s225, %s228
    %p237 = scmp.eq.s32.totalorder %s20, 3
    %p238 = por %p236, %p237
    %p239 = scmp.ne.s32.totalorder %s228, %s229
    %p240 = scmp.eq.s32.totalorder %s20, 0
    %p241 = por %p239, %p240
    %p242 = scmp.ne.s32.totalorder %s228, %s229
    %p243 = scmp.eq.s32.totalorder %s21, 3
    %p244 = por %p242, %p243
    %p246 = scmp.ne.s32.totalorder %s229, %s245
    %p247 = scmp.eq.s32.totalorder %s21, 0
    %p248 = por %p246, %p247
    %s249 = smul.u32 %s22, 2
    %s250 = sadd.s32 %s249, %s23
    %s251 = smul.u32 %s34, 2
    %s252 = sadd.s32 %s251, %s30
    %s253 = ssub.s32 %s250, %s252
    %p254 = scmp.eq.s32.totalorder %s253, 0
    %s256 = sadd.s32 %s255, 1
    %s257 = scalar_select %p254, %s255, %s256
    %p260 = pneg %p254
    %p261 = scmp.eq.s32.totalorder %s15, 3
    %p262 = por %p260, %p261
    %p263 = scmp.ne.s32.totalorder %s255, %s258
    %p264 = scmp.eq.s32.totalorder %s15, 0
    %p265 = por %p263, %p264
    %p266 = scmp.ne.s32.totalorder %s255, %s258
    %p267 = scmp.eq.s32.totalorder %s20, 3
    %p268 = por %p266, %p267
    %p269 = scmp.ne.s32.totalorder %s258, %s259
    %p270 = scmp.eq.s32.totalorder %s20, 0
    %p271 = por %p269, %p270
    %p272 = scmp.ne.s32.totalorder %s258, %s259
    %p273 = scmp.eq.s32.totalorder %s21, 3
    %p274 = por %p272, %p273
    %p276 = scmp.ne.s32.totalorder %s259, %s275
    %p277 = scmp.eq.s32.totalorder %s21, 0
    %p278 = por %p276, %p277
    %p279 = scmp.le.s32.totalorder 1, %s15
    %p280 = scmp.lt.s32.totalorder %s15, 5
    %p281 = pnand %p279, %p280
    %p282 = pneg %p281
    // Predicated region
    $region9: #{down_forward.4} parent=5 // pred_check
      _
    $region10: #{down_forward.4} parent=5 // pred_check_branch
      %284 = sbr.rel (%p281) target = $region12
    $region11: #{down_forward.4} parent=5 // pred_region
      %s285 = ssub.s32 %s15, 1
      // Predicated region
      $region13: #{down_forward.4} parent=11 // pred_check
        %p286 = pneg %p148
      $region14: #{down_forward.4} parent=11 // pred_check_branch
        %288 = sbr.rel (%p286) target = $region16
      $region15: #{down_forward.4} parent=11 // pred_region
        _
      $region16: #{down_forward.4} parent=11 // pred_fallthru
        _
      // Predicated region
      $region17: #{down_forward.4} parent=11 // pred_check
        %p289 = pneg %p169
      $region18: #{down_forward.4} parent=11 // pred_check_branch
        %291 = sbr.rel (%p289) target = $region20
      $region19: #{down_forward.4} parent=11 // pred_region
        _
      $region20: #{down_forward.4} parent=11 // pred_fallthru
        _
      // Predicated region
      $region21: #{down_forward.4} parent=11 // pred_check
        %p292 = pneg %p190
      $region22: #{down_forward.4} parent=11 // pred_check_branch
        %294 = sbr.rel (%p292) target = $region24
      $region23: #{down_forward.4} parent=11 // pred_region
        _
      $region24: #{down_forward.4} parent=11 // pred_fallthru
        _
      // Predicated region
      $region25: #{down_forward.4} parent=11 // pred_check
        %p295 = pneg %p211
      $region26: #{down_forward.4} parent=11 // pred_check_branch
        %297 = sbr.rel (%p295) target = $region28
      $region27: #{down_forward.4} parent=11 // pred_region
        _
      $region28: #{down_forward.4} parent=11 // pred_fallthru
        _
    $region12: #{down_forward.4} parent=5 // pred_fallthru
      _
    %p298 = scmp.lt.s32.totalorder %s15, 4
    // Predicated region
    $region29: #{down_forward.4} parent=5 // pred_check
      %p299 = pneg %p298
    $region30: #{down_forward.4} parent=5 // pred_check_branch
      %301 = sbr.rel (%p299) target = $region32
    $region31: #{down_forward.4} parent=5 // pred_region
      // Predicated region
      $region33: #{down_forward.4} parent=31 // pred_check
        %p302 = pneg %p49
      $region34: #{down_forward.4} parent=31 // pred_check_branch
        %304 = sbr.rel (%p302) target = $region36
      $region35: #{down_forward.4} parent=31 // pred_region
        %s305 = smul.u32 4, %s23
        %p306 = scmp.lt.s32.totalorder %s22, 1
        %s307 = scalar_select %p306, %s22, 1
        %p308 = scmp.lt.s32.totalorder %s305, 7
        %s309 = scalar_select %p308, %s305, 7
        %s310 = smul.addr %s307, 8
        %s311 = sadd.s32 %s309, %s310
        %s312 = smul.addr %s311, 4
        %s313 = scalar_lea.vmem %s0, %s312
        %s314 = smul.u32 4, %s23
      $region36: #{down_forward.4} parent=31 // pred_fallthru
        _
      // Predicated region
      $region37: #{down_forward.4} parent=31 // pred_check
        %p315 = pneg %p85
      $region38: #{down_forward.4} parent=31 // pred_check_branch
        %317 = sbr.rel (%p315) target = $region40
      $region39: #{down_forward.4} parent=31 // pred_region
        %s318 = smul.u32 %s23, 4
        %s319 = ssub.s32 %s318, 1
        %p320 = scmp.gt.s32.totalorder %s319, 0
        %s321 = scalar_select %p320, %s319, 0
        %p322 = scmp.lt.s32.totalorder %s22, 1
        %s323 = scalar_select %p322, %s22, 1
        %p324 = scmp.lt.s32.totalorder %s321, 7
        %s325 = scalar_select %p324, %s321, 7
        %s326 = smul.addr %s323, 8
        %s327 = sadd.s32 %s325, %s326
        %s328 = smul.addr %s327, 4
        %s329 = scalar_lea.vmem %s1, %s328
        %s330 = smul.u32 %s23, 4
        %s331 = ssub.s32 %s330, 1
        %p332 = scmp.gt.s32.totalorder %s331, 0
        %s333 = scalar_select %p332, %s331, 0
      $region40: #{down_forward.4} parent=31 // pred_fallthru
        _
      // Predicated region
      $region41: #{down_forward.4} parent=31 // pred_check
        %p334 = pneg %p121
      $region42: #{down_forward.4} parent=31 // pred_check_branch
        %336 = sbr.rel (%p334) target = $region44
      $region43: #{down_forward.4} parent=31 // pred_region
        %s337 = smul.u32 %s23, 4
        %s338 = sadd.s32 %s337, 4
        %p339 = scmp.lt.s32.totalorder %s338, 7
        %s340 = scalar_select %p339, %s338, 7
        %p341 = scmp.lt.s32.totalorder %s22, 1
        %s342 = scalar_select %p341, %s22, 1
        %p343 = scmp.lt.s32.totalorder %s340, 7
        %s344 = scalar_select %p343, %s340, 7
        %s345 = smul.addr %s342, 8
        %s346 = sadd.s32 %s344, %s345
        %s347 = smul.addr %s346, 4
        %s348 = scalar_lea.vmem %s2, %s347
        %s349 = smul.u32 %s23, 4
        %s350 = sadd.s32 %s349, 4
        %p351 = scmp.lt.s32.totalorder %s350, 7
        %s352 = scalar_select %p351, %s350, 7
      $region44: #{down_forward.4} parent=31 // pred_fallthru
        _
    $region32: #{down_forward.4} parent=5 // pred_fallthru
      _
    %p353 = scmp.le.s32.totalorder 1, %s15
    %p354 = scmp.lt.s32.totalorder %s15, 5
    %p355 = pnand %p353, %p354
    %p356 = pneg %p355
    // Predicated region
    $region45: #{down_forward.4} parent=5 // pred_check
      _
    $region46: #{down_forward.4} parent=5 // pred_check_branch
      %358 = sbr.rel (%p355) target = $region48
    $region47: #{down_forward.4} parent=5 // pred_region
      %s359 = ssub.s32 %s15, 1
      %s360 = smul.u32 4, %s25
      %p361 = scmp.lt.s32.totalorder %s24, 1
      %s362 = scalar_select %p361, %s24, 1
      %p363 = scmp.lt.s32.totalorder %s360, 7
      %s364 = scalar_select %p363, %s360, 7
      %s365 = smul.addr %s362, 8
      %s366 = sadd.s32 %s364, %s365
      %s367 = smul.addr %s366, 4
      %s368 = scalar_lea.vmem %s0, %s367
      %p369 = pneg %p55
      %p370 = pneg %p52
      %s371 = smul.u32 %s25, 4
      %s372 = ssub.s32 %s371, 1
      %p373 = scmp.gt.s32.totalorder %s372, 0
      %s374 = scalar_select %p373, %s372, 0
      %p375 = scmp.lt.s32.totalorder %s24, 1
      %s376 = scalar_select %p375, %s24, 1
      %p377 = scmp.lt.s32.totalorder %s374, 7
      %s378 = scalar_select %p377, %s374, 7
      %s379 = smul.addr %s376, 8
      %s380 = sadd.s32 %s378, %s379
      %s381 = smul.addr %s380, 4
      %s382 = scalar_lea.vmem %s1, %s381
      %p383 = pneg %p91
      %p384 = pneg %p88
      %s385 = smul.u32 %s25, 4
      %s386 = sadd.s32 %s385, 4
      %p387 = scmp.lt.s32.totalorder %s386, 7
      %s388 = scalar_select %p387, %s386, 7
      %p389 = scmp.lt.s32.totalorder %s24, 1
      %s390 = scalar_select %p389, %s24, 1
      %p391 = scmp.lt.s32.totalorder %s388, 7
      %s392 = scalar_select %p391, %s388, 7
      %s393 = smul.addr %s390, 8
      %s394 = sadd.s32 %s392, %s393
      %s395 = smul.addr %s394, 4
      %s396 = scalar_lea.vmem %s2, %s395
      %p397 = pneg %p127
      %p398 = pneg %p124
      %p399 = pneg %p148
      %p400 = pneg %p145
      %p401 = pneg %p169
      %p402 = pneg %p166
      %p403 = pneg %p190
      %p404 = pneg %p187
      %p405 = pneg %p211
      %p406 = pneg %p208
      %p407 = pneg %p241
      %p408 = pneg %p238
      %s409 = smul.u32 %s24, 2
      %s410 = sadd.s32 %s409, %s25
      %s411 = smul.u32 4, %s410
      %p412 = scmp.lt.s32.totalorder %s411, 15
      %s413 = scalar_select %p412, %s411, 15
      %s414 = smul.addr %s413, 4
      %s415 = scalar_lea.vmem %s7, %s414
      %p416 = pneg %p271
      %p417 = pneg %p268
      %s418 = smul.u32 %s24, 2
      %s419 = sadd.s32 %s418, %s25
      %p420 = scmp.lt.s32.totalorder %s419, 3
      %s421 = scalar_select %p420, %s419, 3
      %s422 = smul.addr %s421, 2
      %s423 = scalar_lea.vmem %s8, %s422
      %s424 = smul.u32 4, %s25
      %p425 = scmp.lt.s32.totalorder %s24, 1
      %s426 = scalar_select %p425, %s24, 1
      %p427 = scmp.lt.s32.totalorder %s424, 7
      %s428 = scalar_select %p427, %s424, 7
      %s429 = smul.addr %s426, 8
      %s430 = sadd.s32 %s428, %s429
      %s431 = smul.addr %s430, 4
      %s432 = scalar_lea.vmem %s0, %s431
      %s433 = smul.u32 4, %s25
      %s434 = smul.u32 %s25, 4
      %s435 = ssub.s32 %s434, 1
      %p436 = scmp.gt.s32.totalorder %s435, 0
      %s437 = scalar_select %p436, %s435, 0
      %p438 = scmp.lt.s32.totalorder %s24, 1
      %s439 = scalar_select %p438, %s24, 1
      %p440 = scmp.lt.s32.totalorder %s437, 7
      %s441 = scalar_select %p440, %s437, 7
      %s442 = smul.addr %s439, 8
      %s443 = sadd.s32 %s441, %s442
      %s444 = smul.addr %s443, 4
      %s445 = scalar_lea.vmem %s1, %s444
      %s446 = smul.u32 %s25, 4
      %s447 = ssub.s32 %s446, 1
      %p448 = scmp.gt.s32.totalorder %s447, 0
      %s449 = scalar_select %p448, %s447, 0
      %s450 = smul.u32 %s25, 4
      %s451 = sadd.s32 %s450, 4
      %p452 = scmp.lt.s32.totalorder %s451, 7
      %s453 = scalar_select %p452, %s451, 7
      %p454 = scmp.lt.s32.totalorder %s24, 1
      %s455 = scalar_select %p454, %s24, 1
      %p456 = scmp.lt.s32.totalorder %s453, 7
      %s457 = scalar_select %p456, %s453, 7
      %s458 = smul.addr %s455, 8
      %s459 = sadd.s32 %s457, %s458
      %s460 = smul.addr %s459, 4
      %s461 = scalar_lea.vmem %s2, %s460
      %s462 = smul.u32 %s25, 4
      %s463 = sadd.s32 %s462, 4
      %p464 = scmp.lt.s32.totalorder %s463, 7
      %s465 = scalar_select %p464, %s463, 7
      %s466 = smul.u32 %s24, 2
      %s467 = sadd.s32 %s466, %s25
      %s468 = smul.u32 4, %s467
      %p469 = scmp.lt.s32.totalorder %s468, 15
      %s470 = scalar_select %p469, %s468, 15
      %s471 = smul.addr %s470, 4
      %s472 = scalar_lea.vmem %s7, %s471
      %s473 = smul.u32 %s24, 2
      %s474 = sadd.s32 %s473, %s25
      %s475 = smul.u32 4, %s474
      %s476 = smul.u32 %s24, 2
      %s477 = sadd.s32 %s476, %s25
      %p478 = scmp.lt.s32.totalorder %s477, 3
      %s479 = scalar_select %p478, %s477, 3
      %s480 = smul.addr %s479, 2
      %s481 = scalar_lea.vmem %s8, %s480
      %s482 = smul.u32 %s24, 2
      %s483 = sadd.s32 %s482, %s25
      %v485 = vld [vmem:[%s3] sm:$0x1]
      %v486 = vld [vmem:[%s4] sm:$0x1]
      %v487 = vld [vmem:[%s432] sm:$0xf]
      %v488 = vld [vmem:[%s432 + $0x4] sm:$0xf]
      %v489 = vld [vmem:[%s432 + $0x8] sm:$0xf]
      %v490 = vld [vmem:[%s432 + $0xc] sm:$0xf]
      %v491 = vunpack.c.l.bf16 %v487
      %v492 = vunpack.c.l.bf16 %v488
      %v493 = vunpack.c.l.bf16 %v489
      %v494 = vunpack.c.l.bf16 %v490
      %v496 = vperm.slane %v485, 0
      %v498 = vmul.f32 %v491, %v496
      %v499 = vmul.f32 %v492, %v496
      %v500 = vmul.f32 %v493, %v496
      %v501 = vmul.f32 %v494, %v496
      %v503 = vperm.slane %v486, 0
      %v505 = vadd.f32 %v498, %v503
      %v506 = vadd.f32 %v499, %v503
      %v507 = vadd.f32 %v500, %v503
      %v508 = vadd.f32 %v501, %v503
      %v509 = vmax.f32 %v505, 0.0
      %v510 = vmax.f32 %v506, 0.0
      %v511 = vmax.f32 %v507, 0.0
      %v512 = vmax.f32 %v508, 0.0
      %v513 = vpack.c.bf16 %v509, %v509
      %v514 = vpack.c.bf16 %v510, %v510
      %v515 = vpack.c.bf16 %v511, %v511
      %v516 = vpack.c.bf16 %v512, %v512
      %v517 = vld [vmem:[%s445] sm:$0xf]
      %v518 = vunpack.c.l.bf16 %v517
      %v519 = vmul.f32 %v518, %v496
      %v520 = vadd.f32 %v519, %v503
      %v521 = vmax.f32 %v520, 0.0
      %v522 = vpack.c.bf16 %v521, %v521
      %v523 = vld [vmem:[%s461] sm:$0xf]
      %v524 = vunpack.c.l.bf16 %v523
      %v525 = vmul.f32 %v524, %v496
      %v526 = vadd.f32 %v525, %v503
      %v527 = vmax.f32 %v526, 0.0
      %v528 = vpack.c.bf16 %v527, %v527
      %p529 = scmp.gt.s32.totalorder %s25, 0
      %s530 = scalar_select %p529, 1, 0
      %v531 = vstv %s530
      %vm532 = vcmp.eq.s32.totalorder %v531, 1
      %v533 = vsel %vm532, %v522, 0
      %p534 = scmp.lt.s32.totalorder %s25, 1
      %s535 = scalar_select %p534, 1, 0
      %v536 = vstv %s535
      %vm537 = vcmp.eq.s32.totalorder %v536, 1
      %v538 = vsel %vm537, %v528, 0
      %v539 = vlaneseq
      %v540 = vshrl.u32 %v539, 7
      %vm541 = vcmp.gt.s32.totalorder %v540, 0
      %v542 = vsel %vm541, 1.0, 0.0
      %v543 = vpack.c.bf16 %v542, %v542
      %vm544 = vcmp.lt.s32.totalorder %v540, 7
      %v545 = vsel %vm544, 1.0, 0.0
      %v546 = vpack.c.bf16 %v545, %v545
      %v547 = vunpack.c.l.bf16 0
      %v548 = vunpack.c.l.bf16 %v533
      %v549 = vunpack.c.l.bf16 %v513
      %v550 = vunpack.c.l.bf16 %v514
      %v551 = vunpack.c.l.bf16 %v515
      %v552 = vunpack.c.l.bf16 %v543
      %vm554 = vcmask 1046528
      %v555 = vrot.slane %v552, 1
      %v556 = vsel %vm554, %v555, %v555
      %v559 = vmul.f32 %v547, %v555
      %v560 = vmul.f32 %v548, %v556
      %v561 = vmul.f32 %v549, %v556
      %v562 = vmul.f32 %v550, %v556
      %v563 = vmul.f32 %v551, %v555
      %v564 = vpack.c.bf16 %v560, %v559
      %v565 = vpack.c.bf16 %v562, %v561
      %v566 = vpack.c.bf16 %v563, %v563
      %v567 = vld [vmem:[%s5] sm:$0xf]
      %v568 = vld [vmem:[%s5 + $0x4] sm:$0xf]
      %v569 = vld [vmem:[%s5 + $0x8] sm:$0xf]
      %v570 = vld [vmem:[%s5 + $0xc] sm:$0xf]
      %v571 = vld [vmem:[%s5 + $0x10] sm:$0xf]
      %v572 = vld [vmem:[%s5 + $0x14] sm:$0xf]
      %v573 = vld [vmem:[%s5 + $0x18] sm:$0xf]
      %v574 = vld [vmem:[%s5 + $0x1c] sm:$0xf]
      %v575 = vld [vmem:[%s5 + $0x20] sm:$0xf]
      %v576 = vld [vmem:[%s5 + $0x24] sm:$0xf]
      %v577 = vld [vmem:[%s5 + $0x28] sm:$0xf]
      %v578 = vld [vmem:[%s5 + $0x2c] sm:$0xf]
      %v579 = vld [vmem:[%s5 + $0x30] sm:$0xf]
      %v580 = vld [vmem:[%s5 + $0x34] sm:$0xf]
      %v581 = vld [vmem:[%s5 + $0x38] sm:$0xf]
      %v582 = vld [vmem:[%s5 + $0x3c] sm:$0xf]
      %s583 = scalar_lea.vmem %s5, 64
      %v584 = vld [vmem:[%s583] sm:$0xf]
      %v585 = vld [vmem:[%s583 + $0x4] sm:$0xf]
      %v586 = vld [vmem:[%s583 + $0x8] sm:$0xf]
      %v587 = vld [vmem:[%s583 + $0xc] sm:$0xf]
      %v588 = vld [vmem:[%s583 + $0x10] sm:$0xf]
      %v589 = vld [vmem:[%s583 + $0x14] sm:$0xf]
      %v590 = vld [vmem:[%s583 + $0x18] sm:$0xf]
      %v591 = vld [vmem:[%s583 + $0x1c] sm:$0xf]
      %v592 = vld [vmem:[%s583 + $0x20] sm:$0xf]
      %v593 = vld [vmem:[%s583 + $0x24] sm:$0xf]
      %v594 = vld [vmem:[%s583 + $0x28] sm:$0xf]
      %v595 = vld [vmem:[%s583 + $0x2c] sm:$0xf]
      %v596 = vld [vmem:[%s583 + $0x30] sm:$0xf]
      %v597 = vld [vmem:[%s583 + $0x34] sm:$0xf]
      %v598 = vld [vmem:[%s583 + $0x38] sm:$0xf]
      %v599 = vld [vmem:[%s583 + $0x3c] sm:$0xf]
      %v604 = vunpack.c.l.b16 %v533
      %v605 = vunpack.c.l.b16 %v513
      %v606 = vunpack.c.l.b16 %v514
      %v607 = vunpack.c.l.b16 %v515
      %v608 = vpack.c.b16 %v605, %v604
      %v609 = vpack.c.b16 %v607, %v606
      %v628 = vunpack.c.l.b16 %v584
      %v629 = vunpack.c.l.b16 %v585
      %v630 = vunpack.c.l.b16 %v586
      %v631 = vunpack.c.l.b16 %v587
      %v632 = vunpack.c.l.b16 %v588
      %v633 = vunpack.c.l.b16 %v589
      %v634 = vunpack.c.l.b16 %v590
      %v635 = vunpack.c.l.b16 %v591
      %v636 = vunpack.c.l.b16 %v592
      %v637 = vunpack.c.l.b16 %v593
      %v638 = vunpack.c.l.b16 %v594
      %v639 = vunpack.c.l.b16 %v595
      %v640 = vunpack.c.l.b16 %v596
      %v641 = vunpack.c.l.b16 %v597
      %v642 = vunpack.c.l.b16 %v598
      %v643 = vunpack.c.l.b16 %v599
      %v644 = vpack.c.b16 %v629, %v628
      %v645 = vpack.c.b16 %v631, %v630
      %v646 = vpack.c.b16 %v633, %v632
      %v647 = vpack.c.b16 %v635, %v634
      %v648 = vpack.c.b16 %v637, %v636
      %v649 = vpack.c.b16 %v639, %v638
      %v650 = vpack.c.b16 %v641, %v640
      %v651 = vpack.c.b16 %v643, %v642
      %660 = vmatpush.bf16.msra.mxu0 %v651
      %661 = vmatpush.bf16.msra.mxu0 %v650
      %662 = vmatpush.bf16.msra.mxu0 %v649
      %663 = vmatpush.bf16.msra.mxu0 %v648
      %664 = vmatpush.bf16.msra.mxu0 %v647
      %665 = vmatpush.bf16.msra.mxu0 %v646
      %666 = vmatpush.bf16.msra.mxu0 %v645
      %667 = vmatpush.bf16.msra.mxu0 %v644
      %668 = vmatmul.bf16.gmra.mxu0 %v608
      %v669 = vpop.f32.mrf.mxu0
      %v670 = vadd.f32 0.0, %v669
      %v671 = vpop.f32.mrf.mxu0
      %v672 = vadd.f32 0.0, %v671
      %673 = vmatmul.bf16.gmra.mxu0 %v609
      %v674 = vpop.f32.mrf.mxu0
      %v675 = vadd.f32 0.0, %v674
      %v676 = vpop.f32.mrf.mxu0
      %v677 = vadd.f32 0.0, %v676
      %678 = vdwg.mxu0
      %vm679 = vsmask.f32 4352
      %v681 = vshrl.u32 %v564, 16
      %v683 = vrot.slane %v681, 3
      %v684 = vshll.u32 %v564, 16
      %v686 = vrot.slane %v684, 4
      %v687 = vor.u32 %v683, %v686
      %v689 = vshrl.u32 %v565, 16
      %v691 = vrot.slane %v689, 3
      %v692 = vshll.u32 %v565, 16
      %v694 = vrot.slane %v692, 4
      %v695 = vor.u32 %v691, %v694
      %v696 = vsel %vm679, %v687, %v695
      %v698 = vshrl.u32 %v566, 16
      %v700 = vrot.slane %v698, 3
      %v701 = vshll.u32 %v566, 16
      %v703 = vrot.slane %v701, 4
      %v704 = vor.u32 %v700, %v703
      %v705 = vsel %vm679, %v695, %v704
      %v724 = vunpack.c.l.b16 %v567
      %v725 = vunpack.c.l.b16 %v568
      %v726 = vunpack.c.l.b16 %v569
      %v727 = vunpack.c.l.b16 %v570
      %v728 = vunpack.c.l.b16 %v571
      %v729 = vunpack.c.l.b16 %v572
      %v730 = vunpack.c.l.b16 %v573
      %v731 = vunpack.c.l.b16 %v574
      %v732 = vunpack.c.l.b16 %v575
      %v733 = vunpack.c.l.b16 %v576
      %v734 = vunpack.c.l.b16 %v577
      %v735 = vunpack.c.l.b16 %v578
      %v736 = vunpack.c.l.b16 %v579
      %v737 = vunpack.c.l.b16 %v580
      %v738 = vunpack.c.l.b16 %v581
      %v739 = vunpack.c.l.b16 %v582
      %v740 = vpack.c.b16 %v725, %v724
      %v741 = vpack.c.b16 %v727, %v726
      %v742 = vpack.c.b16 %v729, %v728
      %v743 = vpack.c.b16 %v731, %v730
      %v744 = vpack.c.b16 %v733, %v732
      %v745 = vpack.c.b16 %v735, %v734
      %v746 = vpack.c.b16 %v737, %v736
      %v747 = vpack.c.b16 %v739, %v738
      %756 = vmatpush.bf16.msra.mxu0 %v747
      %757 = vmatpush.bf16.msra.mxu0 %v746
      %758 = vmatpush.bf16.msra.mxu0 %v745
      %759 = vmatpush.bf16.msra.mxu0 %v744
      %760 = vmatpush.bf16.msra.mxu0 %v743
      %761 = vmatpush.bf16.msra.mxu0 %v742
      %762 = vmatpush.bf16.msra.mxu0 %v741
      %763 = vmatpush.bf16.msra.mxu0 %v740
      %764 = vmatmul.bf16.gmra.mxu0 %v696
      %v765 = vpop.f32.mrf.mxu0
      %v766 = vadd.f32 %v670, %v765
      %v767 = vpop.f32.mrf.mxu0
      %v768 = vadd.f32 %v672, %v767
      %769 = vmatmul.bf16.gmra.mxu0 %v705
      %v770 = vpop.f32.mrf.mxu0
      %v771 = vadd.f32 %v675, %v770
      %v772 = vpop.f32.mrf.mxu0
      %v773 = vadd.f32 %v677, %v772
      %774 = vdwg.mxu0
      %v775 = vunpack.c.l.bf16 %v516
      %v776 = vunpack.c.l.bf16 %v546
      %vm778 = vcmask 1040384
      %v779 = vrot.slane %v776, 7
      %v780 = vsel %vm778, %v779, %v779
      %v783 = vmul.f32 %v548, %v779
      %v784 = vmul.f32 %v549, %v780
      %v785 = vmul.f32 %v550, %v780
      %v786 = vmul.f32 %v551, %v780
      %v787 = vmul.f32 %v775, %v779
      %v788 = vpack.c.bf16 %v784, %v783
      %v789 = vpack.c.bf16 %v786, %v785
      %v790 = vpack.c.bf16 %v787, %v787
      %s791 = scalar_lea.vmem %s5, 128
      %v792 = vld [vmem:[%s791] sm:$0xf]
      %v793 = vld [vmem:[%s791 + $0x4] sm:$0xf]
      %v794 = vld [vmem:[%s791 + $0x8] sm:$0xf]
      %v795 = vld [vmem:[%s791 + $0xc] sm:$0xf]
      %v796 = vld [vmem:[%s791 + $0x10] sm:$0xf]
      %v797 = vld [vmem:[%s791 + $0x14] sm:$0xf]
      %v798 = vld [vmem:[%s791 + $0x18] sm:$0xf]
      %v799 = vld [vmem:[%s791 + $0x1c] sm:$0xf]
      %v800 = vld [vmem:[%s791 + $0x20] sm:$0xf]
      %v801 = vld [vmem:[%s791 + $0x24] sm:$0xf]
      %v802 = vld [vmem:[%s791 + $0x28] sm:$0xf]
      %v803 = vld [vmem:[%s791 + $0x2c] sm:$0xf]
      %v804 = vld [vmem:[%s791 + $0x30] sm:$0xf]
      %v805 = vld [vmem:[%s791 + $0x34] sm:$0xf]
      %v806 = vld [vmem:[%s791 + $0x38] sm:$0xf]
      %v807 = vld [vmem:[%s791 + $0x3c] sm:$0xf]
      %vm808 = vsmask.f32 7424
      %v810 = vshrl.u32 %v788, 16
      %v812 = vshll.u32 %v788, 16
      %v814 = vrot.slane %v812, 1
      %v815 = vor.u32 %v810, %v814
      %v817 = vshll.u32 %v789, 16
      %v819 = vrot.slane %v817, 1
      %v820 = vsel %vm808, %v815, %v819
      %v821 = vshrl.u32 %v789, 16
      %v823 = vor.u32 %v821, %v819
      %v825 = vshll.u32 %v790, 16
      %v827 = vrot.slane %v825, 1
      %v828 = vsel %vm808, %v823, %v827
      %v847 = vunpack.c.l.b16 %v792
      %v848 = vunpack.c.l.b16 %v793
      %v849 = vunpack.c.l.b16 %v794
      %v850 = vunpack.c.l.b16 %v795
      %v851 = vunpack.c.l.b16 %v796
      %v852 = vunpack.c.l.b16 %v797
      %v853 = vunpack.c.l.b16 %v798
      %v854 = vunpack.c.l.b16 %v799
      %v855 = vunpack.c.l.b16 %v800
      %v856 = vunpack.c.l.b16 %v801
      %v857 = vunpack.c.l.b16 %v802
      %v858 = vunpack.c.l.b16 %v803
      %v859 = vunpack.c.l.b16 %v804
      %v860 = vunpack.c.l.b16 %v805
      %v861 = vunpack.c.l.b16 %v806
      %v862 = vunpack.c.l.b16 %v807
      %v863 = vpack.c.b16 %v848, %v847
      %v864 = vpack.c.b16 %v850, %v849
      %v865 = vpack.c.b16 %v852, %v851
      %v866 = vpack.c.b16 %v854, %v853
      %v867 = vpack.c.b16 %v856, %v855
      %v868 = vpack.c.b16 %v858, %v857
      %v869 = vpack.c.b16 %v860, %v859
      %v870 = vpack.c.b16 %v862, %v861
      %879 = vmatpush.bf16.msra.mxu0 %v870
      %880 = vmatpush.bf16.msra.mxu0 %v869
      %881 = vmatpush.bf16.msra.mxu0 %v868
      %882 = vmatpush.bf16.msra.mxu0 %v867
      %883 = vmatpush.bf16.msra.mxu0 %v866
      %884 = vmatpush.bf16.msra.mxu0 %v865
      %885 = vmatpush.bf16.msra.mxu0 %v864
      %886 = vmatpush.bf16.msra.mxu0 %v863
      %887 = vmatmul.bf16.gmra.mxu0 %v820
      %v888 = vpop.f32.mrf.mxu0
      %v889 = vadd.f32 0.0, %v888
      %v890 = vpop.f32.mrf.mxu0
      %v891 = vadd.f32 0.0, %v890
      %892 = vmatmul.bf16.gmra.mxu0 %v828
      %v893 = vpop.f32.mrf.mxu0
      %v894 = vadd.f32 0.0, %v893
      %v895 = vpop.f32.mrf.mxu0
      %v896 = vadd.f32 0.0, %v895
      %897 = vdwg.mxu0
      %v898 = vadd.f32 %v766, %v889
      %v899 = vadd.f32 %v768, %v891
      %v900 = vadd.f32 %v771, %v894
      %v901 = vadd.f32 %v773, %v896
      %v902 = vmul.f32 %v548, %v555
      %v903 = vmul.f32 %v551, %v556
      %v904 = vmul.f32 %v775, %v555
      %v905 = vpack.c.bf16 %v561, %v902
      %v906 = vpack.c.bf16 %v903, %v562
      %v907 = vpack.c.bf16 %v904, %v904
      %s908 = scalar_lea.vmem %s5, 192
      %v909 = vld [vmem:[%s908] sm:$0xf]
      %v910 = vld [vmem:[%s908 + $0x4] sm:$0xf]
      %v911 = vld [vmem:[%s908 + $0x8] sm:$0xf]
      %v912 = vld [vmem:[%s908 + $0xc] sm:$0xf]
      %v913 = vld [vmem:[%s908 + $0x10] sm:$0xf]
      %v914 = vld [vmem:[%s908 + $0x14] sm:$0xf]
      %v915 = vld [vmem:[%s908 + $0x18] sm:$0xf]
      %v916 = vld [vmem:[%s908 + $0x1c] sm:$0xf]
      %v917 = vld [vmem:[%s908 + $0x20] sm:$0xf]
      %v918 = vld [vmem:[%s908 + $0x24] sm:$0xf]
      %v919 = vld [vmem:[%s908 + $0x28] sm:$0xf]
      %v920 = vld [vmem:[%s908 + $0x2c] sm:$0xf]
      %v921 = vld [vmem:[%s908 + $0x30] sm:$0xf]
      %v922 = vld [vmem:[%s908 + $0x34] sm:$0xf]
      %v923 = vld [vmem:[%s908 + $0x38] sm:$0xf]
      %v924 = vld [vmem:[%s908 + $0x3c] sm:$0xf]
      %v926 = vshrl.u32 %v905, 16
      %v928 = vrot.slane %v926, 3
      %v929 = vshll.u32 %v905, 16
      %v931 = vrot.slane %v929, 4
      %v932 = vor.u32 %v928, %v931
      %v934 = vshrl.u32 %v906, 16
      %v936 = vrot.slane %v934, 3
      %v937 = vshll.u32 %v906, 16
      %v939 = vrot.slane %v937, 4
      %v940 = vor.u32 %v936, %v939
      %v941 = vsel %vm679, %v932, %v940
      %v943 = vshrl.u32 %v907, 16
      %v945 = vrot.slane %v943, 3
      %v946 = vshll.u32 %v907, 16
      %v948 = vrot.slane %v946, 4
      %v949 = vor.u32 %v945, %v948
      %v950 = vsel %vm679, %v940, %v949
      %v969 = vunpack.c.l.b16 %v909
      %v970 = vunpack.c.l.b16 %v910
      %v971 = vunpack.c.l.b16 %v911
      %v972 = vunpack.c.l.b16 %v912
      %v973 = vunpack.c.l.b16 %v913
      %v974 = vunpack.c.l.b16 %v914
      %v975 = vunpack.c.l.b16 %v915
      %v976 = vunpack.c.l.b16 %v916
      %v977 = vunpack.c.l.b16 %v917
      %v978 = vunpack.c.l.b16 %v918
      %v979 = vunpack.c.l.b16 %v919
      %v980 = vunpack.c.l.b16 %v920
      %v981 = vunpack.c.l.b16 %v921
      %v982 = vunpack.c.l.b16 %v922
      %v983 = vunpack.c.l.b16 %v923
      %v984 = vunpack.c.l.b16 %v924
      %v985 = vpack.c.b16 %v970, %v969
      %v986 = vpack.c.b16 %v972, %v971
      %v987 = vpack.c.b16 %v974, %v973
      %v988 = vpack.c.b16 %v976, %v975
      %v989 = vpack.c.b16 %v978, %v977
      %v990 = vpack.c.b16 %v980, %v979
      %v991 = vpack.c.b16 %v982, %v981
      %v992 = vpack.c.b16 %v984, %v983
      %1001 = vmatpush.bf16.msra.mxu0 %v992
      %1002 = vmatpush.bf16.msra.mxu0 %v991
      %1003 = vmatpush.bf16.msra.mxu0 %v990
      %1004 = vmatpush.bf16.msra.mxu0 %v989
      %1005 = vmatpush.bf16.msra.mxu0 %v988
      %1006 = vmatpush.bf16.msra.mxu0 %v987
      %1007 = vmatpush.bf16.msra.mxu0 %v986
      %1008 = vmatpush.bf16.msra.mxu0 %v985
      %1009 = vmatmul.bf16.gmra.mxu0 %v941
      %v1010 = vpop.f32.mrf.mxu0
      %v1011 = vadd.f32 0.0, %v1010
      %v1012 = vpop.f32.mrf.mxu0
      %v1013 = vadd.f32 0.0, %v1012
      %1014 = vmatmul.bf16.gmra.mxu0 %v950
      %v1015 = vpop.f32.mrf.mxu0
      %v1016 = vadd.f32 0.0, %v1015
      %v1017 = vpop.f32.mrf.mxu0
      %v1018 = vadd.f32 0.0, %v1017
      %1019 = vdwg.mxu0
      %v1020 = vadd.f32 %v898, %v1011
      %v1021 = vadd.f32 %v899, %v1013
      %v1022 = vadd.f32 %v900, %v1016
      %v1023 = vadd.f32 %v901, %v1018
      %s1024 = scalar_lea.vmem %s5, 256
      %v1025 = vld [vmem:[%s1024] sm:$0xf]
      %v1026 = vld [vmem:[%s1024 + $0x4] sm:$0xf]
      %v1027 = vld [vmem:[%s1024 + $0x8] sm:$0xf]
      %v1028 = vld [vmem:[%s1024 + $0xc] sm:$0xf]
      %v1029 = vld [vmem:[%s1024 + $0x10] sm:$0xf]
      %v1030 = vld [vmem:[%s1024 + $0x14] sm:$0xf]
      %v1031 = vld [vmem:[%s1024 + $0x18] sm:$0xf]
      %v1032 = vld [vmem:[%s1024 + $0x1c] sm:$0xf]
      %v1033 = vld [vmem:[%s1024 + $0x20] sm:$0xf]
      %v1034 = vld [vmem:[%s1024 + $0x24] sm:$0xf]
      %v1035 = vld [vmem:[%s1024 + $0x28] sm:$0xf]
      %v1036 = vld [vmem:[%s1024 + $0x2c] sm:$0xf]
      %v1037 = vld [vmem:[%s1024 + $0x30] sm:$0xf]
      %v1038 = vld [vmem:[%s1024 + $0x34] sm:$0xf]
      %v1039 = vld [vmem:[%s1024 + $0x38] sm:$0xf]
      %v1040 = vld [vmem:[%s1024 + $0x3c] sm:$0xf]
      %v1042 = vunpack.c.l.b16 %v516
      %v1043 = vpack.c.b16 %v606, %v605
      %v1044 = vpack.c.b16 %v1042, %v607
      %v1063 = vunpack.c.l.b16 %v1025
      %v1064 = vunpack.c.l.b16 %v1026
      %v1065 = vunpack.c.l.b16 %v1027
      %v1066 = vunpack.c.l.b16 %v1028
      %v1067 = vunpack.c.l.b16 %v1029
      %v1068 = vunpack.c.l.b16 %v1030
      %v1069 = vunpack.c.l.b16 %v1031
      %v1070 = vunpack.c.l.b16 %v1032
      %v1071 = vunpack.c.l.b16 %v1033
      %v1072 = vunpack.c.l.b16 %v1034
      %v1073 = vunpack.c.l.b16 %v1035
      %v1074 = vunpack.c.l.b16 %v1036
      %v1075 = vunpack.c.l.b16 %v1037
      %v1076 = vunpack.c.l.b16 %v1038
      %v1077 = vunpack.c.l.b16 %v1039
      %v1078 = vunpack.c.l.b16 %v1040
      %v1079 = vpack.c.b16 %v1064, %v1063
      %v1080 = vpack.c.b16 %v1066, %v1065
      %v1081 = vpack.c.b16 %v1068, %v1067
      %v1082 = vpack.c.b16 %v1070, %v1069
      %v1083 = vpack.c.b16 %v1072, %v1071
      %v1084 = vpack.c.b16 %v1074, %v1073
      %v1085 = vpack.c.b16 %v1076, %v1075
      %v1086 = vpack.c.b16 %v1078, %v1077
      %1095 = vmatpush.bf16.msra.mxu0 %v1086
      %1096 = vmatpush.bf16.msra.mxu0 %v1085
      %1097 = vmatpush.bf16.msra.mxu0 %v1084
      %1098 = vmatpush.bf16.msra.mxu0 %v1083
      %1099 = vmatpush.bf16.msra.mxu0 %v1082
      %1100 = vmatpush.bf16.msra.mxu0 %v1081
      %1101 = vmatpush.bf16.msra.mxu0 %v1080
      %1102 = vmatpush.bf16.msra.mxu0 %v1079
      %1103 = vmatmul.bf16.gmra.mxu0 %v1043
      %v1104 = vpop.f32.mrf.mxu0
      %v1105 = vadd.f32 0.0, %v1104
      %v1106 = vpop.f32.mrf.mxu0
      %v1107 = vadd.f32 0.0, %v1106
      %1108 = vmatmul.bf16.gmra.mxu0 %v1044
      %v1109 = vpop.f32.mrf.mxu0
      %v1110 = vadd.f32 0.0, %v1109
      %v1111 = vpop.f32.mrf.mxu0
      %v1112 = vadd.f32 0.0, %v1111
      %1113 = vdwg.mxu0
      %v1114 = vadd.f32 %v1020, %v1105
      %v1115 = vadd.f32 %v1021, %v1107
      %v1116 = vadd.f32 %v1022, %v1110
      %v1117 = vadd.f32 %v1023, %v1112
      %v1118 = vunpack.c.l.bf16 %v538
      %v1119 = vmul.f32 %v549, %v779
      %v1120 = vmul.f32 %v775, %v780
      %v1121 = vmul.f32 %v1118, %v779
      %v1122 = vpack.c.bf16 %v785, %v1119
      %v1123 = vpack.c.bf16 %v1120, %v786
      %v1124 = vpack.c.bf16 %v1121, %v1121
      %s1125 = scalar_lea.vmem %s5, 320
      %v1126 = vld [vmem:[%s1125] sm:$0xf]
      %v1127 = vld [vmem:[%s1125 + $0x4] sm:$0xf]
      %v1128 = vld [vmem:[%s1125 + $0x8] sm:$0xf]
      %v1129 = vld [vmem:[%s1125 + $0xc] sm:$0xf]
      %v1130 = vld [vmem:[%s1125 + $0x10] sm:$0xf]
      %v1131 = vld [vmem:[%s1125 + $0x14] sm:$0xf]
      %v1132 = vld [vmem:[%s1125 + $0x18] sm:$0xf]
      %v1133 = vld [vmem:[%s1125 + $0x1c] sm:$0xf]
      %v1134 = vld [vmem:[%s1125 + $0x20] sm:$0xf]
      %v1135 = vld [vmem:[%s1125 + $0x24] sm:$0xf]
      %v1136 = vld [vmem:[%s1125 + $0x28] sm:$0xf]
      %v1137 = vld [vmem:[%s1125 + $0x2c] sm:$0xf]
      %v1138 = vld [vmem:[%s1125 + $0x30] sm:$0xf]
      %v1139 = vld [vmem:[%s1125 + $0x34] sm:$0xf]
      %v1140 = vld [vmem:[%s1125 + $0x38] sm:$0xf]
      %v1141 = vld [vmem:[%s1125 + $0x3c] sm:$0xf]
      %v1143 = vshrl.u32 %v1122, 16
      %v1145 = vshll.u32 %v1122, 16
      %v1147 = vrot.slane %v1145, 1
      %v1148 = vor.u32 %v1143, %v1147
      %v1150 = vshll.u32 %v1123, 16
      %v1152 = vrot.slane %v1150, 1
      %v1153 = vsel %vm808, %v1148, %v1152
      %v1154 = vshrl.u32 %v1123, 16
      %v1156 = vor.u32 %v1154, %v1152
      %v1158 = vshll.u32 %v1124, 16
      %v1160 = vrot.slane %v1158, 1
      %v1161 = vsel %vm808, %v1156, %v1160
      %v1180 = vunpack.c.l.b16 %v1126
      %v1181 = vunpack.c.l.b16 %v1127
      %v1182 = vunpack.c.l.b16 %v1128
      %v1183 = vunpack.c.l.b16 %v1129
      %v1184 = vunpack.c.l.b16 %v1130
      %v1185 = vunpack.c.l.b16 %v1131
      %v1186 = vunpack.c.l.b16 %v1132
      %v1187 = vunpack.c.l.b16 %v1133
      %v1188 = vunpack.c.l.b16 %v1134
      %v1189 = vunpack.c.l.b16 %v1135
      %v1190 = vunpack.c.l.b16 %v1136
      %v1191 = vunpack.c.l.b16 %v1137
      %v1192 = vunpack.c.l.b16 %v1138
      %v1193 = vunpack.c.l.b16 %v1139
      %v1194 = vunpack.c.l.b16 %v1140
      %v1195 = vunpack.c.l.b16 %v1141
      %v1196 = vpack.c.b16 %v1181, %v1180
      %v1197 = vpack.c.b16 %v1183, %v1182
      %v1198 = vpack.c.b16 %v1185, %v1184
      %v1199 = vpack.c.b16 %v1187, %v1186
      %v1200 = vpack.c.b16 %v1189, %v1188
      %v1201 = vpack.c.b16 %v1191, %v1190
      %v1202 = vpack.c.b16 %v1193, %v1192
      %v1203 = vpack.c.b16 %v1195, %v1194
      %1212 = vmatpush.bf16.msra.mxu0 %v1203
      %1213 = vmatpush.bf16.msra.mxu0 %v1202
      %1214 = vmatpush.bf16.msra.mxu0 %v1201
      %1215 = vmatpush.bf16.msra.mxu0 %v1200
      %1216 = vmatpush.bf16.msra.mxu0 %v1199
      %1217 = vmatpush.bf16.msra.mxu0 %v1198
      %1218 = vmatpush.bf16.msra.mxu0 %v1197
      %1219 = vmatpush.bf16.msra.mxu0 %v1196
      %1220 = vmatmul.bf16.gmra.mxu0 %v1153
      %v1221 = vpop.f32.mrf.mxu0
      %v1222 = vadd.f32 0.0, %v1221
      %v1223 = vpop.f32.mrf.mxu0
      %v1224 = vadd.f32 0.0, %v1223
      %1225 = vmatmul.bf16.gmra.mxu0 %v1161
      %v1226 = vpop.f32.mrf.mxu0
      %v1227 = vadd.f32 0.0, %v1226
      %v1228 = vpop.f32.mrf.mxu0
      %v1229 = vadd.f32 0.0, %v1228
      %1230 = vdwg.mxu0
      %v1231 = vadd.f32 %v1114, %v1222
      %v1232 = vadd.f32 %v1115, %v1224
      %v1233 = vadd.f32 %v1116, %v1227
      %v1234 = vadd.f32 %v1117, %v1229
      %v1235 = vmul.f32 %v549, %v555
      %v1236 = vmul.f32 %v775, %v556
      %v1237 = vmul.f32 %v1118, %v555
      %v1238 = vpack.c.bf16 %v562, %v1235
      %v1239 = vpack.c.bf16 %v1236, %v903
      %v1240 = vpack.c.bf16 %v1237, %v1237
      %s1241 = scalar_lea.vmem %s5, 384
      %v1242 = vld [vmem:[%s1241] sm:$0xf]
      %v1243 = vld [vmem:[%s1241 + $0x4] sm:$0xf]
      %v1244 = vld [vmem:[%s1241 + $0x8] sm:$0xf]
      %v1245 = vld [vmem:[%s1241 + $0xc] sm:$0xf]
      %v1246 = vld [vmem:[%s1241 + $0x10] sm:$0xf]
      %v1247 = vld [vmem:[%s1241 + $0x14] sm:$0xf]
      %v1248 = vld [vmem:[%s1241 + $0x18] sm:$0xf]
      %v1249 = vld [vmem:[%s1241 + $0x1c] sm:$0xf]
      %v1250 = vld [vmem:[%s1241 + $0x20] sm:$0xf]
      %v1251 = vld [vmem:[%s1241 + $0x24] sm:$0xf]
      %v1252 = vld [vmem:[%s1241 + $0x28] sm:$0xf]
      %v1253 = vld [vmem:[%s1241 + $0x2c] sm:$0xf]
      %v1254 = vld [vmem:[%s1241 + $0x30] sm:$0xf]
      %v1255 = vld [vmem:[%s1241 + $0x34] sm:$0xf]
      %v1256 = vld [vmem:[%s1241 + $0x38] sm:$0xf]
      %v1257 = vld [vmem:[%s1241 + $0x3c] sm:$0xf]
      %v1259 = vshrl.u32 %v1238, 16
      %v1261 = vrot.slane %v1259, 3
      %v1262 = vshll.u32 %v1238, 16
      %v1264 = vrot.slane %v1262, 4
      %v1265 = vor.u32 %v1261, %v1264
      %v1267 = vshrl.u32 %v1239, 16
      %v1269 = vrot.slane %v1267, 3
      %v1270 = vshll.u32 %v1239, 16
      %v1272 = vrot.slane %v1270, 4
      %v1273 = vor.u32 %v1269, %v1272
      %v1274 = vsel %vm679, %v1265, %v1273
      %v1276 = vshrl.u32 %v1240, 16
      %v1278 = vrot.slane %v1276, 3
      %v1279 = vshll.u32 %v1240, 16
      %v1281 = vrot.slane %v1279, 4
      %v1282 = vor.u32 %v1278, %v1281
      %v1283 = vsel %vm679, %v1273, %v1282
      %v1302 = vunpack.c.l.b16 %v1242
      %v1303 = vunpack.c.l.b16 %v1243
      %v1304 = vunpack.c.l.b16 %v1244
      %v1305 = vunpack.c.l.b16 %v1245
      %v1306 = vunpack.c.l.b16 %v1246
      %v1307 = vunpack.c.l.b16 %v1247
      %v1308 = vunpack.c.l.b16 %v1248
      %v1309 = vunpack.c.l.b16 %v1249
      %v1310 = vunpack.c.l.b16 %v1250
      %v1311 = vunpack.c.l.b16 %v1251
      %v1312 = vunpack.c.l.b16 %v1252
      %v1313 = vunpack.c.l.b16 %v1253
      %v1314 = vunpack.c.l.b16 %v1254
      %v1315 = vunpack.c.l.b16 %v1255
      %v1316 = vunpack.c.l.b16 %v1256
      %v1317 = vunpack.c.l.b16 %v1257
      %v1318 = vpack.c.b16 %v1303, %v1302
      %v1319 = vpack.c.b16 %v1305, %v1304
      %v1320 = vpack.c.b16 %v1307, %v1306
      %v1321 = vpack.c.b16 %v1309, %v1308
      %v1322 = vpack.c.b16 %v1311, %v1310
      %v1323 = vpack.c.b16 %v1313, %v1312
      %v1324 = vpack.c.b16 %v1315, %v1314
      %v1325 = vpack.c.b16 %v1317, %v1316
      %1334 = vmatpush.bf16.msra.mxu0 %v1325
      %1335 = vmatpush.bf16.msra.mxu0 %v1324
      %1336 = vmatpush.bf16.msra.mxu0 %v1323
      %1337 = vmatpush.bf16.msra.mxu0 %v1322
      %1338 = vmatpush.bf16.msra.mxu0 %v1321
      %1339 = vmatpush.bf16.msra.mxu0 %v1320
      %1340 = vmatpush.bf16.msra.mxu0 %v1319
      %1341 = vmatpush.bf16.msra.mxu0 %v1318
      %1342 = vmatmul.bf16.gmra.mxu0 %v1274
      %v1343 = vpop.f32.mrf.mxu0
      %v1344 = vadd.f32 0.0, %v1343
      %v1345 = vpop.f32.mrf.mxu0
      %v1346 = vadd.f32 0.0, %v1345
      %1347 = vmatmul.bf16.gmra.mxu0 %v1283
      %v1348 = vpop.f32.mrf.mxu0
      %v1349 = vadd.f32 0.0, %v1348
      %v1350 = vpop.f32.mrf.mxu0
      %v1351 = vadd.f32 0.0, %v1350
      %1352 = vdwg.mxu0
      %v1353 = vadd.f32 %v1231, %v1344
      %v1354 = vadd.f32 %v1232, %v1346
      %v1355 = vadd.f32 %v1233, %v1349
      %v1356 = vadd.f32 %v1234, %v1351
      %s1357 = scalar_lea.vmem %s5, 448
      %v1358 = vld [vmem:[%s1357] sm:$0xf]
      %v1359 = vld [vmem:[%s1357 + $0x4] sm:$0xf]
      %v1360 = vld [vmem:[%s1357 + $0x8] sm:$0xf]
      %v1361 = vld [vmem:[%s1357 + $0xc] sm:$0xf]
      %v1362 = vld [vmem:[%s1357 + $0x10] sm:$0xf]
      %v1363 = vld [vmem:[%s1357 + $0x14] sm:$0xf]
      %v1364 = vld [vmem:[%s1357 + $0x18] sm:$0xf]
      %v1365 = vld [vmem:[%s1357 + $0x1c] sm:$0xf]
      %v1366 = vld [vmem:[%s1357 + $0x20] sm:$0xf]
      %v1367 = vld [vmem:[%s1357 + $0x24] sm:$0xf]
      %v1368 = vld [vmem:[%s1357 + $0x28] sm:$0xf]
      %v1369 = vld [vmem:[%s1357 + $0x2c] sm:$0xf]
      %v1370 = vld [vmem:[%s1357 + $0x30] sm:$0xf]
      %v1371 = vld [vmem:[%s1357 + $0x34] sm:$0xf]
      %v1372 = vld [vmem:[%s1357 + $0x38] sm:$0xf]
      %v1373 = vld [vmem:[%s1357 + $0x3c] sm:$0xf]
      %v1375 = vunpack.c.l.b16 %v538
      %v1376 = vpack.c.b16 %v1375, %v1042
      %v1394 = vunpack.c.l.b16 %v1358
      %v1395 = vunpack.c.l.b16 %v1359
      %v1396 = vunpack.c.l.b16 %v1360
      %v1397 = vunpack.c.l.b16 %v1361
      %v1398 = vunpack.c.l.b16 %v1362
      %v1399 = vunpack.c.l.b16 %v1363
      %v1400 = vunpack.c.l.b16 %v1364
      %v1401 = vunpack.c.l.b16 %v1365
      %v1402 = vunpack.c.l.b16 %v1366
      %v1403 = vunpack.c.l.b16 %v1367
      %v1404 = vunpack.c.l.b16 %v1368
      %v1405 = vunpack.c.l.b16 %v1369
      %v1406 = vunpack.c.l.b16 %v1370
      %v1407 = vunpack.c.l.b16 %v1371
      %v1408 = vunpack.c.l.b16 %v1372
      %v1409 = vunpack.c.l.b16 %v1373
      %v1410 = vpack.c.b16 %v1395, %v1394
      %v1411 = vpack.c.b16 %v1397, %v1396
      %v1412 = vpack.c.b16 %v1399, %v1398
      %v1413 = vpack.c.b16 %v1401, %v1400
      %v1414 = vpack.c.b16 %v1403, %v1402
      %v1415 = vpack.c.b16 %v1405, %v1404
      %v1416 = vpack.c.b16 %v1407, %v1406
      %v1417 = vpack.c.b16 %v1409, %v1408
      %1426 = vmatpush.bf16.msra.mxu0 %v1417
      %1427 = vmatpush.bf16.msra.mxu0 %v1416
      %1428 = vmatpush.bf16.msra.mxu0 %v1415
      %1429 = vmatpush.bf16.msra.mxu0 %v1414
      %1430 = vmatpush.bf16.msra.mxu0 %v1413
      %1431 = vmatpush.bf16.msra.mxu0 %v1412
      %1432 = vmatpush.bf16.msra.mxu0 %v1411
      %1433 = vmatpush.bf16.msra.mxu0 %v1410
      %1434 = vmatmul.bf16.gmra.mxu0 %v609
      %v1435 = vpop.f32.mrf.mxu0
      %v1436 = vadd.f32 0.0, %v1435
      %v1437 = vpop.f32.mrf.mxu0
      %v1438 = vadd.f32 0.0, %v1437
      %1439 = vmatmul.bf16.gmra.mxu0 %v1376
      %v1440 = vpop.f32.mrf.mxu0
      %v1441 = vadd.f32 0.0, %v1440
      %v1442 = vpop.f32.mrf.mxu0
      %v1443 = vadd.f32 0.0, %v1442
      %1444 = vdwg.mxu0
      %v1445 = vadd.f32 %v1353, %v1436
      %v1446 = vadd.f32 %v1354, %v1438
      %v1447 = vadd.f32 %v1355, %v1441
      %v1448 = vadd.f32 %v1356, %v1443
      %v1449 = vmul.f32 %v550, %v779
      %v1450 = vmul.f32 %v1118, %v780
      %v1451 = vmul.f32 %v547, %v779
      %v1452 = vpack.c.bf16 %v786, %v1449
      %v1453 = vpack.c.bf16 %v1450, %v1120
      %v1454 = vpack.c.bf16 %v1451, %v1451
      %s1455 = scalar_lea.vmem %s5, 512
      %v1456 = vld [vmem:[%s1455] sm:$0xf]
      %v1457 = vld [vmem:[%s1455 + $0x4] sm:$0xf]
      %v1458 = vld [vmem:[%s1455 + $0x8] sm:$0xf]
      %v1459 = vld [vmem:[%s1455 + $0xc] sm:$0xf]
      %v1460 = vld [vmem:[%s1455 + $0x10] sm:$0xf]
      %v1461 = vld [vmem:[%s1455 + $0x14] sm:$0xf]
      %v1462 = vld [vmem:[%s1455 + $0x18] sm:$0xf]
      %v1463 = vld [vmem:[%s1455 + $0x1c] sm:$0xf]
      %v1464 = vld [vmem:[%s1455 + $0x20] sm:$0xf]
      %v1465 = vld [vmem:[%s1455 + $0x24] sm:$0xf]
      %v1466 = vld [vmem:[%s1455 + $0x28] sm:$0xf]
      %v1467 = vld [vmem:[%s1455 + $0x2c] sm:$0xf]
      %v1468 = vld [vmem:[%s1455 + $0x30] sm:$0xf]
      %v1469 = vld [vmem:[%s1455 + $0x34] sm:$0xf]
      %v1470 = vld [vmem:[%s1455 + $0x38] sm:$0xf]
      %v1471 = vld [vmem:[%s1455 + $0x3c] sm:$0xf]
      %v1473 = vshrl.u32 %v1452, 16
      %v1475 = vshll.u32 %v1452, 16
      %v1477 = vrot.slane %v1475, 1
      %v1478 = vor.u32 %v1473, %v1477
      %v1480 = vshll.u32 %v1453, 16
      %v1482 = vrot.slane %v1480, 1
      %v1483 = vsel %vm808, %v1478, %v1482
      %v1484 = vshrl.u32 %v1453, 16
      %v1486 = vor.u32 %v1484, %v1482
      %v1488 = vshll.u32 %v1454, 16
      %v1490 = vrot.slane %v1488, 1
      %v1491 = vsel %vm808, %v1486, %v1490
      %v1510 = vunpack.c.l.b16 %v1456
      %v1511 = vunpack.c.l.b16 %v1457
      %v1512 = vunpack.c.l.b16 %v1458
      %v1513 = vunpack.c.l.b16 %v1459
      %v1514 = vunpack.c.l.b16 %v1460
      %v1515 = vunpack.c.l.b16 %v1461
      %v1516 = vunpack.c.l.b16 %v1462
      %v1517 = vunpack.c.l.b16 %v1463
      %v1518 = vunpack.c.l.b16 %v1464
      %v1519 = vunpack.c.l.b16 %v1465
      %v1520 = vunpack.c.l.b16 %v1466
      %v1521 = vunpack.c.l.b16 %v1467
      %v1522 = vunpack.c.l.b16 %v1468
      %v1523 = vunpack.c.l.b16 %v1469
      %v1524 = vunpack.c.l.b16 %v1470
      %v1525 = vunpack.c.l.b16 %v1471
      %v1526 = vpack.c.b16 %v1511, %v1510
      %v1527 = vpack.c.b16 %v1513, %v1512
      %v1528 = vpack.c.b16 %v1515, %v1514
      %v1529 = vpack.c.b16 %v1517, %v1516
      %v1530 = vpack.c.b16 %v1519, %v1518
      %v1531 = vpack.c.b16 %v1521, %v1520
      %v1532 = vpack.c.b16 %v1523, %v1522
      %v1533 = vpack.c.b16 %v1525, %v1524
      %1542 = vmatpush.bf16.msra.mxu0 %v1533
      %1543 = vmatpush.bf16.msra.mxu0 %v1532
      %1544 = vmatpush.bf16.msra.mxu0 %v1531
      %1545 = vmatpush.bf16.msra.mxu0 %v1530
      %1546 = vmatpush.bf16.msra.mxu0 %v1529
      %1547 = vmatpush.bf16.msra.mxu0 %v1528
      %1548 = vmatpush.bf16.msra.mxu0 %v1527
      %1549 = vmatpush.bf16.msra.mxu0 %v1526
      %1550 = vmatmul.bf16.gmra.mxu0 %v1483
      %v1551 = vpop.f32.mrf.mxu0
      %v1552 = vadd.f32 0.0, %v1551
      %v1553 = vpop.f32.mrf.mxu0
      %v1554 = vadd.f32 0.0, %v1553
      %1555 = vmatmul.bf16.gmra.mxu0 %v1491
      %v1556 = vpop.f32.mrf.mxu0
      %v1557 = vadd.f32 0.0, %v1556
      %v1558 = vpop.f32.mrf.mxu0
      %v1559 = vadd.f32 0.0, %v1558
      %1560 = vdwg.mxu0
      %v1561 = vadd.f32 %v1445, %v1552
      %v1562 = vadd.f32 %v1446, %v1554
      %v1563 = vadd.f32 %v1447, %v1557
      %v1564 = vadd.f32 %v1448, %v1559
      %v1565 = vld [vmem:[%s6] sm:$0x1]
      %v1567 = vperm.slane %v1565, 0
      %v1569 = vadd.f32 %v1561, %v1567
      %v1570 = vadd.f32 %v1562, %v1567
      %v1571 = vadd.f32 %v1563, %v1567
      %v1572 = vadd.f32 %v1564, %v1567
      %v1573 = vpack.c.bf16 %v1569, %v1569
      %v1574 = vpack.c.bf16 %v1570, %v1570
      %v1575 = vpack.c.bf16 %v1571, %v1571
      %v1576 = vpack.c.bf16 %v1572, %v1572
      %1577 = vst [vmem:[%s472] sm:$0xf] %v1573
      %1578 = vst [vmem:[%s472 + $0x4] sm:$0xf] %v1574
      %1579 = vst [vmem:[%s472 + $0x8] sm:$0xf] %v1575
      %1580 = vst [vmem:[%s472 + $0xc] sm:$0xf] %v1576
      %v1581 = vadd.f32 %v1569, %v1570
      %v1582 = vadd.f32 %v1581, %v1571
      %v1583 = vadd.f32 %v1582, %v1572
      %v1584 = vrot.slane %v1583, 4
      %v1585 = vadd.f32 %v1583, %v1584
      %v1586 = vrot.slane %v1585, 2
      %v1587 = vadd.f32 %v1585, %v1586
      %v1588 = vrot.slane %v1587, 1
      %v1589 = vadd.f32 %v1587, %v1588
      %v1590 = vmul.f32 %v1569, %v1569
      %v1591 = vmul.f32 %v1570, %v1570
      %v1592 = vmul.f32 %v1571, %v1571
      %v1593 = vmul.f32 %v1572, %v1572
      %v1594 = vadd.f32 %v1590, %v1591
      %v1595 = vadd.f32 %v1594, %v1592
      %v1596 = vadd.f32 %v1595, %v1593
      %v1597 = vrot.slane %v1596, 4
      %v1598 = vadd.f32 %v1596, %v1597
      %v1599 = vrot.slane %v1598, 2
      %v1600 = vadd.f32 %v1598, %v1599
      %v1601 = vrot.slane %v1600, 1
      %v1602 = vadd.f32 %v1600, %v1601
      %v1603 = vsel %vm778, %v1589, %v1602
      %1604 = vst [vmem:[%s481] sm:$0x3] %v1603
      %s1605 = smul.u32 %s24, 2
      %s1606 = sadd.s32 %s1605, %s25
      %s1607 = smul.u32 4, %s1606
      %p1608 = scmp.lt.s32.totalorder %s1607, 15
      %s1609 = scalar_select %p1608, %s1607, 15
      %s1610 = smul.addr %s1609, 4
      %s1611 = scalar_lea.vmem %s7, %s1610
      %s1612 = smul.u32 %s24, 2
      %s1613 = sadd.s32 %s1612, %s25
      %p1614 = scmp.lt.s32.totalorder %s1613, 3
      %s1615 = scalar_select %p1614, %s1613, 3
      %s1616 = smul.addr %s1615, 2
      %s1617 = scalar_lea.vmem %s8, %s1616
      // Predicated region
      $region49: #{down_forward.4} parent=47 // pred_check
        %p1618 = pneg %p238
      $region50: #{down_forward.4} parent=47 // pred_check_branch
        %1620 = sbr.rel (%p1618) target = $region52
      $region51: #{down_forward.4} parent=47 // pred_region
        %s1621 = smul.u32 %s24, 2
        %s1622 = sadd.s32 %s1621, %s25
        %s1623 = smul.u32 4, %s1622
      $region52: #{down_forward.4} parent=47 // pred_fallthru
        _
      // Predicated region
      $region53: #{down_forward.4} parent=47 // pred_check
        %p1624 = pneg %p268
      $region54: #{down_forward.4} parent=47 // pred_check_branch
        %1626 = sbr.rel (%p1624) target = $region56
      $region55: #{down_forward.4} parent=47 // pred_region
        %s1627 = smul.u32 %s24, 2
        %s1628 = sadd.s32 %s1627, %s25
      $region56: #{down_forward.4} parent=47 // pred_fallthru
        _
    $region48: #{down_forward.4} parent=5 // pred_fallthru
      _
    %p1629 = scmp.le.s32.totalorder 2, %s15
    // Predicated region
    $region57: #{down_forward.4} parent=5 // pred_check
      %p1630 = pneg %p1629
    $region58: #{down_forward.4} parent=5 // pred_check_branch
      %1632 = sbr.rel (%p1630) target = $region60
    $region59: #{down_forward.4} parent=5 // pred_region
      %s1633 = ssub.s32 %s15, 2
      // Predicated region
      $region61: #{down_forward.4} parent=59 // pred_check
        %p1634 = pneg %p244
      $region62: #{down_forward.4} parent=59 // pred_check_branch
        %1636 = sbr.rel (%p1634) target = $region64
      $region63: #{down_forward.4} parent=59 // pred_region
        %s1637 = smul.u32 %s26, 2
        %s1638 = sadd.s32 %s1637, %s27
        %s1639 = smul.u32 4, %s1638
        %p1640 = scmp.lt.s32.totalorder %s1639, 15
        %s1641 = scalar_select %p1640, %s1639, 15
        %s1642 = smul.addr %s1641, 4
        %s1643 = scalar_lea.vmem %s7, %s1642
      $region64: #{down_forward.4} parent=59 // pred_fallthru
        _
      // Predicated region
      $region65: #{down_forward.4} parent=59 // pred_check
        %p1644 = pneg %p274
      $region66: #{down_forward.4} parent=59 // pred_check_branch
        %1646 = sbr.rel (%p1644) target = $region68
      $region67: #{down_forward.4} parent=59 // pred_region
        %s1647 = smul.u32 %s26, 2
        %s1648 = sadd.s32 %s1647, %s27
        %p1649 = scmp.lt.s32.totalorder %s1648, 3
        %s1650 = scalar_select %p1649, %s1648, 3
        %s1651 = smul.addr %s1650, 2
        %s1652 = scalar_lea.vmem %s8, %s1651
      $region68: #{down_forward.4} parent=59 // pred_fallthru
        _
    $region60: #{down_forward.4} parent=5 // pred_fallthru
      _
  $region6: #{down_forward.4} parent=0 // loop_footer
    %s19 = sadd.s32 1, %s15
  $region7: #{down_forward.4} parent=0 // loop_footer_branch
    %14 = sbr.rel target = $region3
  $region8: #{down_forward.4} parent=0 // loop_exit
    _

</llo_original>
